<compile_context>
chip_gen: v7x
topology: tpu7x:2x2x1
jax: 0.10.0
libtpu: 0.0.40
codegen_flags: <defaults>
</compile_context>

<pallas_src>
import jax
import jax.numpy as jnp
from jax.experimental import pallas as pl
from jax.experimental.pallas import tpu as pltpu

HIDDEN = 256
EMBED = 200
N_LAYERS = 4


# ------------------------------ fused kernel --------------------------------
def _fused_kernel(xin_ref, h0_ref, wih_ref, whh_ref, beff_ref, bhn_ref,
                  fcw_ref, fcb_ref, logits_ref, hN_ref, x_sc, gi_sc):
    """One grid step == one GRU layer (grid=(N_LAYERS,))."""
    l = pl.program_id(0)
    n_layers = pl.num_programs(0)
    S, P, H = x_sc.shape            # P = sublane-padded batch (multiple of 8)
    B = hN_ref.shape[1]             # real batch
    V = fcb_ref.shape[1]

    # Layer 0: bring the padded embedded input sequence into the io scratch.
    @pl.when(l == 0)
    def _():
        x_sc[...] = xin_ref[...]

    # Hoisted, time-invariant input projection for the whole sequence:
    # one (S*P, H) x (H, 3H) MXU matmul instead of S tiny M=B matmuls.
    # Weights are bf16 (MXU-native, half the DMA bytes); accumulate in f32.
    x_all = x_sc[...].reshape(S * P, H).astype(jnp.bfloat16)
    gi = jnp.dot(x_all, wih_ref[0], preferred_element_type=jnp.float32)
    # b_ih and the r/z halves of b_hh were pre-folded into beff on the host.
    gi_sc[...] = (gi + beff_ref[0]).reshape(S, P, 3 * H)

    w_hh = whh_ref[0]               # (H, 3H) bf16
    b_hn = bhn_ref[0]               # (1, H)  f32

    def step(t, h):
        g = gi_sc[t]                                            # (P, 3H) f32
        gh = jnp.dot(h.astype(jnp.bfloat16), w_hh,
                     preferred_element_type=jnp.float32)        # (P, 3H) f32
        rz = jax.nn.sigmoid(g[:, :2 * H] + gh[:, :2 * H])
        r = rz[:, :H]
        z = rz[:, H:]
        n = jnp.tanh(g[:, 2 * H:] + r * (gh[:, 2 * H:] + b_hn))
        h_new = (1.0 - z) * n + z * h
        x_sc[t] = h_new             # in place: becomes next layer's input
        return h_new

    h_last = jax.lax.fori_loop(0, S, step, h0_ref[0], unroll=True)
    hN_ref[0] = h_last[:B, :]       # final state of this layer, written once

    # Final projection on the last layer's outputs (dropout = identity, eval).
    # Fully dense (S, P, V) store; the wrapper slices off the padded rows.
    @pl.when(l == n_layers - 1)
    def _():
        y_all = x_sc[...].reshape(S * P, H).astype(jnp.bfloat16)
        out = jnp.dot(y_all, fcw_ref[...],
                      preferred_element_type=jnp.float32) + fcb_ref[...]
        logits_ref[...] = out.reshape(S, P, V)


def fused_forward(x_in, h0_p, w_ih, w_hh, b_eff, b_hn, fc_w, fc_b, *, batch):
    """x_in: (S, P, H) f32 padded embedded inputs, h0_p: (NL, P, H) f32.
    w_ih/w_hh: (NL, H, 3H) bf16, b_eff: (NL, 1, 3H) f32, b_hn: (NL, 1, H) f32,
    fc_w: (H, V) bf16, fc_b: (1, V) f32.
    Returns (padded logits (S, P, V) f32, h_final (NL, batch, H) f32)."""
    S, P, H = x_in.shape
    NL = h0_p.shape[0]
    V = fc_w.shape[1]
    B = batch

    grid_spec = pltpu.PrefetchScalarGridSpec(
        num_scalar_prefetch=0,
        grid=(NL,),
        in_specs=[
            # whole padded input sequence, resident across the whole grid
            pl.BlockSpec((S, P, H), lambda l: (0, 0, 0)),
            # per-layer blocks selected by the grid (layer) index -> the
            # pipeline prefetches layer l+1's weights during layer l compute
            pl.BlockSpec((1, P, H), lambda l: (l, 0, 0)),        # h0
            pl.BlockSpec((1, H, 3 * H), lambda l: (l, 0, 0)),    # W_ih stack
            pl.BlockSpec((1, H, 3 * H), lambda l: (l, 0, 0)),    # W_hh stack
            pl.BlockSpec((1, 1, 3 * H), lambda l: (l, 0, 0)),    # b_eff stack
            pl.BlockSpec((1, 1, H), lambda l: (l, 0, 0)),        # b_hn stack
            # tiny FC params, resident
            pl.BlockSpec((H, V), lambda l: (0, 0)),
            pl.BlockSpec((1, V), lambda l: (0, 0)),
        ],
        out_specs=[
            pl.BlockSpec((S, P, V), lambda l: (0, 0, 0)),        # padded logits
            pl.BlockSpec((1, B, H), lambda l: (l, 0, 0)),        # per-layer h_N
        ],
        scratch_shapes=[
            pltpu.VMEM((S, P, H), jnp.float32),        # layer in/out sequence
            pltpu.VMEM((S, P, 3 * H), jnp.float32),    # hoisted gate pre-acts
        ],
    )
    return pl.pallas_call(
        _fused_kernel,
        out_shape=(
            jax.ShapeDtypeStruct((S, P, V), jnp.float32),
            jax.ShapeDtypeStruct((NL, B, H), jnp.float32),
        ),
        grid_spec=grid_spec,
        compiler_params=pltpu.CompilerParams(
            dimension_semantics=("arbitrary",)),
    )(x_in, h0_p, w_ih, w_hh, b_eff, b_hn, fc_w, fc_b)


# --------------------------------- params -----------------------------------
def init_params(key, n_vocab):
    ks = jax.random.split(key, 2 + 4 * N_LAYERS + 2)
    bound = 1.0 / jnp.sqrt(HIDDEN)
    params = {}
    params["embedding"] = jax.random.normal(ks[0], (n_vocab, EMBED),
                                            jnp.float32)
    layers = []
    kidx = 1
    for l in range(N_LAYERS):
        in_dim = EMBED if l == 0 else HIDDEN
        w_ih = jax.random.uniform(ks[kidx], (in_dim, 3 * HIDDEN), jnp.float32,
                                  -bound, bound); kidx += 1
        w_hh = jax.random.uniform(ks[kidx], (HIDDEN, 3 * HIDDEN), jnp.float32,
                                  -bound, bound); kidx += 1
        b_ih = jax.random.uniform(ks[kidx], (1, 3 * HIDDEN), jnp.float32,
                                  -bound, bound); kidx += 1
        b_hh = jax.random.uniform(ks[kidx], (1, 3 * HIDDEN), jnp.float32,
                                  -bound, bound); kidx += 1
        layers.append((w_ih, w_hh, b_ih, b_hh))
    params["gru"] = layers
    params["fc_w"] = jax.random.uniform(ks[kidx], (HIDDEN, n_vocab),
                                        jnp.float32, -bound, bound)
    params["fc_b"] = jax.random.uniform(ks[kidx + 1], (1, n_vocab),
                                        jnp.float32, -bound, bound)
    return params


def pack_params(params):
    """One-time host-side prep: pad layer-0 W_ih to a 256 input dim, stack the
    per-layer weights, fold the r/z halves of b_hh into b_ih, cast matmul
    weights to bf16 (storage + MXU operands); biases stay f32."""
    H = HIDDEN
    wih_l, whh_l, beff_l, bhn_l = [], [], [], []
    for (w_ih, w_hh, b_ih, b_hh) in params["gru"]:
        in_dim = w_ih.shape[0]
        w_ih_p = jnp.zeros((H, 3 * H), jnp.float32).at[:in_dim, :].set(w_ih)
        wih_l.append(w_ih_p)
        whh_l.append(w_hh)
        beff_l.append(jnp.concatenate(
            [b_ih[:, :2 * H] + b_hh[:, :2 * H], b_ih[:, 2 * H:]], axis=1))
        bhn_l.append(b_hh[:, 2 * H:])
    return {
        "embedding": params["embedding"],                       # f32
        "w_ih": jnp.stack(wih_l).astype(jnp.bfloat16),          # (NL, H, 3H)
        "w_hh": jnp.stack(whh_l).astype(jnp.bfloat16),          # (NL, H, 3H)
        "b_eff": jnp.stack(beff_l),                             # (NL, 1, 3H)
        "b_hn": jnp.stack(bhn_l),                               # (NL, 1, H)
        "fc_w": params["fc_w"].astype(jnp.bfloat16),            # (H, V)
        "fc_b": params["fc_b"],                                 # (1, V)
    }


# --------------------------------- Model -------------------------------------
@jax.jit
def model_forward(packed, x_tokens, prev_state):
    """x_tokens: (S, B) int32, prev_state: (N_LAYERS, B, HIDDEN) f32.
    Returns (logits: (S, B, V) f32, state: (N_LAYERS, B, HIDDEN) f32)."""
    S, B = x_tokens.shape
    NL, _, H = prev_state.shape
    P = max(8, -(-B // 8) * 8)                  # sublane-aligned batch
    E = packed["embedding"].shape[1]

    # Embedding lookup kept as one XLA gather; padded to the sublane-aligned
    # (S, P, H) layout the kernel consumes (padded features/rows are zero).
    # TODO(synk): could be moved in-kernel via scalar-prefetched token ids +
    # dynamic row reads of a VMEM-resident table to drop one kernel boundary.
    embed = jnp.take(packed["embedding"], x_tokens, axis=0)    # (S, B, E)
    x_in = jnp.pad(embed, ((0, 0), (0, P - B), (0, H - E)))
    h0_p = jnp.pad(prev_state, ((0, 0), (0, P - B), (0, 0)))

    logits_p, state = fused_forward(
        x_in, h0_p, packed["w_ih"], packed["w_hh"], packed["b_eff"],
        packed["b_hn"], packed["fc_w"], packed["fc_b"], batch=B)
    return logits_p[:, :B, :], state


# ----------------------------- pure-JAX reference ----------------------------
def _reference_forward(params, x_tokens, prev_state):
    embed = jnp.take(params["embedding"], x_tokens, axis=0)
    out = embed
    states = []
    H = HIDDEN
    for l in range(N_LAYERS):
        w_ih, w_hh, b_ih, b_hh = params["gru"][l]
        h = prev_state[l]
        ys = []
        for t in range(out.shape[0]):
            gi = out[t] @ w_ih + b_ih
            gh = h @ w_hh + b_hh
            r = jax.nn.sigmoid(gi[:, :H] + gh[:, :H])
            z = jax.nn.sigmoid(gi[:, H:2 * H] + gh[:, H:2 * H])
            n = jnp.tanh(gi[:, 2 * H:] + r * gh[:, 2 * H:])
            h = (1.0 - z) * n + z * h
            ys.append(h)
        out = jnp.stack(ys, axis=0)
        states.append(h)
    logits = out @ params["fc_w"] + params["fc_b"]
    return logits, jnp.stack(states, axis=0)


# ----------------------------------- main ------------------------------------
if __name__ == "__main__":
    SEQ, BATCH, VOCAB = 6, 2, 128

    key = jax.random.PRNGKey(0)
    kp, kx, kh = jax.random.split(key, 3)

    params = init_params(kp, VOCAB)
    packed = pack_params(params)
    x_tokens = jax.random.randint(kx, (SEQ, BATCH), 0, VOCAB, dtype=jnp.int32)
    prev_state = 0.3 * jax.random.normal(kh, (N_LAYERS, BATCH, HIDDEN),
                                         jnp.float32)

    logits, state = model_forward(packed, x_tokens, prev_state)
    jax.block_until_ready((logits, state))

    ref_logits, ref_state = _reference_forward(params, x_tokens, prev_state)
    assert logits.shape == (SEQ, BATCH, VOCAB)
    assert state.shape == (N_LAYERS, BATCH, HIDDEN)
    # bf16 weight storage -> tolerance loosened vs the f32 reference.
    assert jnp.allclose(logits, ref_logits, atol=5e-2, rtol=5e-2)
    assert jnp.allclose(state, ref_state, atol=5e-2, rtol=5e-2)

    print("KERNEL_OK")
</pallas_src>

<mosaic_0001>
module attributes {stable_mosaic.version = 11 : i64} {
  func.func @_fused_kernel(%arg0: i32, %arg1: memref<6x8x256xf32, #tpu.memory_space<vmem>>, %arg2: memref<1x8x256xf32, #tpu.memory_space<vmem>>, %arg3: memref<1x256x768xbf16, #tpu.memory_space<vmem>>, %arg4: memref<1x256x768xbf16, #tpu.memory_space<vmem>>, %arg5: memref<1x1x768xf32, #tpu.memory_space<vmem>>, %arg6: memref<1x1x256xf32, #tpu.memory_space<vmem>>, %arg7: memref<256x128xbf16, #tpu.memory_space<vmem>>, %arg8: memref<1x128xf32, #tpu.memory_space<vmem>>, %arg9: memref<6x8x128xf32, #tpu.memory_space<vmem>>, %arg10: memref<1x2x256xf32, #tpu.memory_space<vmem>>, %arg11: memref<6x8x256xf32, #tpu.memory_space<vmem>>, %arg12: memref<6x8x768xf32, #tpu.memory_space<vmem>>) attributes {dimension_semantics = [#tpu.dimension_semantics<arbitrary>], iteration_bounds = array<i64: 4>, scalar_prefetch = 0 : i64, scratch_operands = 2 : i64, tpu.core_type = #tpu.core_type<tc>, window_params = [{pipeline_mode = #tpu.pipeline_mode<synchronous>, transform_indices = @transform_0, window_bounds = array<i64: 6, 8, 256>}, {transform_indices = @transform_1, window_bounds = array<i64: 1, 8, 256>}, {transform_indices = @transform_2, window_bounds = array<i64: 1, 256, 768>}, {transform_indices = @transform_3, window_bounds = array<i64: 1, 256, 768>}, {transform_indices = @transform_4, window_bounds = array<i64: 1, 1, 768>}, {transform_indices = @transform_5, window_bounds = array<i64: 1, 1, 256>}, {pipeline_mode = #tpu.pipeline_mode<synchronous>, transform_indices = @transform_6, window_bounds = array<i64: 256, 128>}, {pipeline_mode = #tpu.pipeline_mode<synchronous>, transform_indices = @transform_7, window_bounds = array<i64: 1, 128>}, {pipeline_mode = #tpu.pipeline_mode<synchronous>, transform_indices = @transform_8, window_bounds = array<i64: 6, 8, 128>}, {transform_indices = @transform_9, window_bounds = array<i64: 1, 2, 256>}]} {
    %c0_i32 = arith.constant 0 : i32
    %0 = arith.cmpi eq, %arg0, %c0_i32 : i32
    %1 = arith.extui %0 : i1 to i32
    %c0_i32_0 = arith.constant 0 : i32
    %2 = arith.cmpi ne, %1, %c0_i32_0 : i32
    scf.if %2 {
      %c0_69 = arith.constant 0 : index
      %c0_70 = arith.constant 0 : index
      %c0_71 = arith.constant 0 : index
      %214 = vector.load %arg1[%c0_69, %c0_70, %c0_71] : memref<6x8x256xf32, #tpu.memory_space<vmem>>, vector<6x8x256xf32>
      %c0_72 = arith.constant 0 : index
      %c0_73 = arith.constant 0 : index
      %c0_74 = arith.constant 0 : index
      %215 = vector.load %arg11[%c0_72, %c0_73, %c0_74] : memref<6x8x256xf32, #tpu.memory_space<vmem>>, vector<6x8x256xf32>
      tpu.vector_store %arg11[%c0_72, %c0_73, %c0_74], %214 {strides = array<i32>} : memref<6x8x256xf32, #tpu.memory_space<vmem>>, vector<6x8x256xf32>,
    } else {
    }
    %c0 = arith.constant 0 : index
    %c0_1 = arith.constant 0 : index
    %c0_2 = arith.constant 0 : index
    %3 = vector.load %arg11[%c0, %c0_1, %c0_2] : memref<6x8x256xf32, #tpu.memory_space<vmem>>, vector<6x8x256xf32>
    %4 = vector.shape_cast %3 : vector<6x8x256xf32> to vector<48x256xf32>
    %5 = arith.truncf %4 : vector<48x256xf32> to vector<48x256xbf16>
    %c0_3 = arith.constant 0 : index
    %c0_4 = arith.constant 0 : index
    %c0_5 = arith.constant 0 : index
    %6 = vector.load %arg3[%c0_3, %c0_4, %c0_5] : memref<1x256x768xbf16, #tpu.memory_space<vmem>>, vector<1x256x768xbf16>
    %7 = vector.shape_cast %6 : vector<1x256x768xbf16> to vector<256x768xbf16>
    %cst = arith.constant dense<0.000000e+00> : vector<48x768xf32>
    %8 = tpu.matmul %5, %7, %cst {dimension_numbers = #tpu.dot_dimension_numbers<[1], [0], [0], [1], [0, 0, 1, 1], [], []>} : vector<48x256xbf16>, vector<256x768xbf16>, vector<48x768xf32> -> vector<48x768xf32>
    %c0_6 = arith.constant 0 : index
    %c0_7 = arith.constant 0 : index
    %c0_8 = arith.constant 0 : index
    %9 = vector.load %arg5[%c0_6, %c0_7, %c0_8] : memref<1x1x768xf32, #tpu.memory_space<vmem>>, vector<1x1x768xf32>
    %10 = vector.shape_cast %9 : vector<1x1x768xf32> to vector<1x768xf32>
    %11 = vector.broadcast %10 : vector<1x768xf32> to vector<48x768xf32>
    %12 = arith.addf %8, %11 : vector<48x768xf32>
    %13 = vector.shape_cast %12 : vector<48x768xf32> to vector<6x8x768xf32>
    %c0_9 = arith.constant 0 : index
    %c0_10 = arith.constant 0 : index
    %c0_11 = arith.constant 0 : index
    %14 = vector.load %arg12[%c0_9, %c0_10, %c0_11] : memref<6x8x768xf32, #tpu.memory_space<vmem>>, vector<6x8x768xf32>
    tpu.vector_store %arg12[%c0_9, %c0_10, %c0_11], %13 {strides = array<i32>} : memref<6x8x768xf32, #tpu.memory_space<vmem>>, vector<6x8x768xf32>,
    %c0_12 = arith.constant 0 : index
    %c0_13 = arith.constant 0 : index
    %c0_14 = arith.constant 0 : index
    %15 = vector.load %arg4[%c0_12, %c0_13, %c0_14] : memref<1x256x768xbf16, #tpu.memory_space<vmem>>, vector<1x256x768xbf16>
    %16 = vector.shape_cast %15 : vector<1x256x768xbf16> to vector<256x768xbf16>
    %c0_15 = arith.constant 0 : index
    %c0_16 = arith.constant 0 : index
    %c0_17 = arith.constant 0 : index
    %17 = vector.load %arg6[%c0_15, %c0_16, %c0_17] : memref<1x1x256xf32, #tpu.memory_space<vmem>>, vector<1x1x256xf32>
    %18 = vector.shape_cast %17 : vector<1x1x256xf32> to vector<1x256xf32>
    %c0_18 = arith.constant 0 : index
    %c0_19 = arith.constant 0 : index
    %c0_20 = arith.constant 0 : index
    %19 = vector.load %arg2[%c0_18, %c0_19, %c0_20] : memref<1x8x256xf32, #tpu.memory_space<vmem>>, vector<1x8x256xf32>
    %20 = vector.shape_cast %19 : vector<1x8x256xf32> to vector<8x256xf32>
    %c0_i32_21 = arith.constant 0 : i32
    %21 = arith.index_cast %c0_i32_21 : i32 to index
    %c0_22 = arith.constant 0 : index
    %c0_23 = arith.constant 0 : index
    %22 = vector.load %arg12[%21, %c0_22, %c0_23] : memref<6x8x768xf32, #tpu.memory_space<vmem>>, vector<1x8x768xf32>
    %23 = vector.shape_cast %22 : vector<1x8x768xf32> to vector<8x768xf32>
    %24 = arith.truncf %20 : vector<8x256xf32> to vector<8x256xbf16>
    %cst_24 = arith.constant dense<0.000000e+00> : vector<8x768xf32>
    %25 = tpu.matmul %24, %16, %cst_24 {dimension_numbers = #tpu.dot_dimension_numbers<[1], [0], [0], [1], [0, 0, 1, 1], [], []>} : vector<8x256xbf16>, vector<256x768xbf16>, vector<8x768xf32> -> vector<8x768xf32>
    %26 = vector.extract_strided_slice %23 {offsets = [0, 0], sizes = [8, 512], strides = [1, 1]} : vector<8x768xf32> to vector<8x512xf32>
    %27 = vector.extract_strided_slice %25 {offsets = [0, 0], sizes = [8, 512], strides = [1, 1]} : vector<8x768xf32> to vector<8x512xf32>
    %28 = arith.addf %26, %27 : vector<8x512xf32>
    %29 = arith.negf %28 : vector<8x512xf32>
    %30 = math.exp %29 : vector<8x512xf32>
    %cst_25 = arith.constant 1.000000e+00 : f32
    %31 = vector.broadcast %cst_25 : f32 to vector<8x512xf32>
    %32 = arith.addf %31, %30 : vector<8x512xf32>
    %33 = arith.divf %31, %32 : vector<8x512xf32>
    %34 = vector.extract_strided_slice %33 {offsets = [0, 0], sizes = [8, 256], strides = [1, 1]} : vector<8x512xf32> to vector<8x256xf32>
    %35 = vector.extract_strided_slice %33 {offsets = [0, 256], sizes = [8, 256], strides = [1, 1]} : vector<8x512xf32> to vector<8x256xf32>
    %36 = vector.extract_strided_slice %23 {offsets = [0, 512], sizes = [8, 256], strides = [1, 1]} : vector<8x768xf32> to vector<8x256xf32>
    %37 = vector.extract_strided_slice %25 {offsets = [0, 512], sizes = [8, 256], strides = [1, 1]} : vector<8x768xf32> to vector<8x256xf32>
    %38 = vector.broadcast %18 : vector<1x256xf32> to vector<8x256xf32>
    %39 = arith.addf %37, %38 : vector<8x256xf32>
    %40 = arith.mulf %34, %39 : vector<8x256xf32>
    %41 = arith.addf %36, %40 : vector<8x256xf32>
    %42 = math.tanh %41 : vector<8x256xf32>
    %cst_26 = arith.constant 1.000000e+00 : f32
    %43 = vector.broadcast %cst_26 : f32 to vector<8x256xf32>
    %44 = arith.subf %43, %35 : vector<8x256xf32>
    %45 = arith.mulf %44, %42 : vector<8x256xf32>
    %46 = arith.mulf %35, %20 : vector<8x256xf32>
    %47 = arith.addf %45, %46 : vector<8x256xf32>
    %48 = arith.index_cast %c0_i32_21 : i32 to index
    %c0_27 = arith.constant 0 : index
    %c0_28 = arith.constant 0 : index
    %49 = vector.load %arg11[%48, %c0_27, %c0_28] : memref<6x8x256xf32, #tpu.memory_space<vmem>>, vector<1x8x256xf32>
    %50 = vector.shape_cast %49 : vector<1x8x256xf32> to vector<8x256xf32>
    %51 = vector.shape_cast %47 : vector<8x256xf32> to vector<1x8x256xf32>
    tpu.vector_store %arg11[%48, %c0_27, %c0_28], %51 {strides = array<i32>} : memref<6x8x256xf32, #tpu.memory_space<vmem>>, vector<1x8x256xf32>,
    %c1_i32 = arith.constant 1 : i32
    %52 = arith.index_cast %c1_i32 : i32 to index
    %c0_29 = arith.constant 0 : index
    %c0_30 = arith.constant 0 : index
    %53 = vector.load %arg12[%52, %c0_29, %c0_30] : memref<6x8x768xf32, #tpu.memory_space<vmem>>, vector<1x8x768xf32>
    %54 = vector.shape_cast %53 : vector<1x8x768xf32> to vector<8x768xf32>
    %55 = arith.truncf %47 : vector<8x256xf32> to vector<8x256xbf16>
    %cst_31 = arith.constant dense<0.000000e+00> : vector<8x768xf32>
    %56 = tpu.matmul %55, %16, %cst_31 {dimension_numbers = #tpu.dot_dimension_numbers<[1], [0], [0], [1], [0, 0, 1, 1], [], []>} : vector<8x256xbf16>, vector<256x768xbf16>, vector<8x768xf32> -> vector<8x768xf32>
    %57 = vector.extract_strided_slice %54 {offsets = [0, 0], sizes = [8, 512], strides = [1, 1]} : vector<8x768xf32> to vector<8x512xf32>
    %58 = vector.extract_strided_slice %56 {offsets = [0, 0], sizes = [8, 512], strides = [1, 1]} : vector<8x768xf32> to vector<8x512xf32>
    %59 = arith.addf %57, %58 : vector<8x512xf32>
    %60 = arith.negf %59 : vector<8x512xf32>
    %61 = math.exp %60 : vector<8x512xf32>
    %cst_32 = arith.constant 1.000000e+00 : f32
    %62 = vector.broadcast %cst_32 : f32 to vector<8x512xf32>
    %63 = arith.addf %62, %61 : vector<8x512xf32>
    %64 = arith.divf %62, %63 : vector<8x512xf32>
    %65 = vector.extract_strided_slice %64 {offsets = [0, 0], sizes = [8, 256], strides = [1, 1]} : vector<8x512xf32> to vector<8x256xf32>
    %66 = vector.extract_strided_slice %64 {offsets = [0, 256], sizes = [8, 256], strides = [1, 1]} : vector<8x512xf32> to vector<8x256xf32>
    %67 = vector.extract_strided_slice %54 {offsets = [0, 512], sizes = [8, 256], strides = [1, 1]} : vector<8x768xf32> to vector<8x256xf32>
    %68 = vector.extract_strided_slice %56 {offsets = [0, 512], sizes = [8, 256], strides = [1, 1]} : vector<8x768xf32> to vector<8x256xf32>
    %69 = vector.broadcast %18 : vector<1x256xf32> to vector<8x256xf32>
    %70 = arith.addf %68, %69 : vector<8x256xf32>
    %71 = arith.mulf %65, %70 : vector<8x256xf32>
    %72 = arith.addf %67, %71 : vector<8x256xf32>
    %73 = math.tanh %72 : vector<8x256xf32>
    %cst_33 = arith.constant 1.000000e+00 : f32
    %74 = vector.broadcast %cst_33 : f32 to vector<8x256xf32>
    %75 = arith.subf %74, %66 : vector<8x256xf32>
    %76 = arith.mulf %75, %73 : vector<8x256xf32>
    %77 = arith.mulf %66, %47 : vector<8x256xf32>
    %78 = arith.addf %76, %77 : vector<8x256xf32>
    %79 = arith.index_cast %c1_i32 : i32 to index
    %c0_34 = arith.constant 0 : index
    %c0_35 = arith.constant 0 : index
    %80 = vector.load %arg11[%79, %c0_34, %c0_35] : memref<6x8x256xf32, #tpu.memory_space<vmem>>, vector<1x8x256xf32>
    %81 = vector.shape_cast %80 : vector<1x8x256xf32> to vector<8x256xf32>
    %82 = vector.shape_cast %78 : vector<8x256xf32> to vector<1x8x256xf32>
    tpu.vector_store %arg11[%79, %c0_34, %c0_35], %82 {strides = array<i32>} : memref<6x8x256xf32, #tpu.memory_space<vmem>>, vector<1x8x256xf32>,
    %c2_i32 = arith.constant 2 : i32
    %83 = arith.index_cast %c2_i32 : i32 to index
    %c0_36 = arith.constant 0 : index
    %c0_37 = arith.constant 0 : index
    %84 = vector.load %arg12[%83, %c0_36, %c0_37] : memref<6x8x768xf32, #tpu.memory_space<vmem>>, vector<1x8x768xf32>
    %85 = vector.shape_cast %84 : vector<1x8x768xf32> to vector<8x768xf32>
    %86 = arith.truncf %78 : vector<8x256xf32> to vector<8x256xbf16>
    %cst_38 = arith.constant dense<0.000000e+00> : vector<8x768xf32>
    %87 = tpu.matmul %86, %16, %cst_38 {dimension_numbers = #tpu.dot_dimension_numbers<[1], [0], [0], [1], [0, 0, 1, 1], [], []>} : vector<8x256xbf16>, vector<256x768xbf16>, vector<8x768xf32> -> vector<8x768xf32>
    %88 = vector.extract_strided_slice %85 {offsets = [0, 0], sizes = [8, 512], strides = [1, 1]} : vector<8x768xf32> to vector<8x512xf32>
    %89 = vector.extract_strided_slice %87 {offsets = [0, 0], sizes = [8, 512], strides = [1, 1]} : vector<8x768xf32> to vector<8x512xf32>
    %90 = arith.addf %88, %89 : vector<8x512xf32>
    %91 = arith.negf %90 : vector<8x512xf32>
    %92 = math.exp %91 : vector<8x512xf32>
    %cst_39 = arith.constant 1.000000e+00 : f32
    %93 = vector.broadcast %cst_39 : f32 to vector<8x512xf32>
    %94 = arith.addf %93, %92 : vector<8x512xf32>
    %95 = arith.divf %93, %94 : vector<8x512xf32>
    %96 = vector.extract_strided_slice %95 {offsets = [0, 0], sizes = [8, 256], strides = [1, 1]} : vector<8x512xf32> to vector<8x256xf32>
    %97 = vector.extract_strided_slice %95 {offsets = [0, 256], sizes = [8, 256], strides = [1, 1]} : vector<8x512xf32> to vector<8x256xf32>
    %98 = vector.extract_strided_slice %85 {offsets = [0, 512], sizes = [8, 256], strides = [1, 1]} : vector<8x768xf32> to vector<8x256xf32>
    %99 = vector.extract_strided_slice %87 {offsets = [0, 512], sizes = [8, 256], strides = [1, 1]} : vector<8x768xf32> to vector<8x256xf32>
    %100 = vector.broadcast %18 : vector<1x256xf32> to vector<8x256xf32>
    %101 = arith.addf %99, %100 : vector<8x256xf32>
    %102 = arith.mulf %96, %101 : vector<8x256xf32>
    %103 = arith.addf %98, %102 : vector<8x256xf32>
    %104 = math.tanh %103 : vector<8x256xf32>
    %cst_40 = arith.constant 1.000000e+00 : f32
    %105 = vector.broadcast %cst_40 : f32 to vector<8x256xf32>
    %106 = arith.subf %105, %97 : vector<8x256xf32>
    %107 = arith.mulf %106, %104 : vector<8x256xf32>
    %108 = arith.mulf %97, %78 : vector<8x256xf32>
    %109 = arith.addf %107, %108 : vector<8x256xf32>
    %110 = arith.index_cast %c2_i32 : i32 to index
    %c0_41 = arith.constant 0 : index
    %c0_42 = arith.constant 0 : index
    %111 = vector.load %arg11[%110, %c0_41, %c0_42] : memref<6x8x256xf32, #tpu.memory_space<vmem>>, vector<1x8x256xf32>
    %112 = vector.shape_cast %111 : vector<1x8x256xf32> to vector<8x256xf32>
    %113 = vector.shape_cast %109 : vector<8x256xf32> to vector<1x8x256xf32>
    tpu.vector_store %arg11[%110, %c0_41, %c0_42], %113 {strides = array<i32>} : memref<6x8x256xf32, #tpu.memory_space<vmem>>, vector<1x8x256xf32>,
    %c3_i32 = arith.constant 3 : i32
    %114 = arith.index_cast %c3_i32 : i32 to index
    %c0_43 = arith.constant 0 : index
    %c0_44 = arith.constant 0 : index
    %115 = vector.load %arg12[%114, %c0_43, %c0_44] : memref<6x8x768xf32, #tpu.memory_space<vmem>>, vector<1x8x768xf32>
    %116 = vector.shape_cast %115 : vector<1x8x768xf32> to vector<8x768xf32>
    %117 = arith.truncf %109 : vector<8x256xf32> to vector<8x256xbf16>
    %cst_45 = arith.constant dense<0.000000e+00> : vector<8x768xf32>
    %118 = tpu.matmul %117, %16, %cst_45 {dimension_numbers = #tpu.dot_dimension_numbers<[1], [0], [0], [1], [0, 0, 1, 1], [], []>} : vector<8x256xbf16>, vector<256x768xbf16>, vector<8x768xf32> -> vector<8x768xf32>
    %119 = vector.extract_strided_slice %116 {offsets = [0, 0], sizes = [8, 512], strides = [1, 1]} : vector<8x768xf32> to vector<8x512xf32>
    %120 = vector.extract_strided_slice %118 {offsets = [0, 0], sizes = [8, 512], strides = [1, 1]} : vector<8x768xf32> to vector<8x512xf32>
    %121 = arith.addf %119, %120 : vector<8x512xf32>
    %122 = arith.negf %121 : vector<8x512xf32>
    %123 = math.exp %122 : vector<8x512xf32>
    %cst_46 = arith.constant 1.000000e+00 : f32
    %124 = vector.broadcast %cst_46 : f32 to vector<8x512xf32>
    %125 = arith.addf %124, %123 : vector<8x512xf32>
    %126 = arith.divf %124, %125 : vector<8x512xf32>
    %127 = vector.extract_strided_slice %126 {offsets = [0, 0], sizes = [8, 256], strides = [1, 1]} : vector<8x512xf32> to vector<8x256xf32>
    %128 = vector.extract_strided_slice %126 {offsets = [0, 256], sizes = [8, 256], strides = [1, 1]} : vector<8x512xf32> to vector<8x256xf32>
    %129 = vector.extract_strided_slice %116 {offsets = [0, 512], sizes = [8, 256], strides = [1, 1]} : vector<8x768xf32> to vector<8x256xf32>
    %130 = vector.extract_strided_slice %118 {offsets = [0, 512], sizes = [8, 256], strides = [1, 1]} : vector<8x768xf32> to vector<8x256xf32>
    %131 = vector.broadcast %18 : vector<1x256xf32> to vector<8x256xf32>
    %132 = arith.addf %130, %131 : vector<8x256xf32>
    %133 = arith.mulf %127, %132 : vector<8x256xf32>
    %134 = arith.addf %129, %133 : vector<8x256xf32>
    %135 = math.tanh %134 : vector<8x256xf32>
    %cst_47 = arith.constant 1.000000e+00 : f32
    %136 = vector.broadcast %cst_47 : f32 to vector<8x256xf32>
    %137 = arith.subf %136, %128 : vector<8x256xf32>
    %138 = arith.mulf %137, %135 : vector<8x256xf32>
    %139 = arith.mulf %128, %109 : vector<8x256xf32>
    %140 = arith.addf %138, %139 : vector<8x256xf32>
    %141 = arith.index_cast %c3_i32 : i32 to index
    %c0_48 = arith.constant 0 : index
    %c0_49 = arith.constant 0 : index
    %142 = vector.load %arg11[%141, %c0_48, %c0_49] : memref<6x8x256xf32, #tpu.memory_space<vmem>>, vector<1x8x256xf32>
    %143 = vector.shape_cast %142 : vector<1x8x256xf32> to vector<8x256xf32>
    %144 = vector.shape_cast %140 : vector<8x256xf32> to vector<1x8x256xf32>
    tpu.vector_store %arg11[%141, %c0_48, %c0_49], %144 {strides = array<i32>} : memref<6x8x256xf32, #tpu.memory_space<vmem>>, vector<1x8x256xf32>,
    %c4_i32 = arith.constant 4 : i32
    %145 = arith.index_cast %c4_i32 : i32 to index
    %c0_50 = arith.constant 0 : index
    %c0_51 = arith.constant 0 : index
    %146 = vector.load %arg12[%145, %c0_50, %c0_51] : memref<6x8x768xf32, #tpu.memory_space<vmem>>, vector<1x8x768xf32>
    %147 = vector.shape_cast %146 : vector<1x8x768xf32> to vector<8x768xf32>
    %148 = arith.truncf %140 : vector<8x256xf32> to vector<8x256xbf16>
    %cst_52 = arith.constant dense<0.000000e+00> : vector<8x768xf32>
    %149 = tpu.matmul %148, %16, %cst_52 {dimension_numbers = #tpu.dot_dimension_numbers<[1], [0], [0], [1], [0, 0, 1, 1], [], []>} : vector<8x256xbf16>, vector<256x768xbf16>, vector<8x768xf32> -> vector<8x768xf32>
    %150 = vector.extract_strided_slice %147 {offsets = [0, 0], sizes = [8, 512], strides = [1, 1]} : vector<8x768xf32> to vector<8x512xf32>
    %151 = vector.extract_strided_slice %149 {offsets = [0, 0], sizes = [8, 512], strides = [1, 1]} : vector<8x768xf32> to vector<8x512xf32>
    %152 = arith.addf %150, %151 : vector<8x512xf32>
    %153 = arith.negf %152 : vector<8x512xf32>
    %154 = math.exp %153 : vector<8x512xf32>
    %cst_53 = arith.constant 1.000000e+00 : f32
    %155 = vector.broadcast %cst_53 : f32 to vector<8x512xf32>
    %156 = arith.addf %155, %154 : vector<8x512xf32>
    %157 = arith.divf %155, %156 : vector<8x512xf32>
    %158 = vector.extract_strided_slice %157 {offsets = [0, 0], sizes = [8, 256], strides = [1, 1]} : vector<8x512xf32> to vector<8x256xf32>
    %159 = vector.extract_strided_slice %157 {offsets = [0, 256], sizes = [8, 256], strides = [1, 1]} : vector<8x512xf32> to vector<8x256xf32>
    %160 = vector.extract_strided_slice %147 {offsets = [0, 512], sizes = [8, 256], strides = [1, 1]} : vector<8x768xf32> to vector<8x256xf32>
    %161 = vector.extract_strided_slice %149 {offsets = [0, 512], sizes = [8, 256], strides = [1, 1]} : vector<8x768xf32> to vector<8x256xf32>
    %162 = vector.broadcast %18 : vector<1x256xf32> to vector<8x256xf32>
    %163 = arith.addf %161, %162 : vector<8x256xf32>
    %164 = arith.mulf %158, %163 : vector<8x256xf32>
    %165 = arith.addf %160, %164 : vector<8x256xf32>
    %166 = math.tanh %165 : vector<8x256xf32>
    %cst_54 = arith.constant 1.000000e+00 : f32
    %167 = vector.broadcast %cst_54 : f32 to vector<8x256xf32>
    %168 = arith.subf %167, %159 : vector<8x256xf32>
    %169 = arith.mulf %168, %166 : vector<8x256xf32>
    %170 = arith.mulf %159, %140 : vector<8x256xf32>
    %171 = arith.addf %169, %170 : vector<8x256xf32>
    %172 = arith.index_cast %c4_i32 : i32 to index
    %c0_55 = arith.constant 0 : index
    %c0_56 = arith.constant 0 : index
    %173 = vector.load %arg11[%172, %c0_55, %c0_56] : memref<6x8x256xf32, #tpu.memory_space<vmem>>, vector<1x8x256xf32>
    %174 = vector.shape_cast %173 : vector<1x8x256xf32> to vector<8x256xf32>
    %175 = vector.shape_cast %171 : vector<8x256xf32> to vector<1x8x256xf32>
    tpu.vector_store %arg11[%172, %c0_55, %c0_56], %175 {strides = array<i32>} : memref<6x8x256xf32, #tpu.memory_space<vmem>>, vector<1x8x256xf32>,
    %c5_i32 = arith.constant 5 : i32
    %176 = arith.index_cast %c5_i32 : i32 to index
    %c0_57 = arith.constant 0 : index
    %c0_58 = arith.constant 0 : index
    %177 = vector.load %arg12[%176, %c0_57, %c0_58] : memref<6x8x768xf32, #tpu.memory_space<vmem>>, vector<1x8x768xf32>
    %178 = vector.shape_cast %177 : vector<1x8x768xf32> to vector<8x768xf32>
    %179 = arith.truncf %171 : vector<8x256xf32> to vector<8x256xbf16>
    %cst_59 = arith.constant dense<0.000000e+00> : vector<8x768xf32>
    %180 = tpu.matmul %179, %16, %cst_59 {dimension_numbers = #tpu.dot_dimension_numbers<[1], [0], [0], [1], [0, 0, 1, 1], [], []>} : vector<8x256xbf16>, vector<256x768xbf16>, vector<8x768xf32> -> vector<8x768xf32>
    %181 = vector.extract_strided_slice %178 {offsets = [0, 0], sizes = [8, 512], strides = [1, 1]} : vector<8x768xf32> to vector<8x512xf32>
    %182 = vector.extract_strided_slice %180 {offsets = [0, 0], sizes = [8, 512], strides = [1, 1]} : vector<8x768xf32> to vector<8x512xf32>
    %183 = arith.addf %181, %182 : vector<8x512xf32>
    %184 = arith.negf %183 : vector<8x512xf32>
    %185 = math.exp %184 : vector<8x512xf32>
    %cst_60 = arith.constant 1.000000e+00 : f32
    %186 = vector.broadcast %cst_60 : f32 to vector<8x512xf32>
    %187 = arith.addf %186, %185 : vector<8x512xf32>
    %188 = arith.divf %186, %187 : vector<8x512xf32>
    %189 = vector.extract_strided_slice %188 {offsets = [0, 0], sizes = [8, 256], strides = [1, 1]} : vector<8x512xf32> to vector<8x256xf32>
    %190 = vector.extract_strided_slice %188 {offsets = [0, 256], sizes = [8, 256], strides = [1, 1]} : vector<8x512xf32> to vector<8x256xf32>
    %191 = vector.extract_strided_slice %178 {offsets = [0, 512], sizes = [8, 256], strides = [1, 1]} : vector<8x768xf32> to vector<8x256xf32>
    %192 = vector.extract_strided_slice %180 {offsets = [0, 512], sizes = [8, 256], strides = [1, 1]} : vector<8x768xf32> to vector<8x256xf32>
    %193 = vector.broadcast %18 : vector<1x256xf32> to vector<8x256xf32>
    %194 = arith.addf %192, %193 : vector<8x256xf32>
    %195 = arith.mulf %189, %194 : vector<8x256xf32>
    %196 = arith.addf %191, %195 : vector<8x256xf32>
    %197 = math.tanh %196 : vector<8x256xf32>
    %cst_61 = arith.constant 1.000000e+00 : f32
    %198 = vector.broadcast %cst_61 : f32 to vector<8x256xf32>
    %199 = arith.subf %198, %190 : vector<8x256xf32>
    %200 = arith.mulf %199, %197 : vector<8x256xf32>
    %201 = arith.mulf %190, %171 : vector<8x256xf32>
    %202 = arith.addf %200, %201 : vector<8x256xf32>
    %203 = arith.index_cast %c5_i32 : i32 to index
    %c0_62 = arith.constant 0 : index
    %c0_63 = arith.constant 0 : index
    %204 = vector.load %arg11[%203, %c0_62, %c0_63] : memref<6x8x256xf32, #tpu.memory_space<vmem>>, vector<1x8x256xf32>
    %205 = vector.shape_cast %204 : vector<1x8x256xf32> to vector<8x256xf32>
    %206 = vector.shape_cast %202 : vector<8x256xf32> to vector<1x8x256xf32>
    tpu.vector_store %arg11[%203, %c0_62, %c0_63], %206 {strides = array<i32>} : memref<6x8x256xf32, #tpu.memory_space<vmem>>, vector<1x8x256xf32>,
    %c6_i32 = arith.constant 6 : i32
    %207 = vector.extract_strided_slice %202 {offsets = [0, 0], sizes = [2, 256], strides = [1, 1]} : vector<8x256xf32> to vector<2x256xf32>
    %c0_64 = arith.constant 0 : index
    %c0_65 = arith.constant 0 : index
    %c0_66 = arith.constant 0 : index
    %208 = vector.load %arg10[%c0_64, %c0_65, %c0_66] : memref<1x2x256xf32, #tpu.memory_space<vmem>>, vector<1x2x256xf32>
    %209 = vector.shape_cast %208 : vector<1x2x256xf32> to vector<2x256xf32>
    %210 = vector.shape_cast %207 : vector<2x256xf32> to vector<1x2x256xf32>
    tpu.vector_store %arg10[%c0_64, %c0_65, %c0_66], %210 {strides = array<i32>} : memref<1x2x256xf32, #tpu.memory_space<vmem>>, vector<1x2x256xf32>,
    %c3_i32_67 = arith.constant 3 : i32
    %211 = arith.cmpi eq, %arg0, %c3_i32_67 : i32
    %212 = arith.extui %211 : i1 to i32
    %c0_i32_68 = arith.constant 0 : i32
    %213 = arith.cmpi ne, %212, %c0_i32_68 : i32
    scf.if %213 {
      %c0_69 = arith.constant 0 : index
      %c0_70 = arith.constant 0 : index
      %c0_71 = arith.constant 0 : index
      %214 = vector.load %arg11[%c0_69, %c0_70, %c0_71] : memref<6x8x256xf32, #tpu.memory_space<vmem>>, vector<6x8x256xf32>
      %215 = vector.shape_cast %214 : vector<6x8x256xf32> to vector<48x256xf32>
      %216 = arith.truncf %215 : vector<48x256xf32> to vector<48x256xbf16>
      %c0_72 = arith.constant 0 : index
      %c0_73 = arith.constant 0 : index
      %217 = vector.load %arg7[%c0_72, %c0_73] : memref<256x128xbf16, #tpu.memory_space<vmem>>, vector<256x128xbf16>
      %cst_74 = arith.constant dense<0.000000e+00> : vector<48x128xf32>
      %218 = tpu.matmul %216, %217, %cst_74 {dimension_numbers = #tpu.dot_dimension_numbers<[1], [0], [0], [1], [0, 0, 1, 1], [], []>} : vector<48x256xbf16>, vector<256x128xbf16>, vector<48x128xf32> -> vector<48x128xf32>
      %c0_75 = arith.constant 0 : index
      %c0_76 = arith.constant 0 : index
      %219 = vector.load %arg8[%c0_75, %c0_76] : memref<1x128xf32, #tpu.memory_space<vmem>>, vector<1x128xf32>
      %220 = vector.broadcast %219 : vector<1x128xf32> to vector<48x128xf32>
      %221 = arith.addf %218, %220 : vector<48x128xf32>
      %222 = vector.shape_cast %221 : vector<48x128xf32> to vector<6x8x128xf32>
      %c0_77 = arith.constant 0 : index
      %c0_78 = arith.constant 0 : index
      %c0_79 = arith.constant 0 : index
      %223 = vector.load %arg9[%c0_77, %c0_78, %c0_79] : memref<6x8x128xf32, #tpu.memory_space<vmem>>, vector<6x8x128xf32>
      tpu.vector_store %arg9[%c0_77, %c0_78, %c0_79], %222 {strides = array<i32>} : memref<6x8x128xf32, #tpu.memory_space<vmem>>, vector<6x8x128xf32>,
    } else {
    }
    return
  }
  func.func @transform_0(%arg0: i32) -> (i32, i32, i32) {
    %c0_i32 = arith.constant 0 : i32
    %c0_i32_0 = arith.constant 0 : i32
    %c0_i32_1 = arith.constant 0 : i32
    %c0_i32_2 = arith.constant 0 : i32
    return %c0_i32, %c0_i32_0, %c0_i32_1 : i32, i32, i32
  }
  func.func @transform_1(%arg0: i32) -> (i32, i32, i32) {
    %c0_i32 = arith.constant 0 : i32
    %c0_i32_0 = arith.constant 0 : i32
    %c0_i32_1 = arith.constant 0 : i32
    return %arg0, %c0_i32, %c0_i32_0 : i32, i32, i32
  }
  func.func @transform_2(%arg0: i32) -> (i32, i32, i32) {
    %c0_i32 = arith.constant 0 : i32
    %c0_i32_0 = arith.constant 0 : i32
    %c0_i32_1 = arith.constant 0 : i32
    return %arg0, %c0_i32, %c0_i32_0 : i32, i32, i32
  }
  func.func @transform_3(%arg0: i32) -> (i32, i32, i32) {
    %c0_i32 = arith.constant 0 : i32
    %c0_i32_0 = arith.constant 0 : i32
    %c0_i32_1 = arith.constant 0 : i32
    return %arg0, %c0_i32, %c0_i32_0 : i32, i32, i32
  }
  func.func @transform_4(%arg0: i32) -> (i32, i32, i32) {
    %c0_i32 = arith.constant 0 : i32
    %c0_i32_0 = arith.constant 0 : i32
    %c0_i32_1 = arith.constant 0 : i32
    return %arg0, %c0_i32, %c0_i32_0 : i32, i32, i32
  }
  func.func @transform_5(%arg0: i32) -> (i32, i32, i32) {
    %c0_i32 = arith.constant 0 : i32
    %c0_i32_0 = arith.constant 0 : i32
    %c0_i32_1 = arith.constant 0 : i32
    return %arg0, %c0_i32, %c0_i32_0 : i32, i32, i32
  }
  func.func @transform_6(%arg0: i32) -> (i32, i32) {
    %c0_i32 = arith.constant 0 : i32
    %c0_i32_0 = arith.constant 0 : i32
    %c0_i32_1 = arith.constant 0 : i32
    return %c0_i32, %c0_i32_0 : i32, i32
  }
  func.func @transform_7(%arg0: i32) -> (i32, i32) {
    %c0_i32 = arith.constant 0 : i32
    %c0_i32_0 = arith.constant 0 : i32
    %c0_i32_1 = arith.constant 0 : i32
    return %c0_i32, %c0_i32_0 : i32, i32
  }
  func.func @transform_8(%arg0: i32) -> (i32, i32, i32) {
    %c0_i32 = arith.constant 0 : i32
    %c0_i32_0 = arith.constant 0 : i32
    %c0_i32_1 = arith.constant 0 : i32
    %c0_i32_2 = arith.constant 0 : i32
    return %c0_i32, %c0_i32_0, %c0_i32_1 : i32, i32, i32
  }
  func.func @transform_9(%arg0: i32) -> (i32, i32, i32) {
    %c0_i32 = arith.constant 0 : i32
    %c0_i32_0 = arith.constant 0 : i32
    %c0_i32_1 = arith.constant 0 : i32
    return %arg0, %c0_i32, %c0_i32_0 : i32, i32, i32
  }
}

</mosaic_0001>

<llo_original>
// kernel: model_forward.1
$region0: #{model_forward.1}
  #allocation0 [shape = 'u32[]', space=smem, size = 0x4, offset = 0x4, fixed_abs, tag = 'smem constant byte address 0x4 - core index']
  #allocation1 [shape = 'u32[144,128]{1,0:T(1,128)}', space=vmem, size = 0x12000, scoped, tag = 'internal scratch']
  #allocation2 [shape = 'f32[6,8,256]{2,1,0:T(8,128)}', space=vmem, size = 0xc000, scoped, tag = 'scratch operand']
  #allocation3 [shape = 'f32[6,8,768]{2,1,0:T(8,128)}', space=vmem, size = 0x24000, scoped, tag = 'scratch operand']
  %s0 = inlined_call_operand.vmem [shape: f32[6,8,256], index: 0, kind: input, shape index: {}]
  %s1 = inlined_call_operand.vmem [shape: f32[4,8,256], index: 1, kind: input, shape index: {}]
  %s2 = inlined_call_operand.hbm [shape: bf16[4,256,768], index: 2, kind: input, shape index: {}]
  %s3 = inlined_call_operand.hbm [shape: bf16[4,256,768], index: 3, kind: input, shape index: {}]
  %s4 = inlined_call_operand.hbm [shape: f32[4,1,768], index: 4, kind: input, shape index: {}]
  %s5 = inlined_call_operand.hbm [shape: f32[4,1,256], index: 5, kind: input, shape index: {}]
  %s6 = inlined_call_operand.hbm [shape: bf16[256,128], index: 6, kind: input, shape index: {}]
  %s7 = inlined_call_operand.hbm [shape: f32[1,128], index: 7, kind: input, shape index: {}]
  %s8 = inlined_call_operand.vmem [shape: f32[6,8,128], index: 8, kind: output, shape index: {0}]
  %s9 = inlined_call_operand.hbm [shape: f32[4,2,256], index: 9, kind: output, shape index: {1}]
  %10 = xla_tuple %s8, %s9
  %s11 = sld [smem:[#allocation0]]
  $region105: #{model_forward.1} parent=0
    _
  %s13 = ssub.s32 1, %s11
  %s14 = scalar_select 0, %s13, %s11
  $region1: #{model_forward.1} parent=0
    #allocation4 [shape = 'u8[786432]{0}', space=vmem, size = 0xc0000, scoped, tag = 'input window, operand 2']
    #allocation5 [shape = 's32[2]{0}', space=sflag, size = 0x8, scoped, tag = 'scoped memory for model_forward.1']
    #allocation6 [shape = 's32[2]{0}', space=sflag, size = 0x8, scoped, tag = 'scoped memory for model_forward.1']
    #allocation7 [shape = 'u8[786432]{0}', space=vmem, size = 0xc0000, scoped, tag = 'input window, operand 3']
    #allocation8 [shape = 's32[2]{0}', space=sflag, size = 0x8, scoped, tag = 'scoped memory for model_forward.1']
    #allocation9 [shape = 'u8[6144]{0}', space=vmem, size = 0x1800, scoped, tag = 'input window, operand 4']
    #allocation10 [shape = 'u8[2048]{0}', space=vmem, size = 0x800, scoped, tag = 'input window, operand 5']
    #allocation11 [shape = 's32[2]{0}', space=sflag, size = 0x8, scoped, tag = 'scoped memory for model_forward.1']
    #allocation12 [shape = 'u8[65536]{0}', space=vmem, size = 0x10000, scoped, tag = 'input window, operand 6, single buffered']
    #allocation13 [shape = 'u8[512]{0}', space=vmem, size = 0x400, scoped, tag = 'input window, operand 7, single buffered']
    #allocation14 [shape = 's32[1]{0}', space=sflag, size = 0x4, scoped, tag = 'scoped memory for model_forward.1']
    #allocation15 [shape = 'u8[4096]{0}', space=vmem, size = 0x1000, scoped, tag = 'output window, operand 1']
    %15 = vsyncpa [#allocation5], 0
    %s16 = scalar_lea.sflag [#allocation5], 1
    %17 = vsyncpa %s16, 0
    %18 = vsyncpa [#allocation8], 0
    %s19 = scalar_lea.sflag [#allocation8], 1
    %20 = vsyncpa %s19, 0
    %21 = vsyncpa [#allocation11], 0
    %s22 = scalar_lea.sflag [#allocation11], 1
    %23 = vsyncpa %s22, 0
    %24 = vsyncpa [#allocation14], 0
    %25 = vsyncpa [#allocation6], 0
    %s26 = scalar_lea.sflag [#allocation6], 1
    %27 = vsyncpa %s26, 0
    loop: start=0, step=1, limit=6
    $region2: #{model_forward.1} parent=1 // loop_pre_header
      _
    $region3: #{model_forward.1} parent=1 // loop_header
      %s29 = sphi 0, %s33
      %p30 = scmp.ge.s32.totalorder %s29, 6
      %s37 = sphi 0, %s37
      %s39 = sphi 0, %s37
      %s40 = sphi 0, %s39
      %s54 = sphi 0, %s40
      %s60 = sphi 0, %s62
      %s63 = sphi 0, %s60
      %s64 = sphi 0, %s63
      %s80 = sphi 0, %s64
      %s86 = sphi 0, %s88
      %s89 = sphi 0, %s86
      %s90 = sphi 0, %s89
      %s106 = sphi 0, %s90
      %s112 = sphi 0, %s114
      %s115 = sphi 0, %s112
      %s116 = sphi 0, %s115
      %s132 = sphi 0, %s116
      %s138 = sphi 0, %s140
      %s141 = sphi 0, %s138
      %s142 = sphi 0, %s141
      %s158 = sphi 0, %s142
      %s164 = sphi 0, %s166
      %s167 = sphi 0, %s164
      %s168 = sphi 0, %s167
      %s184 = sphi 0, %s168
      %s188 = sphi 0, %s188
      %s190 = sphi 0, %s188
      %s191 = sphi 0, %s190
      %s205 = sphi 0, %s191
      %s209 = sphi 0, %s209
      %s211 = sphi 0, %s209
      %s212 = sphi 0, %s211
      %s226 = sphi 0, %s212
      %s230 = sphi 0, %s230
      %s232 = sphi 0, %s230
      %s233 = sphi 0, %s232
      %s247 = sphi 0, %s233
      %s253 = sphi 0, %s255
      %s256 = sphi 0, %s253
      %s257 = sphi 0, %s256
      %s273 = sphi 0, %s257
    $region4: #{model_forward.1} parent=1 // loop_header_branch
      %32 = sbr.rel (%p30) target = $region8
    $region5: #{model_forward.1} parent=1 // loop_body
      %s34 = ssub.s32 %s29, 1
      %s35 = ssub.s32 %s29, 2
      %s36 = sadd.s32 %s29, 1
      %s38 = sadd.s32 %s37, 1
      %p41 = scmp.eq.s32.totalorder %s29, 3
      %p42 = scmp.ne.s32.totalorder %s37, %s39
      %p43 = scmp.eq.s32.totalorder %s29, 0
      %p44 = por %p42, %p43
      %p45 = scmp.ne.s32.totalorder %s37, %s39
      %p46 = scmp.eq.s32.totalorder %s34, 3
      %p47 = por %p45, %p46
      %p48 = scmp.ne.s32.totalorder %s39, %s40
      %p49 = scmp.eq.s32.totalorder %s34, 0
      %p50 = por %p48, %p49
      %p51 = scmp.ne.s32.totalorder %s39, %s40
      %p52 = scmp.eq.s32.totalorder %s35, 3
      %p53 = por %p51, %p52
      %p55 = scmp.ne.s32.totalorder %s40, %s54
      %p56 = scmp.eq.s32.totalorder %s35, 0
      %p57 = por %p55, %p56
      %s58 = ssub.s32 %s29, %s36
      %p59 = scmp.eq.s32.totalorder %s58, 0
      %s61 = sadd.s32 %s60, 1
      %s62 = scalar_select %p59, %s60, %s61
      %p65 = pneg %p59
      %p66 = scmp.eq.s32.totalorder %s29, 3
      %p67 = por %p65, %p66
      %p68 = scmp.ne.s32.totalorder %s60, %s63
      %p69 = scmp.eq.s32.totalorder %s29, 0
      %p70 = por %p68, %p69
      %p71 = scmp.ne.s32.totalorder %s60, %s63
      %p72 = scmp.eq.s32.totalorder %s34, 3
      %p73 = por %p71, %p72
      %p74 = scmp.ne.s32.totalorder %s63, %s64
      %p75 = scmp.eq.s32.totalorder %s34, 0
      %p76 = por %p74, %p75
      %p77 = scmp.ne.s32.totalorder %s63, %s64
      %p78 = scmp.eq.s32.totalorder %s35, 3
      %p79 = por %p77, %p78
      %p81 = scmp.ne.s32.totalorder %s64, %s80
      %p82 = scmp.eq.s32.totalorder %s35, 0
      %p83 = por %p81, %p82
      %s84 = ssub.s32 %s29, %s36
      %p85 = scmp.eq.s32.totalorder %s84, 0
      %s87 = sadd.s32 %s86, 1
      %s88 = scalar_select %p85, %s86, %s87
      %p91 = pneg %p85
      %p92 = scmp.eq.s32.totalorder %s29, 3
      %p93 = por %p91, %p92
      %p94 = scmp.ne.s32.totalorder %s86, %s89
      %p95 = scmp.eq.s32.totalorder %s29, 0
      %p96 = por %p94, %p95
      %p97 = scmp.ne.s32.totalorder %s86, %s89
      %p98 = scmp.eq.s32.totalorder %s34, 3
      %p99 = por %p97, %p98
      %p100 = scmp.ne.s32.totalorder %s89, %s90
      %p101 = scmp.eq.s32.totalorder %s34, 0
      %p102 = por %p100, %p101
      %p103 = scmp.ne.s32.totalorder %s89, %s90
      %p104 = scmp.eq.s32.totalorder %s35, 3
      %p105 = por %p103, %p104
      %p107 = scmp.ne.s32.totalorder %s90, %s106
      %p108 = scmp.eq.s32.totalorder %s35, 0
      %p109 = por %p107, %p108
      %s110 = ssub.s32 %s29, %s36
      %p111 = scmp.eq.s32.totalorder %s110, 0
      %s113 = sadd.s32 %s112, 1
      %s114 = scalar_select %p111, %s112, %s113
      %p117 = pneg %p111
      %p118 = scmp.eq.s32.totalorder %s29, 3
      %p119 = por %p117, %p118
      %p120 = scmp.ne.s32.totalorder %s112, %s115
      %p121 = scmp.eq.s32.totalorder %s29, 0
      %p122 = por %p120, %p121
      %p123 = scmp.ne.s32.totalorder %s112, %s115
      %p124 = scmp.eq.s32.totalorder %s34, 3
      %p125 = por %p123, %p124
      %p126 = scmp.ne.s32.totalorder %s115, %s116
      %p127 = scmp.eq.s32.totalorder %s34, 0
      %p128 = por %p126, %p127
      %p129 = scmp.ne.s32.totalorder %s115, %s116
      %p130 = scmp.eq.s32.totalorder %s35, 3
      %p131 = por %p129, %p130
      %p133 = scmp.ne.s32.totalorder %s116, %s132
      %p134 = scmp.eq.s32.totalorder %s35, 0
      %p135 = por %p133, %p134
      %s136 = ssub.s32 %s29, %s36
      %p137 = scmp.eq.s32.totalorder %s136, 0
      %s139 = sadd.s32 %s138, 1
      %s140 = scalar_select %p137, %s138, %s139
      %p143 = pneg %p137
      %p144 = scmp.eq.s32.totalorder %s29, 3
      %p145 = por %p143, %p144
      %p146 = scmp.ne.s32.totalorder %s138, %s141
      %p147 = scmp.eq.s32.totalorder %s29, 0
      %p148 = por %p146, %p147
      %p149 = scmp.ne.s32.totalorder %s138, %s141
      %p150 = scmp.eq.s32.totalorder %s34, 3
      %p151 = por %p149, %p150
      %p152 = scmp.ne.s32.totalorder %s141, %s142
      %p153 = scmp.eq.s32.totalorder %s34, 0
      %p154 = por %p152, %p153
      %p155 = scmp.ne.s32.totalorder %s141, %s142
      %p156 = scmp.eq.s32.totalorder %s35, 3
      %p157 = por %p155, %p156
      %p159 = scmp.ne.s32.totalorder %s142, %s158
      %p160 = scmp.eq.s32.totalorder %s35, 0
      %p161 = por %p159, %p160
      %s162 = ssub.s32 %s29, %s36
      %p163 = scmp.eq.s32.totalorder %s162, 0
      %s165 = sadd.s32 %s164, 1
      %s166 = scalar_select %p163, %s164, %s165
      %p169 = pneg %p163
      %p170 = scmp.eq.s32.totalorder %s29, 3
      %p171 = por %p169, %p170
      %p172 = scmp.ne.s32.totalorder %s164, %s167
      %p173 = scmp.eq.s32.totalorder %s29, 0
      %p174 = por %p172, %p173
      %p175 = scmp.ne.s32.totalorder %s164, %s167
      %p176 = scmp.eq.s32.totalorder %s34, 3
      %p177 = por %p175, %p176
      %p178 = scmp.ne.s32.totalorder %s167, %s168
      %p179 = scmp.eq.s32.totalorder %s34, 0
      %p180 = por %p178, %p179
      %p181 = scmp.ne.s32.totalorder %s167, %s168
      %p182 = scmp.eq.s32.totalorder %s35, 3
      %p183 = por %p181, %p182
      %p185 = scmp.ne.s32.totalorder %s168, %s184
      %p186 = scmp.eq.s32.totalorder %s35, 0
      %p187 = por %p185, %p186
      %s189 = sadd.s32 %s188, 1
      %p192 = scmp.eq.s32.totalorder %s29, 3
      %p193 = scmp.ne.s32.totalorder %s188, %s190
      %p194 = scmp.eq.s32.totalorder %s29, 0
      %p195 = por %p193, %p194
      %p196 = scmp.ne.s32.totalorder %s188, %s190
      %p197 = scmp.eq.s32.totalorder %s34, 3
      %p198 = por %p196, %p197
      %p199 = scmp.ne.s32.totalorder %s190, %s191
      %p200 = scmp.eq.s32.totalorder %s34, 0
      %p201 = por %p199, %p200
      %p202 = scmp.ne.s32.totalorder %s190, %s191
      %p203 = scmp.eq.s32.totalorder %s35, 3
      %p204 = por %p202, %p203
      %p206 = scmp.ne.s32.totalorder %s191, %s205
      %p207 = scmp.eq.s32.totalorder %s35, 0
      %p208 = por %p206, %p207
      %s210 = sadd.s32 %s209, 1
      %p213 = scmp.eq.s32.totalorder %s29, 3
      %p214 = scmp.ne.s32.totalorder %s209, %s211
      %p215 = scmp.eq.s32.totalorder %s29, 0
      %p216 = por %p214, %p215
      %p217 = scmp.ne.s32.totalorder %s209, %s211
      %p218 = scmp.eq.s32.totalorder %s34, 3
      %p219 = por %p217, %p218
      %p220 = scmp.ne.s32.totalorder %s211, %s212
      %p221 = scmp.eq.s32.totalorder %s34, 0
      %p222 = por %p220, %p221
      %p223 = scmp.ne.s32.totalorder %s211, %s212
      %p224 = scmp.eq.s32.totalorder %s35, 3
      %p225 = por %p223, %p224
      %p227 = scmp.ne.s32.totalorder %s212, %s226
      %p228 = scmp.eq.s32.totalorder %s35, 0
      %p229 = por %p227, %p228
      %s231 = sadd.s32 %s230, 1
      %p234 = scmp.eq.s32.totalorder %s29, 3
      %p235 = scmp.ne.s32.totalorder %s230, %s232
      %p236 = scmp.eq.s32.totalorder %s29, 0
      %p237 = por %p235, %p236
      %p238 = scmp.ne.s32.totalorder %s230, %s232
      %p239 = scmp.eq.s32.totalorder %s34, 3
      %p240 = por %p238, %p239
      %p241 = scmp.ne.s32.totalorder %s232, %s233
      %p242 = scmp.eq.s32.totalorder %s34, 0
      %p243 = por %p241, %p242
      %p244 = scmp.ne.s32.totalorder %s232, %s233
      %p245 = scmp.eq.s32.totalorder %s35, 3
      %p246 = por %p244, %p245
      %p248 = scmp.ne.s32.totalorder %s233, %s247
      %p249 = scmp.eq.s32.totalorder %s35, 0
      %p250 = por %p248, %p249
      %s251 = ssub.s32 %s29, %s36
      %p252 = scmp.eq.s32.totalorder %s251, 0
      %s254 = sadd.s32 %s253, 1
      %s255 = scalar_select %p252, %s253, %s254
      %p258 = pneg %p252
      %p259 = scmp.eq.s32.totalorder %s29, 3
      %p260 = por %p258, %p259
      %p261 = scmp.ne.s32.totalorder %s253, %s256
      %p262 = scmp.eq.s32.totalorder %s29, 0
      %p263 = por %p261, %p262
      %p264 = scmp.ne.s32.totalorder %s253, %s256
      %p265 = scmp.eq.s32.totalorder %s34, 3
      %p266 = por %p264, %p265
      %p267 = scmp.ne.s32.totalorder %s256, %s257
      %p268 = scmp.eq.s32.totalorder %s34, 0
      %p269 = por %p267, %p268
      %p270 = scmp.ne.s32.totalorder %s256, %s257
      %p271 = scmp.eq.s32.totalorder %s35, 3
      %p272 = por %p270, %p271
      %p274 = scmp.ne.s32.totalorder %s257, %s273
      %p275 = scmp.eq.s32.totalorder %s35, 0
      %p276 = por %p274, %p275
      %p277 = scmp.le.s32.totalorder 1, %s29
      %p278 = scmp.lt.s32.totalorder %s29, 5
      %p279 = pnand %p277, %p278
      %p280 = pneg %p279
      // Predicated region
      $region9: #{model_forward.1} parent=5 // pred_check
        _
      $region10: #{model_forward.1} parent=5 // pred_check_branch
        %282 = sbr.rel (%p279) target = $region12
      $region11: #{model_forward.1} parent=5 // pred_region
        %s283 = ssub.s32 %s29, 1
        // Predicated region
        $region13: #{model_forward.1} parent=11 // pred_check
          %p284 = pneg %p50
        $region14: #{model_forward.1} parent=11 // pred_check_branch
          %286 = sbr.rel (%p284) target = $region16
        $region15: #{model_forward.1} parent=11 // pred_region
          _
        $region16: #{model_forward.1} parent=11 // pred_fallthru
          _
        // Predicated region
        $region17: #{model_forward.1} parent=11 // pred_check
          %p287 = pneg %p201
        $region18: #{model_forward.1} parent=11 // pred_check_branch
          %289 = sbr.rel (%p287) target = $region20
        $region19: #{model_forward.1} parent=11 // pred_region
          %s291 = ssub.s32 2048, 2048
          %292 = vsyncadd [#allocation11], %s291
          %s293 = sshll.u32 [#allocation12], 4
          %s294 = int_to_ptr.vmem [resolvable:$true] %s293
          %299 = dma.hbm_to_vmem [thread:$0]  %s6, 2048, %s294, [#allocation11], 64, 64, 4
        $region20: #{model_forward.1} parent=11 // pred_fallthru
          _
        // Predicated region
        $region21: #{model_forward.1} parent=11 // pred_check
          %p300 = pneg %p222
        $region22: #{model_forward.1} parent=11 // pred_check_branch
          %302 = sbr.rel (%p300) target = $region24
        $region23: #{model_forward.1} parent=11 // pred_region
          %s304 = ssub.s32 16, 16
          %305 = vsyncadd [#allocation14], %s304
          %s307 = sshll.u32 [#allocation13], 4
          %s308 = int_to_ptr.vmem [resolvable:$true] %s307
          %310 = dma.hbm_to_vmem [thread:$0]  %s7, 16, %s308, [#allocation14]
        $region24: #{model_forward.1} parent=11 // pred_fallthru
          _
      $region12: #{model_forward.1} parent=5 // pred_fallthru
        _
      %p311 = scmp.lt.s32.totalorder %s29, 4
      // Predicated region
      $region25: #{model_forward.1} parent=5 // pred_check
        %p312 = pneg %p311
      $region26: #{model_forward.1} parent=5 // pred_check_branch
        %314 = sbr.rel (%p312) target = $region28
      $region27: #{model_forward.1} parent=5 // pred_region
        // Predicated region
        $region29: #{model_forward.1} parent=27 // pred_check
          %p315 = pneg %p70
        $region30: #{model_forward.1} parent=27 // pred_check_branch
          %317 = sbr.rel (%p315) target = $region32
        $region31: #{model_forward.1} parent=27 // pred_region
          %p318 = scmp.lt.s32.totalorder %s29, 3
          %s319 = scalar_select %p318, %s29, 3
          %s320 = smul.addr %s319, 2
          %s321 = smul.addr %s320, 8
          %s322 = scalar_lea.vmem %s1, %s321
        $region32: #{model_forward.1} parent=27 // pred_fallthru
          _
        // Predicated region
        $region33: #{model_forward.1} parent=27 // pred_check
          %p323 = pneg %p96
        $region34: #{model_forward.1} parent=27 // pred_check_branch
          %325 = sbr.rel (%p323) target = $region36
        $region35: #{model_forward.1} parent=27 // pred_region
          %s326 = sand.u32 %s86, 1
          %s327 = scalar_lea.sflag [#allocation5], %s326
          %s328 = sand.u32 %s86, 1
          %s329 = smul.addr %s328, 768
          %s330 = scalar_lea.vmem [#allocation4], %s329
          %s332 = ssub.s32 12288, 12288
          %333 = vsyncadd %s327, %s332
          %s334 = smul.addr %s29, 192
          %s335 = smul.addr %s334, 64
          %s336 = scalar_lea.hbm %s2, %s335
          %s337 = sshll.u32 %s330, 4
          %s338 = int_to_ptr.vmem [resolvable:$true] %s337
          %343 = dma.hbm_to_vmem [thread:$0]  %s336, 12288, %s338, %s327, 384, 384, 24
        $region36: #{model_forward.1} parent=27 // pred_fallthru
          _
        // Predicated region
        $region37: #{model_forward.1} parent=27 // pred_check
          %p344 = pneg %p122
        $region38: #{model_forward.1} parent=27 // pred_check_branch
          %346 = sbr.rel (%p344) target = $region40
        $region39: #{model_forward.1} parent=27 // pred_region
          %s347 = sand.u32 %s29, 1
          %s348 = scalar_lea.sflag [#allocation8], %s347
          %s349 = sand.u32 %s112, 1
          %s350 = smul.addr %s349, 768
          %s351 = scalar_lea.vmem [#allocation7], %s350
          %s353 = ssub.s32 12288, 12288
          %354 = vsyncadd %s348, %s353
          %s355 = smul.addr %s29, 192
          %s356 = smul.addr %s355, 64
          %s357 = scalar_lea.hbm %s3, %s356
          %s358 = sshll.u32 %s351, 4
          %s359 = int_to_ptr.vmem [resolvable:$true] %s358
          %364 = dma.hbm_to_vmem [thread:$0]  %s357, 12288, %s359, %s348, 384, 384, 24
        $region40: #{model_forward.1} parent=27 // pred_fallthru
          _
        // Predicated region
        $region41: #{model_forward.1} parent=27 // pred_check
          %p365 = pneg %p148
        $region42: #{model_forward.1} parent=27 // pred_check_branch
          %367 = sbr.rel (%p365) target = $region44
        $region43: #{model_forward.1} parent=27 // pred_region
          %s368 = sand.u32 %s29, 1
          %s369 = scalar_lea.sflag [#allocation8], %s368
          %s370 = sand.u32 %s138, 1
          %s371 = smul.addr %s370, 6
          %s372 = scalar_lea.vmem [#allocation9], %s371
          %s374 = ssub.s32 96, 96
          %375 = vsyncadd %s369, %s374
          %s376 = smul.addr %s29, 6
          %s377 = smul.addr %s376, 16
          %s378 = scalar_lea.hbm %s4, %s377
          %s380 = sshll.u32 %s372, 4
          %s381 = int_to_ptr.vmem [resolvable:$true] %s380
          %383 = dma.hbm_to_vmem [thread:$0]  %s378, 96, %s381, %s369
        $region44: #{model_forward.1} parent=27 // pred_fallthru
          _
        // Predicated region
        $region45: #{model_forward.1} parent=27 // pred_check
          %p384 = pneg %p174
        $region46: #{model_forward.1} parent=27 // pred_check_branch
          %386 = sbr.rel (%p384) target = $region48
        $region47: #{model_forward.1} parent=27 // pred_region
          %s387 = sand.u32 %s29, 1
          %s388 = scalar_lea.sflag [#allocation11], %s387
          %s389 = sand.u32 %s164, 1
          %s390 = smul.addr %s389, 2
          %s391 = scalar_lea.vmem [#allocation10], %s390
          %s393 = ssub.s32 32, 32
          %394 = vsyncadd %s388, %s393
          %s395 = smul.addr %s29, 2
          %s396 = smul.addr %s395, 16
          %s397 = scalar_lea.hbm %s5, %s396
          %s399 = sshll.u32 %s391, 4
          %s400 = int_to_ptr.vmem [resolvable:$true] %s399
          %402 = dma.hbm_to_vmem [thread:$0]  %s397, 32, %s400, %s388
        $region48: #{model_forward.1} parent=27 // pred_fallthru
          _
      $region28: #{model_forward.1} parent=5 // pred_fallthru
        _
      %p403 = scmp.le.s32.totalorder 1, %s29
      %p404 = scmp.lt.s32.totalorder %s29, 5
      %p405 = pnand %p403, %p404
      %p406 = pneg %p405
      // Predicated region
      $region49: #{model_forward.1} parent=5 // pred_check
        _
      $region50: #{model_forward.1} parent=5 // pred_check_branch
        %408 = sbr.rel (%p405) target = $region52
      $region51: #{model_forward.1} parent=5 // pred_region
        %s409 = ssub.s32 %s29, 1
        %s410 = sand.u32 %s89, 1
        %s411 = scalar_lea.sflag [#allocation5], %s410
        %s412 = sand.u32 %s89, 1
        %s413 = smul.addr %s412, 768
        %s414 = scalar_lea.vmem [#allocation4], %s413
        // Predicated region
        $region53: #{model_forward.1} parent=51 // pred_check
          %p415 = pneg %p102
        $region54: #{model_forward.1} parent=51 // pred_check_branch
          %417 = sbr.rel (%p415) target = $region56
        $region55: #{model_forward.1} parent=51 // pred_region
          %418 = dma.done %s411, 12288
        $region56: #{model_forward.1} parent=51 // pred_fallthru
          _
        %s419 = sand.u32 %s34, 1
        %s420 = scalar_lea.sflag [#allocation8], %s419
        %s421 = sand.u32 %s115, 1
        %s422 = smul.addr %s421, 768
        %s423 = scalar_lea.vmem [#allocation7], %s422
        // Predicated region
        $region57: #{model_forward.1} parent=51 // pred_check
          %p424 = pneg %p128
        $region58: #{model_forward.1} parent=51 // pred_check_branch
          %426 = sbr.rel (%p424) target = $region60
        $region59: #{model_forward.1} parent=51 // pred_region
          %427 = dma.done %s420, 12288
        $region60: #{model_forward.1} parent=51 // pred_fallthru
          _
        %s428 = sand.u32 %s34, 1
        %s429 = scalar_lea.sflag [#allocation8], %s428
        %s430 = sand.u32 %s141, 1
        %s431 = smul.addr %s430, 6
        %s432 = scalar_lea.vmem [#allocation9], %s431
        // Predicated region
        $region61: #{model_forward.1} parent=51 // pred_check
          %p433 = pneg %p154
        $region62: #{model_forward.1} parent=51 // pred_check_branch
          %435 = sbr.rel (%p433) target = $region64
        $region63: #{model_forward.1} parent=51 // pred_region
          %436 = dma.done %s429, 96
        $region64: #{model_forward.1} parent=51 // pred_fallthru
          _
        %s437 = sand.u32 %s34, 1
        %s438 = scalar_lea.sflag [#allocation11], %s437
        %s439 = sand.u32 %s167, 1
        %s440 = smul.addr %s439, 2
        %s441 = scalar_lea.vmem [#allocation10], %s440
        // Predicated region
        $region65: #{model_forward.1} parent=51 // pred_check
          %p442 = pneg %p180
        $region66: #{model_forward.1} parent=51 // pred_check_branch
          %444 = sbr.rel (%p442) target = $region68
        $region67: #{model_forward.1} parent=51 // pred_region
          %445 = dma.done %s438, 32
        $region68: #{model_forward.1} parent=51 // pred_fallthru
          _
        // Predicated region
        $region69: #{model_forward.1} parent=51 // pred_check
          %p446 = pneg %p201
        $region70: #{model_forward.1} parent=51 // pred_check_branch
          %448 = sbr.rel (%p446) target = $region72
        $region71: #{model_forward.1} parent=51 // pred_region
          %449 = dma.done [#allocation11], 2048
        $region72: #{model_forward.1} parent=51 // pred_fallthru
          _
        // Predicated region
        $region73: #{model_forward.1} parent=51 // pred_check
          %p450 = pneg %p222
        $region74: #{model_forward.1} parent=51 // pred_check_branch
          %452 = sbr.rel (%p450) target = $region76
        $region75: #{model_forward.1} parent=51 // pred_region
          %453 = dma.done [#allocation14], 16
        $region76: #{model_forward.1} parent=51 // pred_fallthru
          _
        %p454 = pneg %p50
        %p455 = pneg %p47
        %p456 = scmp.lt.s32.totalorder %s34, 3
        %s457 = scalar_select %p456, %s34, 3
        %s458 = smul.addr %s457, 2
        %s459 = smul.addr %s458, 8
        %s460 = scalar_lea.vmem %s1, %s459
        %p461 = pneg %p76
        %p462 = pneg %p73
        %s463 = sand.u32 %s89, 1
        %s464 = scalar_lea.sflag [#allocation5], %s463
        %s465 = sand.u32 %s89, 1
        %s466 = smul.addr %s465, 768
        %s467 = scalar_lea.vmem [#allocation4], %s466
        %p468 = pneg %p102
        %p469 = pneg %p99
        %s470 = sand.u32 %s34, 1
        %s471 = scalar_lea.sflag [#allocation8], %s470
        %s472 = sand.u32 %s115, 1
        %s473 = smul.addr %s472, 768
        %s474 = scalar_lea.vmem [#allocation7], %s473
        %p475 = pneg %p128
        %p476 = pneg %p125
        %s477 = sand.u32 %s34, 1
        %s478 = scalar_lea.sflag [#allocation8], %s477
        %s479 = sand.u32 %s141, 1
        %s480 = smul.addr %s479, 6
        %s481 = scalar_lea.vmem [#allocation9], %s480
        %p482 = pneg %p154
        %p483 = pneg %p151
        %s484 = sand.u32 %s34, 1
        %s485 = scalar_lea.sflag [#allocation11], %s484
        %s486 = sand.u32 %s167, 1
        %s487 = smul.addr %s486, 2
        %s488 = scalar_lea.vmem [#allocation10], %s487
        %p489 = pneg %p180
        %p490 = pneg %p177
        %p491 = pneg %p201
        %p492 = pneg %p198
        %p493 = pneg %p222
        %p494 = pneg %p219
        %p495 = pneg %p243
        %p496 = pneg %p240
        %p497 = pneg %p269
        %p498 = pneg %p266
        %s499 = sand.u32 %s256, 1
        %s500 = scalar_lea.sflag [#allocation6], %s499
        %s501 = sand.u32 %s256, 1
        %s502 = smul.addr %s501, 4
        %s503 = scalar_lea.vmem [#allocation15], %s502
        %p504 = scmp.lt.s32.totalorder %s34, 3
        %s505 = scalar_select %p504, %s34, 3
        %s506 = smul.addr %s505, 2
        %s507 = smul.addr %s506, 8
        %s508 = scalar_lea.vmem %s1, %s507
        %p510 = scmp.eq.s32.totalorder %s34, 0
        // Predicated region
        $region77: #{model_forward.1} parent=51 // pred_check
          %p511 = pneg %p510
        $region78: #{model_forward.1} parent=51 // pred_check_branch
          %513 = sbr.rel (%p511) target = $region80
        $region79: #{model_forward.1} parent=51 // pred_region
          %v514 = vld [vmem:[%s0] sm:$0xff]
          %v515 = vld [vmem:[%s0 + $0x8] sm:$0xff]
          %v516 = vld [vmem:[%s0 + $0x10] sm:$0xff]
          %v517 = vld [vmem:[%s0 + $0x18] sm:$0xff]
          %v518 = vld [vmem:[%s0 + $0x20] sm:$0xff]
          %v519 = vld [vmem:[%s0 + $0x28] sm:$0xff]
          %v520 = vld [vmem:[%s0 + $0x30] sm:$0xff]
          %v521 = vld [vmem:[%s0 + $0x38] sm:$0xff]
          %v522 = vld [vmem:[%s0 + $0x40] sm:$0xff]
          %v523 = vld [vmem:[%s0 + $0x48] sm:$0xff]
          %v524 = vld [vmem:[%s0 + $0x50] sm:$0xff]
          %v525 = vld [vmem:[%s0 + $0x58] sm:$0xff]
          %526 = vst [vmem:[#allocation2] sm:$0xff] %v514
          %527 = vst [vmem:[#allocation2 + $0x8] sm:$0xff] %v515
          %528 = vst [vmem:[#allocation2 + $0x10] sm:$0xff] %v516
          %529 = vst [vmem:[#allocation2 + $0x18] sm:$0xff] %v517
          %530 = vst [vmem:[#allocation2 + $0x20] sm:$0xff] %v518
          %531 = vst [vmem:[#allocation2 + $0x28] sm:$0xff] %v519
          %532 = vst [vmem:[#allocation2 + $0x30] sm:$0xff] %v520
          %533 = vst [vmem:[#allocation2 + $0x38] sm:$0xff] %v521
          %534 = vst [vmem:[#allocation2 + $0x40] sm:$0xff] %v522
          %535 = vst [vmem:[#allocation2 + $0x48] sm:$0xff] %v523
          %536 = vst [vmem:[#allocation2 + $0x50] sm:$0xff] %v524
          %537 = vst [vmem:[#allocation2 + $0x58] sm:$0xff] %v525
        $region80: #{model_forward.1} parent=51 // pred_fallthru
          _
        %v538 = vld [vmem:[#allocation2] sm:$0xff]
        %v539 = vld [vmem:[#allocation2 + $0x8] sm:$0xff]
        %v540 = vld [vmem:[#allocation2 + $0x10] sm:$0xff]
        %v541 = vld [vmem:[#allocation2 + $0x18] sm:$0xff]
        %v542 = vld [vmem:[#allocation2 + $0x20] sm:$0xff]
        %v543 = vld [vmem:[#allocation2 + $0x28] sm:$0xff]
        %v544 = vld [vmem:[#allocation2 + $0x30] sm:$0xff]
        %v545 = vld [vmem:[#allocation2 + $0x38] sm:$0xff]
        %v546 = vld [vmem:[#allocation2 + $0x40] sm:$0xff]
        %v547 = vld [vmem:[#allocation2 + $0x48] sm:$0xff]
        %v548 = vld [vmem:[#allocation2 + $0x50] sm:$0xff]
        %v549 = vld [vmem:[#allocation2 + $0x58] sm:$0xff]
        %v550 = vpack.c.bf16 %v540, %v538
        %v551 = vpack.c.bf16 %v541, %v539
        %v552 = vpack.c.bf16 %v544, %v542
        %v553 = vpack.c.bf16 %v545, %v543
        %v554 = vpack.c.bf16 %v548, %v546
        %v555 = vpack.c.bf16 %v549, %v547
        %v556 = vld [vmem:[%s414] sm:$0xff]
        %v557 = vld [vmem:[%s414 + $0x8] sm:$0xff]
        %v558 = vld [vmem:[%s414 + $0x10] sm:$0xff]
        %v559 = vld [vmem:[%s414 + $0x18] sm:$0xff]
        %v560 = vld [vmem:[%s414 + $0x20] sm:$0xff]
        %v561 = vld [vmem:[%s414 + $0x28] sm:$0xff]
        %v562 = vld [vmem:[%s414 + $0x30] sm:$0xff]
        %v563 = vld [vmem:[%s414 + $0x38] sm:$0xff]
        %v564 = vld [vmem:[%s414 + $0x40] sm:$0xff]
        %v565 = vld [vmem:[%s414 + $0x48] sm:$0xff]
        %v566 = vld [vmem:[%s414 + $0x50] sm:$0xff]
        %v567 = vld [vmem:[%s414 + $0x58] sm:$0xff]
        %v568 = vld [vmem:[%s414 + $0x60] sm:$0xff]
        %v569 = vld [vmem:[%s414 + $0x68] sm:$0xff]
        %v570 = vld [vmem:[%s414 + $0x70] sm:$0xff]
        %v571 = vld [vmem:[%s414 + $0x78] sm:$0xff]
        %v572 = vld [vmem:[%s414 + $0x80] sm:$0xff]
        %v573 = vld [vmem:[%s414 + $0x88] sm:$0xff]
        %v574 = vld [vmem:[%s414 + $0x90] sm:$0xff]
        %v575 = vld [vmem:[%s414 + $0x98] sm:$0xff]
        %v576 = vld [vmem:[%s414 + $0xa0] sm:$0xff]
        %v577 = vld [vmem:[%s414 + $0xa8] sm:$0xff]
        %v578 = vld [vmem:[%s414 + $0xb0] sm:$0xff]
        %v579 = vld [vmem:[%s414 + $0xb8] sm:$0xff]
        %v580 = vld [vmem:[%s414 + $0xc0] sm:$0xff]
        %v581 = vld [vmem:[%s414 + $0xc8] sm:$0xff]
        %v582 = vld [vmem:[%s414 + $0xd0] sm:$0xff]
        %v583 = vld [vmem:[%s414 + $0xd8] sm:$0xff]
        %v584 = vld [vmem:[%s414 + $0xe0] sm:$0xff]
        %v585 = vld [vmem:[%s414 + $0xe8] sm:$0xff]
        %v586 = vld [vmem:[%s414 + $0xf0] sm:$0xff]
        %v587 = vld [vmem:[%s414 + $0xf8] sm:$0xff]
        %v588 = vld [vmem:[%s414 + $0x100] sm:$0xff]
        %v589 = vld [vmem:[%s414 + $0x108] sm:$0xff]
        %v590 = vld [vmem:[%s414 + $0x110] sm:$0xff]
        %v591 = vld [vmem:[%s414 + $0x118] sm:$0xff]
        %v592 = vld [vmem:[%s414 + $0x120] sm:$0xff]
        %v593 = vld [vmem:[%s414 + $0x128] sm:$0xff]
        %v594 = vld [vmem:[%s414 + $0x130] sm:$0xff]
        %v595 = vld [vmem:[%s414 + $0x138] sm:$0xff]
        %v596 = vld [vmem:[%s414 + $0x140] sm:$0xff]
        %v597 = vld [vmem:[%s414 + $0x148] sm:$0xff]
        %v598 = vld [vmem:[%s414 + $0x150] sm:$0xff]
        %v599 = vld [vmem:[%s414 + $0x158] sm:$0xff]
        %v600 = vld [vmem:[%s414 + $0x160] sm:$0xff]
        %v601 = vld [vmem:[%s414 + $0x168] sm:$0xff]
        %v602 = vld [vmem:[%s414 + $0x170] sm:$0xff]
        %v603 = vld [vmem:[%s414 + $0x178] sm:$0xff]
        %v604 = vld [vmem:[%s414 + $0x180] sm:$0xff]
        %v605 = vld [vmem:[%s414 + $0x188] sm:$0xff]
        %v606 = vld [vmem:[%s414 + $0x190] sm:$0xff]
        %v607 = vld [vmem:[%s414 + $0x198] sm:$0xff]
        %v608 = vld [vmem:[%s414 + $0x1a0] sm:$0xff]
        %v609 = vld [vmem:[%s414 + $0x1a8] sm:$0xff]
        %v610 = vld [vmem:[%s414 + $0x1b0] sm:$0xff]
        %v611 = vld [vmem:[%s414 + $0x1b8] sm:$0xff]
        %v612 = vld [vmem:[%s414 + $0x1c0] sm:$0xff]
        %v613 = vld [vmem:[%s414 + $0x1c8] sm:$0xff]
        %v614 = vld [vmem:[%s414 + $0x1d0] sm:$0xff]
        %v615 = vld [vmem:[%s414 + $0x1d8] sm:$0xff]
        %v616 = vld [vmem:[%s414 + $0x1e0] sm:$0xff]
        %v617 = vld [vmem:[%s414 + $0x1e8] sm:$0xff]
        %v618 = vld [vmem:[%s414 + $0x1f0] sm:$0xff]
        %v619 = vld [vmem:[%s414 + $0x1f8] sm:$0xff]
        %v620 = vld [vmem:[%s414 + $0x200] sm:$0xff]
        %v621 = vld [vmem:[%s414 + $0x208] sm:$0xff]
        %v622 = vld [vmem:[%s414 + $0x210] sm:$0xff]
        %v623 = vld [vmem:[%s414 + $0x218] sm:$0xff]
        %v624 = vld [vmem:[%s414 + $0x220] sm:$0xff]
        %v625 = vld [vmem:[%s414 + $0x228] sm:$0xff]
        %v626 = vld [vmem:[%s414 + $0x230] sm:$0xff]
        %v627 = vld [vmem:[%s414 + $0x238] sm:$0xff]
        %v628 = vld [vmem:[%s414 + $0x240] sm:$0xff]
        %v629 = vld [vmem:[%s414 + $0x248] sm:$0xff]
        %v630 = vld [vmem:[%s414 + $0x250] sm:$0xff]
        %v631 = vld [vmem:[%s414 + $0x258] sm:$0xff]
        %v632 = vld [vmem:[%s414 + $0x260] sm:$0xff]
        %v633 = vld [vmem:[%s414 + $0x268] sm:$0xff]
        %v634 = vld [vmem:[%s414 + $0x270] sm:$0xff]
        %v635 = vld [vmem:[%s414 + $0x278] sm:$0xff]
        %v636 = vld [vmem:[%s414 + $0x280] sm:$0xff]
        %v637 = vld [vmem:[%s414 + $0x288] sm:$0xff]
        %v638 = vld [vmem:[%s414 + $0x290] sm:$0xff]
        %v639 = vld [vmem:[%s414 + $0x298] sm:$0xff]
        %v640 = vld [vmem:[%s414 + $0x2a0] sm:$0xff]
        %v641 = vld [vmem:[%s414 + $0x2a8] sm:$0xff]
        %v642 = vld [vmem:[%s414 + $0x2b0] sm:$0xff]
        %v643 = vld [vmem:[%s414 + $0x2b8] sm:$0xff]
        %v644 = vld [vmem:[%s414 + $0x2c0] sm:$0xff]
        %v645 = vld [vmem:[%s414 + $0x2c8] sm:$0xff]
        %v646 = vld [vmem:[%s414 + $0x2d0] sm:$0xff]
        %v647 = vld [vmem:[%s414 + $0x2d8] sm:$0xff]
        %v648 = vld [vmem:[%s414 + $0x2e0] sm:$0xff]
        %v649 = vld [vmem:[%s414 + $0x2e8] sm:$0xff]
        %v650 = vld [vmem:[%s414 + $0x2f0] sm:$0xff]
        %v651 = vld [vmem:[%s414 + $0x2f8] sm:$0xff]
        %v652 = vld [vmem:[%s432] sm:$0x3f]
        %v654 = vlaneseq
        %v655 = vshrl.u32 %v654, 7
        %v656 = vsub.s32 0, %v655
        %v657 = vrot.slane %v652, %v656
        %v658 = vlaneseq
        %v659 = vshrl.u32 %v658, 7
        %v660 = vsub.s32 1, %v659
        %v661 = vrot.slane %v652, %v660
        %v662 = vlaneseq
        %v663 = vshrl.u32 %v662, 7
        %v664 = vsub.s32 2, %v663
        %v665 = vrot.slane %v652, %v664
        %v666 = vlaneseq
        %v667 = vshrl.u32 %v666, 7
        %v668 = vsub.s32 3, %v667
        %v669 = vrot.slane %v652, %v668
        %v670 = vlaneseq
        %v671 = vshrl.u32 %v670, 7
        %v672 = vsub.s32 4, %v671
        %v673 = vrot.slane %v652, %v672
        %v674 = vlaneseq
        %v675 = vshrl.u32 %v674, 7
        %v676 = vsub.s32 5, %v675
        %v677 = vrot.slane %v652, %v676
        %v780 = vunpack.c.l.b16 %v556
        %v781 = vunpack.c.h.b16 %v556
        %v782 = vunpack.c.l.b16 %v557
        %v783 = vunpack.c.h.b16 %v557
        %v784 = vunpack.c.l.b16 %v558
        %v785 = vunpack.c.h.b16 %v558
        %v786 = vunpack.c.l.b16 %v559
        %v787 = vunpack.c.h.b16 %v559
        %v788 = vunpack.c.l.b16 %v560
        %v789 = vunpack.c.h.b16 %v560
        %v790 = vunpack.c.l.b16 %v561
        %v791 = vunpack.c.h.b16 %v561
        %v792 = vunpack.c.l.b16 %v562
        %v793 = vunpack.c.h.b16 %v562
        %v794 = vunpack.c.l.b16 %v563
        %v795 = vunpack.c.h.b16 %v563
        %v796 = vunpack.c.l.b16 %v564
        %v797 = vunpack.c.h.b16 %v564
        %v798 = vunpack.c.l.b16 %v565
        %v799 = vunpack.c.h.b16 %v565
        %v800 = vunpack.c.l.b16 %v566
        %v801 = vunpack.c.h.b16 %v566
        %v802 = vunpack.c.l.b16 %v567
        %v803 = vunpack.c.h.b16 %v567
        %v804 = vunpack.c.l.b16 %v568
        %v805 = vunpack.c.h.b16 %v568
        %v806 = vunpack.c.l.b16 %v569
        %v807 = vunpack.c.h.b16 %v569
        %v808 = vunpack.c.l.b16 %v570
        %v809 = vunpack.c.h.b16 %v570
        %v810 = vunpack.c.l.b16 %v571
        %v811 = vunpack.c.h.b16 %v571
        %v812 = vunpack.c.l.b16 %v572
        %v813 = vunpack.c.h.b16 %v572
        %v814 = vunpack.c.l.b16 %v573
        %v815 = vunpack.c.h.b16 %v573
        %v816 = vunpack.c.l.b16 %v574
        %v817 = vunpack.c.h.b16 %v574
        %v818 = vunpack.c.l.b16 %v575
        %v819 = vunpack.c.h.b16 %v575
        %v820 = vunpack.c.l.b16 %v576
        %v821 = vunpack.c.h.b16 %v576
        %v822 = vunpack.c.l.b16 %v577
        %v823 = vunpack.c.h.b16 %v577
        %v824 = vunpack.c.l.b16 %v578
        %v825 = vunpack.c.h.b16 %v578
        %v826 = vunpack.c.l.b16 %v579
        %v827 = vunpack.c.h.b16 %v579
        %v828 = vunpack.c.l.b16 %v580
        %v829 = vunpack.c.h.b16 %v580
        %v830 = vunpack.c.l.b16 %v581
        %v831 = vunpack.c.h.b16 %v581
        %v832 = vunpack.c.l.b16 %v582
        %v833 = vunpack.c.h.b16 %v582
        %v834 = vunpack.c.l.b16 %v583
        %v835 = vunpack.c.h.b16 %v583
        %v836 = vunpack.c.l.b16 %v584
        %v837 = vunpack.c.h.b16 %v584
        %v838 = vunpack.c.l.b16 %v585
        %v839 = vunpack.c.h.b16 %v585
        %v840 = vunpack.c.l.b16 %v586
        %v841 = vunpack.c.h.b16 %v586
        %v842 = vunpack.c.l.b16 %v587
        %v843 = vunpack.c.h.b16 %v587
        %v844 = vunpack.c.l.b16 %v588
        %v845 = vunpack.c.h.b16 %v588
        %v846 = vunpack.c.l.b16 %v589
        %v847 = vunpack.c.h.b16 %v589
        %v848 = vunpack.c.l.b16 %v590
        %v849 = vunpack.c.h.b16 %v590
        %v850 = vunpack.c.l.b16 %v591
        %v851 = vunpack.c.h.b16 %v591
        %v852 = vunpack.c.l.b16 %v592
        %v853 = vunpack.c.h.b16 %v592
        %v854 = vunpack.c.l.b16 %v593
        %v855 = vunpack.c.h.b16 %v593
        %v856 = vunpack.c.l.b16 %v594
        %v857 = vunpack.c.h.b16 %v594
        %v858 = vunpack.c.l.b16 %v595
        %v859 = vunpack.c.h.b16 %v595
        %v860 = vunpack.c.l.b16 %v596
        %v861 = vunpack.c.h.b16 %v596
        %v862 = vunpack.c.l.b16 %v597
        %v863 = vunpack.c.h.b16 %v597
        %v864 = vunpack.c.l.b16 %v598
        %v865 = vunpack.c.h.b16 %v598
        %v866 = vunpack.c.l.b16 %v599
        %v867 = vunpack.c.h.b16 %v599
        %v868 = vunpack.c.l.b16 %v600
        %v869 = vunpack.c.h.b16 %v600
        %v870 = vunpack.c.l.b16 %v601
        %v871 = vunpack.c.h.b16 %v601
        %v872 = vunpack.c.l.b16 %v602
        %v873 = vunpack.c.h.b16 %v602
        %v874 = vunpack.c.l.b16 %v603
        %v875 = vunpack.c.h.b16 %v603
        %v876 = vunpack.c.l.b16 %v604
        %v877 = vunpack.c.h.b16 %v604
        %v878 = vunpack.c.l.b16 %v605
        %v879 = vunpack.c.h.b16 %v605
        %v880 = vunpack.c.l.b16 %v606
        %v881 = vunpack.c.h.b16 %v606
        %v882 = vunpack.c.l.b16 %v607
        %v883 = vunpack.c.h.b16 %v607
        %v884 = vunpack.c.l.b16 %v608
        %v885 = vunpack.c.h.b16 %v608
        %v886 = vunpack.c.l.b16 %v609
        %v887 = vunpack.c.h.b16 %v609
        %v888 = vunpack.c.l.b16 %v610
        %v889 = vunpack.c.h.b16 %v610
        %v890 = vunpack.c.l.b16 %v611
        %v891 = vunpack.c.h.b16 %v611
        %v892 = vunpack.c.l.b16 %v612
        %v893 = vunpack.c.h.b16 %v612
        %v894 = vunpack.c.l.b16 %v613
        %v895 = vunpack.c.h.b16 %v613
        %v896 = vunpack.c.l.b16 %v614
        %v897 = vunpack.c.h.b16 %v614
        %v898 = vunpack.c.l.b16 %v615
        %v899 = vunpack.c.h.b16 %v615
        %v900 = vunpack.c.l.b16 %v616
        %v901 = vunpack.c.h.b16 %v616
        %v902 = vunpack.c.l.b16 %v617
        %v903 = vunpack.c.h.b16 %v617
        %v904 = vunpack.c.l.b16 %v618
        %v905 = vunpack.c.h.b16 %v618
        %v906 = vunpack.c.l.b16 %v619
        %v907 = vunpack.c.h.b16 %v619
        %v908 = vunpack.c.l.b16 %v620
        %v909 = vunpack.c.h.b16 %v620
        %v910 = vunpack.c.l.b16 %v621
        %v911 = vunpack.c.h.b16 %v621
        %v912 = vunpack.c.l.b16 %v622
        %v913 = vunpack.c.h.b16 %v622
        %v914 = vunpack.c.l.b16 %v623
        %v915 = vunpack.c.h.b16 %v623
        %v916 = vunpack.c.l.b16 %v624
        %v917 = vunpack.c.h.b16 %v624
        %v918 = vunpack.c.l.b16 %v625
        %v919 = vunpack.c.h.b16 %v625
        %v920 = vunpack.c.l.b16 %v626
        %v921 = vunpack.c.h.b16 %v626
        %v922 = vunpack.c.l.b16 %v627
        %v923 = vunpack.c.h.b16 %v627
        %v924 = vunpack.c.l.b16 %v628
        %v925 = vunpack.c.h.b16 %v628
        %v926 = vunpack.c.l.b16 %v629
        %v927 = vunpack.c.h.b16 %v629
        %v928 = vunpack.c.l.b16 %v630
        %v929 = vunpack.c.h.b16 %v630
        %v930 = vunpack.c.l.b16 %v631
        %v931 = vunpack.c.h.b16 %v631
        %v932 = vunpack.c.l.b16 %v632
        %v933 = vunpack.c.h.b16 %v632
        %v934 = vunpack.c.l.b16 %v633
        %v935 = vunpack.c.h.b16 %v633
        %v936 = vunpack.c.l.b16 %v634
        %v937 = vunpack.c.h.b16 %v634
        %v938 = vunpack.c.l.b16 %v635
        %v939 = vunpack.c.h.b16 %v635
        %v940 = vunpack.c.l.b16 %v636
        %v941 = vunpack.c.h.b16 %v636
        %v942 = vunpack.c.l.b16 %v637
        %v943 = vunpack.c.h.b16 %v637
        %v944 = vunpack.c.l.b16 %v638
        %v945 = vunpack.c.h.b16 %v638
        %v946 = vunpack.c.l.b16 %v639
        %v947 = vunpack.c.h.b16 %v639
        %v948 = vunpack.c.l.b16 %v640
        %v949 = vunpack.c.h.b16 %v640
        %v950 = vunpack.c.l.b16 %v641
        %v951 = vunpack.c.h.b16 %v641
        %v952 = vunpack.c.l.b16 %v642
        %v953 = vunpack.c.h.b16 %v642
        %v954 = vunpack.c.l.b16 %v643
        %v955 = vunpack.c.h.b16 %v643
        %v956 = vunpack.c.l.b16 %v644
        %v957 = vunpack.c.h.b16 %v644
        %v958 = vunpack.c.l.b16 %v645
        %v959 = vunpack.c.h.b16 %v645
        %v960 = vunpack.c.l.b16 %v646
        %v961 = vunpack.c.h.b16 %v646
        %v962 = vunpack.c.l.b16 %v647
        %v963 = vunpack.c.h.b16 %v647
        %v964 = vunpack.c.l.b16 %v648
        %v965 = vunpack.c.h.b16 %v648
        %v966 = vunpack.c.l.b16 %v649
        %v967 = vunpack.c.h.b16 %v649
        %v968 = vunpack.c.l.b16 %v650
        %v969 = vunpack.c.h.b16 %v650
        %v970 = vunpack.c.l.b16 %v651
        %v971 = vunpack.c.h.b16 %v651
        %v972 = vpack.c.b16 %v786, %v780
        %v973 = vpack.c.b16 %v787, %v781
        %v974 = vpack.c.b16 %v788, %v782
        %v975 = vpack.c.b16 %v789, %v783
        %v976 = vpack.c.b16 %v790, %v784
        %v977 = vpack.c.b16 %v791, %v785
        %v978 = vpack.c.b16 %v798, %v792
        %v979 = vpack.c.b16 %v799, %v793
        %v980 = vpack.c.b16 %v800, %v794
        %v981 = vpack.c.b16 %v801, %v795
        %v982 = vpack.c.b16 %v802, %v796
        %v983 = vpack.c.b16 %v803, %v797
        %v984 = vpack.c.b16 %v810, %v804
        %v985 = vpack.c.b16 %v811, %v805
        %v986 = vpack.c.b16 %v812, %v806
        %v987 = vpack.c.b16 %v813, %v807
        %v988 = vpack.c.b16 %v814, %v808
        %v989 = vpack.c.b16 %v815, %v809
        %v990 = vpack.c.b16 %v822, %v816
        %v991 = vpack.c.b16 %v823, %v817
        %v992 = vpack.c.b16 %v824, %v818
        %v993 = vpack.c.b16 %v825, %v819
        %v994 = vpack.c.b16 %v826, %v820
        %v995 = vpack.c.b16 %v827, %v821
        %v996 = vpack.c.b16 %v834, %v828
        %v997 = vpack.c.b16 %v835, %v829
        %v998 = vpack.c.b16 %v836, %v830
        %v999 = vpack.c.b16 %v837, %v831
        %v1000 = vpack.c.b16 %v838, %v832
        %v1001 = vpack.c.b16 %v839, %v833
        %v1002 = vpack.c.b16 %v846, %v840
        %v1003 = vpack.c.b16 %v847, %v841
        %v1004 = vpack.c.b16 %v848, %v842
        %v1005 = vpack.c.b16 %v849, %v843
        %v1006 = vpack.c.b16 %v850, %v844
        %v1007 = vpack.c.b16 %v851, %v845
        %v1008 = vpack.c.b16 %v858, %v852
        %v1009 = vpack.c.b16 %v859, %v853
        %v1010 = vpack.c.b16 %v860, %v854
        %v1011 = vpack.c.b16 %v861, %v855
        %v1012 = vpack.c.b16 %v862, %v856
        %v1013 = vpack.c.b16 %v863, %v857
        %v1014 = vpack.c.b16 %v870, %v864
        %v1015 = vpack.c.b16 %v871, %v865
        %v1016 = vpack.c.b16 %v872, %v866
        %v1017 = vpack.c.b16 %v873, %v867
        %v1018 = vpack.c.b16 %v874, %v868
        %v1019 = vpack.c.b16 %v875, %v869
        %v1020 = vpack.c.b16 %v882, %v876
        %v1021 = vpack.c.b16 %v883, %v877
        %v1022 = vpack.c.b16 %v884, %v878
        %v1023 = vpack.c.b16 %v885, %v879
        %v1024 = vpack.c.b16 %v886, %v880
        %v1025 = vpack.c.b16 %v887, %v881
        %v1026 = vpack.c.b16 %v894, %v888
        %v1027 = vpack.c.b16 %v895, %v889
        %v1028 = vpack.c.b16 %v896, %v890
        %v1029 = vpack.c.b16 %v897, %v891
        %v1030 = vpack.c.b16 %v898, %v892
        %v1031 = vpack.c.b16 %v899, %v893
        %v1032 = vpack.c.b16 %v906, %v900
        %v1033 = vpack.c.b16 %v907, %v901
        %v1034 = vpack.c.b16 %v908, %v902
        %v1035 = vpack.c.b16 %v909, %v903
        %v1036 = vpack.c.b16 %v910, %v904
        %v1037 = vpack.c.b16 %v911, %v905
        %v1038 = vpack.c.b16 %v918, %v912
        %v1039 = vpack.c.b16 %v919, %v913
        %v1040 = vpack.c.b16 %v920, %v914
        %v1041 = vpack.c.b16 %v921, %v915
        %v1042 = vpack.c.b16 %v922, %v916
        %v1043 = vpack.c.b16 %v923, %v917
        %v1044 = vpack.c.b16 %v930, %v924
        %v1045 = vpack.c.b16 %v931, %v925
        %v1046 = vpack.c.b16 %v932, %v926
        %v1047 = vpack.c.b16 %v933, %v927
        %v1048 = vpack.c.b16 %v934, %v928
        %v1049 = vpack.c.b16 %v935, %v929
        %v1050 = vpack.c.b16 %v942, %v936
        %v1051 = vpack.c.b16 %v943, %v937
        %v1052 = vpack.c.b16 %v944, %v938
        %v1053 = vpack.c.b16 %v945, %v939
        %v1054 = vpack.c.b16 %v946, %v940
        %v1055 = vpack.c.b16 %v947, %v941
        %v1056 = vpack.c.b16 %v954, %v948
        %v1057 = vpack.c.b16 %v955, %v949
        %v1058 = vpack.c.b16 %v956, %v950
        %v1059 = vpack.c.b16 %v957, %v951
        %v1060 = vpack.c.b16 %v958, %v952
        %v1061 = vpack.c.b16 %v959, %v953
        %v1062 = vpack.c.b16 %v966, %v960
        %v1063 = vpack.c.b16 %v967, %v961
        %v1064 = vpack.c.b16 %v968, %v962
        %v1065 = vpack.c.b16 %v969, %v963
        %v1066 = vpack.c.b16 %v970, %v964
        %v1067 = vpack.c.b16 %v971, %v965
        %1164 = vmatprep.subr.bf16.mxu0 %v973
        %1165 = vmatpush1.bf16.msra.mxu0 %v972
        %1166 = vmatprep.subr.bf16.mxu0 %v979
        %1167 = vmatpush1.bf16.msra.mxu0 %v978
        %1168 = vmatprep.subr.bf16.mxu0 %v985
        %1169 = vmatpush1.bf16.msra.mxu0 %v984
        %1170 = vmatprep.subr.bf16.mxu0 %v991
        %1171 = vmatpush1.bf16.msra.mxu0 %v990
        %1172 = vmatprep.subr.bf16.mxu0 %v997
        %1173 = vmatpush1.bf16.msra.mxu0 %v996
        %1174 = vmatprep.subr.bf16.mxu0 %v1003
        %1175 = vmatpush1.bf16.msra.mxu0 %v1002
        %1176 = vmatprep.subr.bf16.mxu0 %v1009
        %1177 = vmatpush1.bf16.msra.mxu0 %v1008
        %1178 = vmatprep.subr.bf16.mxu0 %v1015
        %1179 = vmatpush1.bf16.msra.mxu0 %v1014
        %1180 = vmatprep.subr.bf16.mxu0 %v1021
        %1181 = vmatpush1.bf16.msra.mxu0 %v1020
        %1182 = vmatprep.subr.bf16.mxu0 %v1027
        %1183 = vmatpush1.bf16.msra.mxu0 %v1026
        %1184 = vmatprep.subr.bf16.mxu0 %v1033
        %1185 = vmatpush1.bf16.msra.mxu0 %v1032
        %1186 = vmatprep.subr.bf16.mxu0 %v1039
        %1187 = vmatpush1.bf16.msra.mxu0 %v1038
        %1188 = vmatprep.subr.bf16.mxu0 %v1045
        %1189 = vmatpush1.bf16.msra.mxu0 %v1044
        %1190 = vmatprep.subr.bf16.mxu0 %v1051
        %1191 = vmatpush1.bf16.msra.mxu0 %v1050
        %1192 = vmatprep.subr.bf16.mxu0 %v1057
        %1193 = vmatpush1.bf16.msra.mxu0 %v1056
        %1194 = vmatprep.subr.bf16.mxu0 %v1063
        %1195 = vmatpush1.bf16.msra.mxu0 %v1062
        %1196 = vmatprep.mubr.bf16.mxu0 %v551
        %1197 = vmatmul.mubr.bf16.gmra.mrb[0].mxu0 %v550
        %v1198 = vpop.f32.mrb[0].mxu0
        %v1199 = vadd.f32 %v657, %v1198
        %v1200 = vpop.f32.mrb[0].mxu0
        %v1201 = vadd.f32 %v661, %v1200
        %v1202 = vpop.f32.mrb[0].mxu0
        %v1203 = vadd.f32 %v657, %v1202
        %v1204 = vpop.f32.mrb[0].mxu0
        %v1205 = vadd.f32 %v661, %v1204
        %1206 = vmatprep.mubr.bf16.mxu0 %v553
        %1207 = vmatmul.mubr.bf16.gmra.mrb[0].mxu0 %v552
        %v1208 = vpop.f32.mrb[0].mxu0
        %v1209 = vadd.f32 %v657, %v1208
        %v1210 = vpop.f32.mrb[0].mxu0
        %v1211 = vadd.f32 %v661, %v1210
        %v1212 = vpop.f32.mrb[0].mxu0
        %v1213 = vadd.f32 %v657, %v1212
        %v1214 = vpop.f32.mrb[0].mxu0
        %v1215 = vadd.f32 %v661, %v1214
        %1216 = vmatprep.mubr.bf16.mxu0 %v555
        %1217 = vmatmul.mubr.bf16.gmra.mrb[0].mxu0 %v554
        %v1218 = vpop.f32.mrb[0].mxu0
        %v1219 = vadd.f32 %v657, %v1218
        %v1220 = vpop.f32.mrb[0].mxu0
        %v1221 = vadd.f32 %v661, %v1220
        %v1222 = vpop.f32.mrb[0].mxu0
        %v1223 = vadd.f32 %v657, %v1222
        %v1224 = vpop.f32.mrb[0].mxu0
        %v1225 = vadd.f32 %v661, %v1224
        %1226 = vdwg.mxu0
        %1227 = vmatprep.subr.bf16.mxu0 %v975
        %1228 = vmatpush1.bf16.msra.mxu0 %v974
        %1229 = vmatprep.subr.bf16.mxu0 %v981
        %1230 = vmatpush1.bf16.msra.mxu0 %v980
        %1231 = vmatprep.subr.bf16.mxu0 %v987
        %1232 = vmatpush1.bf16.msra.mxu0 %v986
        %1233 = vmatprep.subr.bf16.mxu0 %v993
        %1234 = vmatpush1.bf16.msra.mxu0 %v992
        %1235 = vmatprep.subr.bf16.mxu0 %v999
        %1236 = vmatpush1.bf16.msra.mxu0 %v998
        %1237 = vmatprep.subr.bf16.mxu0 %v1005
        %1238 = vmatpush1.bf16.msra.mxu0 %v1004
        %1239 = vmatprep.subr.bf16.mxu0 %v1011
        %1240 = vmatpush1.bf16.msra.mxu0 %v1010
        %1241 = vmatprep.subr.bf16.mxu0 %v1017
        %1242 = vmatpush1.bf16.msra.mxu0 %v1016
        %1243 = vmatprep.subr.bf16.mxu0 %v1023
        %1244 = vmatpush1.bf16.msra.mxu0 %v1022
        %1245 = vmatprep.subr.bf16.mxu0 %v1029
        %1246 = vmatpush1.bf16.msra.mxu0 %v1028
        %1247 = vmatprep.subr.bf16.mxu0 %v1035
        %1248 = vmatpush1.bf16.msra.mxu0 %v1034
        %1249 = vmatprep.subr.bf16.mxu0 %v1041
        %1250 = vmatpush1.bf16.msra.mxu0 %v1040
        %1251 = vmatprep.subr.bf16.mxu0 %v1047
        %1252 = vmatpush1.bf16.msra.mxu0 %v1046
        %1253 = vmatprep.subr.bf16.mxu0 %v1053
        %1254 = vmatpush1.bf16.msra.mxu0 %v1052
        %1255 = vmatprep.subr.bf16.mxu0 %v1059
        %1256 = vmatpush1.bf16.msra.mxu0 %v1058
        %1257 = vmatprep.subr.bf16.mxu0 %v1065
        %1258 = vmatpush1.bf16.msra.mxu0 %v1064
        %1259 = vmatprep.mubr.bf16.mxu0 %v551
        %1260 = vmatmul.mubr.bf16.gmra.mrb[0].mxu0 %v550
        %v1261 = vpop.f32.mrb[0].mxu0
        %v1262 = vadd.f32 %v665, %v1261
        %v1263 = vpop.f32.mrb[0].mxu0
        %v1264 = vadd.f32 %v669, %v1263
        %v1265 = vpop.f32.mrb[0].mxu0
        %v1266 = vadd.f32 %v665, %v1265
        %v1267 = vpop.f32.mrb[0].mxu0
        %v1268 = vadd.f32 %v669, %v1267
        %1269 = vmatprep.mubr.bf16.mxu0 %v553
        %1270 = vmatmul.mubr.bf16.gmra.mrb[0].mxu0 %v552
        %v1271 = vpop.f32.mrb[0].mxu0
        %v1272 = vadd.f32 %v665, %v1271
        %v1273 = vpop.f32.mrb[0].mxu0
        %v1274 = vadd.f32 %v669, %v1273
        %v1275 = vpop.f32.mrb[0].mxu0
        %v1276 = vadd.f32 %v665, %v1275
        %v1277 = vpop.f32.mrb[0].mxu0
        %v1278 = vadd.f32 %v669, %v1277
        %1279 = vmatprep.mubr.bf16.mxu0 %v555
        %1280 = vmatmul.mubr.bf16.gmra.mrb[0].mxu0 %v554
        %v1281 = vpop.f32.mrb[0].mxu0
        %v1282 = vadd.f32 %v665, %v1281
        %v1283 = vpop.f32.mrb[0].mxu0
        %v1284 = vadd.f32 %v669, %v1283
        %v1285 = vpop.f32.mrb[0].mxu0
        %v1286 = vadd.f32 %v665, %v1285
        %v1287 = vpop.f32.mrb[0].mxu0
        %v1288 = vadd.f32 %v669, %v1287
        %1289 = vdwg.mxu0
        %1290 = vmatprep.subr.bf16.mxu0 %v977
        %1291 = vmatpush1.bf16.msra.mxu0 %v976
        %1292 = vmatprep.subr.bf16.mxu0 %v983
        %1293 = vmatpush1.bf16.msra.mxu0 %v982
        %1294 = vmatprep.subr.bf16.mxu0 %v989
        %1295 = vmatpush1.bf16.msra.mxu0 %v988
        %1296 = vmatprep.subr.bf16.mxu0 %v995
        %1297 = vmatpush1.bf16.msra.mxu0 %v994
        %1298 = vmatprep.subr.bf16.mxu0 %v1001
        %1299 = vmatpush1.bf16.msra.mxu0 %v1000
        %1300 = vmatprep.subr.bf16.mxu0 %v1007
        %1301 = vmatpush1.bf16.msra.mxu0 %v1006
        %1302 = vmatprep.subr.bf16.mxu0 %v1013
        %1303 = vmatpush1.bf16.msra.mxu0 %v1012
        %1304 = vmatprep.subr.bf16.mxu0 %v1019
        %1305 = vmatpush1.bf16.msra.mxu0 %v1018
        %1306 = vmatprep.subr.bf16.mxu0 %v1025
        %1307 = vmatpush1.bf16.msra.mxu0 %v1024
        %1308 = vmatprep.subr.bf16.mxu0 %v1031
        %1309 = vmatpush1.bf16.msra.mxu0 %v1030
        %1310 = vmatprep.subr.bf16.mxu0 %v1037
        %1311 = vmatpush1.bf16.msra.mxu0 %v1036
        %1312 = vmatprep.subr.bf16.mxu0 %v1043
        %1313 = vmatpush1.bf16.msra.mxu0 %v1042
        %1314 = vmatprep.subr.bf16.mxu0 %v1049
        %1315 = vmatpush1.bf16.msra.mxu0 %v1048
        %1316 = vmatprep.subr.bf16.mxu0 %v1055
        %1317 = vmatpush1.bf16.msra.mxu0 %v1054
        %1318 = vmatprep.subr.bf16.mxu0 %v1061
        %1319 = vmatpush1.bf16.msra.mxu0 %v1060
        %1320 = vmatprep.subr.bf16.mxu0 %v1067
        %1321 = vmatpush1.bf16.msra.mxu0 %v1066
        %1322 = vmatprep.mubr.bf16.mxu0 %v551
        %1323 = vmatmul.mubr.bf16.gmra.mrb[0].mxu0 %v550
        %v1324 = vpop.f32.mrb[0].mxu0
        %v1325 = vadd.f32 %v673, %v1324
        %v1326 = vpop.f32.mrb[0].mxu0
        %v1327 = vadd.f32 %v677, %v1326
        %v1328 = vpop.f32.mrb[0].mxu0
        %v1329 = vadd.f32 %v673, %v1328
        %v1330 = vpop.f32.mrb[0].mxu0
        %v1331 = vadd.f32 %v677, %v1330
        %1332 = vmatprep.mubr.bf16.mxu0 %v553
        %1333 = vmatmul.mubr.bf16.gmra.mrb[0].mxu0 %v552
        %v1334 = vpop.f32.mrb[0].mxu0
        %v1335 = vadd.f32 %v673, %v1334
        %v1336 = vpop.f32.mrb[0].mxu0
        %v1337 = vadd.f32 %v677, %v1336
        %v1338 = vpop.f32.mrb[0].mxu0
        %v1339 = vadd.f32 %v673, %v1338
        %v1340 = vpop.f32.mrb[0].mxu0
        %v1341 = vadd.f32 %v677, %v1340
        %1342 = vmatprep.mubr.bf16.mxu0 %v555
        %1343 = vmatmul.mubr.bf16.gmra.mrb[0].mxu0 %v554
        %v1344 = vpop.f32.mrb[0].mxu0
        %v1345 = vadd.f32 %v673, %v1344
        %v1346 = vpop.f32.mrb[0].mxu0
        %v1347 = vadd.f32 %v677, %v1346
        %v1348 = vpop.f32.mrb[0].mxu0
        %v1349 = vadd.f32 %v673, %v1348
        %v1350 = vpop.f32.mrb[0].mxu0
        %v1351 = vadd.f32 %v677, %v1350
        %1352 = vdwg.mxu0
        %1353 = vst [vmem:[#allocation3] sm:$0xff] %v1199
        %1354 = vst [vmem:[#allocation3 + $0x8] sm:$0xff] %v1201
        %1355 = vst [vmem:[#allocation3 + $0x10] sm:$0xff] %v1262
        %1356 = vst [vmem:[#allocation3 + $0x18] sm:$0xff] %v1264
        %1357 = vst [vmem:[#allocation3 + $0x20] sm:$0xff] %v1325
        %1358 = vst [vmem:[#allocation3 + $0x28] sm:$0xff] %v1327
        %1359 = vst [vmem:[#allocation3 + $0x30] sm:$0xff] %v1203
        %1360 = vst [vmem:[#allocation3 + $0x38] sm:$0xff] %v1205
        %1361 = vst [vmem:[#allocation3 + $0x40] sm:$0xff] %v1266
        %1362 = vst [vmem:[#allocation3 + $0x48] sm:$0xff] %v1268
        %1363 = vst [vmem:[#allocation3 + $0x50] sm:$0xff] %v1329
        %1364 = vst [vmem:[#allocation3 + $0x58] sm:$0xff] %v1331
        %1365 = vst [vmem:[#allocation3 + $0x60] sm:$0xff] %v1209
        %1366 = vst [vmem:[#allocation3 + $0x68] sm:$0xff] %v1211
        %1367 = vst [vmem:[#allocation3 + $0x70] sm:$0xff] %v1272
        %1368 = vst [vmem:[#allocation3 + $0x78] sm:$0xff] %v1274
        %1369 = vst [vmem:[#allocation3 + $0x80] sm:$0xff] %v1335
        %1370 = vst [vmem:[#allocation3 + $0x88] sm:$0xff] %v1337
        %1371 = vst [vmem:[#allocation3 + $0x90] sm:$0xff] %v1213
        %1372 = vst [vmem:[#allocation3 + $0x98] sm:$0xff] %v1215
        %1373 = vst [vmem:[#allocation3 + $0xa0] sm:$0xff] %v1276
        %1374 = vst [vmem:[#allocation3 + $0xa8] sm:$0xff] %v1278
        %1375 = vst [vmem:[#allocation3 + $0xb0] sm:$0xff] %v1339
        %1376 = vst [vmem:[#allocation3 + $0xb8] sm:$0xff] %v1341
        %1377 = vst [vmem:[#allocation3 + $0xc0] sm:$0xff] %v1219
        %1378 = vst [vmem:[#allocation3 + $0xc8] sm:$0xff] %v1221
        %1379 = vst [vmem:[#allocation3 + $0xd0] sm:$0xff] %v1282
        %1380 = vst [vmem:[#allocation3 + $0xd8] sm:$0xff] %v1284
        %1381 = vst [vmem:[#allocation3 + $0xe0] sm:$0xff] %v1345
        %1382 = vst [vmem:[#allocation3 + $0xe8] sm:$0xff] %v1347
        %1383 = vst [vmem:[#allocation3 + $0xf0] sm:$0xff] %v1223
        %1384 = vst [vmem:[#allocation3 + $0xf8] sm:$0xff] %v1225
        %1385 = vst [vmem:[#allocation3 + $0x100] sm:$0xff] %v1286
        %1386 = vst [vmem:[#allocation3 + $0x108] sm:$0xff] %v1288
        %1387 = vst [vmem:[#allocation3 + $0x110] sm:$0xff] %v1349
        %1388 = vst [vmem:[#allocation3 + $0x118] sm:$0xff] %v1351
        %v1389 = vld [vmem:[%s423] sm:$0xff]
        %v1390 = vld [vmem:[%s423 + $0x8] sm:$0xff]
        %v1391 = vld [vmem:[%s423 + $0x10] sm:$0xff]
        %v1392 = vld [vmem:[%s423 + $0x18] sm:$0xff]
        %v1393 = vld [vmem:[%s423 + $0x20] sm:$0xff]
        %v1394 = vld [vmem:[%s423 + $0x28] sm:$0xff]
        %v1395 = vld [vmem:[%s423 + $0x30] sm:$0xff]
        %v1396 = vld [vmem:[%s423 + $0x38] sm:$0xff]
        %v1397 = vld [vmem:[%s423 + $0x40] sm:$0xff]
        %v1398 = vld [vmem:[%s423 + $0x48] sm:$0xff]
        %v1399 = vld [vmem:[%s423 + $0x50] sm:$0xff]
        %v1400 = vld [vmem:[%s423 + $0x58] sm:$0xff]
        %v1401 = vld [vmem:[%s423 + $0x60] sm:$0xff]
        %v1402 = vld [vmem:[%s423 + $0x68] sm:$0xff]
        %v1403 = vld [vmem:[%s423 + $0x70] sm:$0xff]
        %v1404 = vld [vmem:[%s423 + $0x78] sm:$0xff]
        %v1405 = vld [vmem:[%s423 + $0x80] sm:$0xff]
        %v1406 = vld [vmem:[%s423 + $0x88] sm:$0xff]
        %v1407 = vld [vmem:[%s423 + $0x90] sm:$0xff]
        %v1408 = vld [vmem:[%s423 + $0x98] sm:$0xff]
        %v1409 = vld [vmem:[%s423 + $0xa0] sm:$0xff]
        %v1410 = vld [vmem:[%s423 + $0xa8] sm:$0xff]
        %v1411 = vld [vmem:[%s423 + $0xb0] sm:$0xff]
        %v1412 = vld [vmem:[%s423 + $0xb8] sm:$0xff]
        %v1413 = vld [vmem:[%s423 + $0xc0] sm:$0xff]
        %v1414 = vld [vmem:[%s423 + $0xc8] sm:$0xff]
        %v1415 = vld [vmem:[%s423 + $0xd0] sm:$0xff]
        %v1416 = vld [vmem:[%s423 + $0xd8] sm:$0xff]
        %v1417 = vld [vmem:[%s423 + $0xe0] sm:$0xff]
        %v1418 = vld [vmem:[%s423 + $0xe8] sm:$0xff]
        %v1419 = vld [vmem:[%s423 + $0xf0] sm:$0xff]
        %v1420 = vld [vmem:[%s423 + $0xf8] sm:$0xff]
        %v1421 = vld [vmem:[%s423 + $0x100] sm:$0xff]
        %v1422 = vld [vmem:[%s423 + $0x108] sm:$0xff]
        %v1423 = vld [vmem:[%s423 + $0x110] sm:$0xff]
        %v1424 = vld [vmem:[%s423 + $0x118] sm:$0xff]
        %v1425 = vld [vmem:[%s423 + $0x120] sm:$0xff]
        %v1426 = vld [vmem:[%s423 + $0x128] sm:$0xff]
        %v1427 = vld [vmem:[%s423 + $0x130] sm:$0xff]
        %v1428 = vld [vmem:[%s423 + $0x138] sm:$0xff]
        %v1429 = vld [vmem:[%s423 + $0x140] sm:$0xff]
        %v1430 = vld [vmem:[%s423 + $0x148] sm:$0xff]
        %v1431 = vld [vmem:[%s423 + $0x150] sm:$0xff]
        %v1432 = vld [vmem:[%s423 + $0x158] sm:$0xff]
        %v1433 = vld [vmem:[%s423 + $0x160] sm:$0xff]
        %v1434 = vld [vmem:[%s423 + $0x168] sm:$0xff]
        %v1435 = vld [vmem:[%s423 + $0x170] sm:$0xff]
        %v1436 = vld [vmem:[%s423 + $0x178] sm:$0xff]
        %v1437 = vld [vmem:[%s423 + $0x180] sm:$0xff]
        %v1438 = vld [vmem:[%s423 + $0x188] sm:$0xff]
        %v1439 = vld [vmem:[%s423 + $0x190] sm:$0xff]
        %v1440 = vld [vmem:[%s423 + $0x198] sm:$0xff]
        %v1441 = vld [vmem:[%s423 + $0x1a0] sm:$0xff]
        %v1442 = vld [vmem:[%s423 + $0x1a8] sm:$0xff]
        %v1443 = vld [vmem:[%s423 + $0x1b0] sm:$0xff]
        %v1444 = vld [vmem:[%s423 + $0x1b8] sm:$0xff]
        %v1445 = vld [vmem:[%s423 + $0x1c0] sm:$0xff]
        %v1446 = vld [vmem:[%s423 + $0x1c8] sm:$0xff]
        %v1447 = vld [vmem:[%s423 + $0x1d0] sm:$0xff]
        %v1448 = vld [vmem:[%s423 + $0x1d8] sm:$0xff]
        %v1449 = vld [vmem:[%s423 + $0x1e0] sm:$0xff]
        %v1450 = vld [vmem:[%s423 + $0x1e8] sm:$0xff]
        %v1451 = vld [vmem:[%s423 + $0x1f0] sm:$0xff]
        %v1452 = vld [vmem:[%s423 + $0x1f8] sm:$0xff]
        %v1453 = vld [vmem:[%s423 + $0x200] sm:$0xff]
        %v1454 = vld [vmem:[%s423 + $0x208] sm:$0xff]
        %v1455 = vld [vmem:[%s423 + $0x210] sm:$0xff]
        %v1456 = vld [vmem:[%s423 + $0x218] sm:$0xff]
        %v1457 = vld [vmem:[%s423 + $0x220] sm:$0xff]
        %v1458 = vld [vmem:[%s423 + $0x228] sm:$0xff]
        %v1459 = vld [vmem:[%s423 + $0x230] sm:$0xff]
        %v1460 = vld [vmem:[%s423 + $0x238] sm:$0xff]
        %v1461 = vld [vmem:[%s423 + $0x240] sm:$0xff]
        %v1462 = vld [vmem:[%s423 + $0x248] sm:$0xff]
        %v1463 = vld [vmem:[%s423 + $0x250] sm:$0xff]
        %v1464 = vld [vmem:[%s423 + $0x258] sm:$0xff]
        %v1465 = vld [vmem:[%s423 + $0x260] sm:$0xff]
        %v1466 = vld [vmem:[%s423 + $0x268] sm:$0xff]
        %v1467 = vld [vmem:[%s423 + $0x270] sm:$0xff]
        %v1468 = vld [vmem:[%s423 + $0x278] sm:$0xff]
        %v1469 = vld [vmem:[%s423 + $0x280] sm:$0xff]
        %v1470 = vld [vmem:[%s423 + $0x288] sm:$0xff]
        %v1471 = vld [vmem:[%s423 + $0x290] sm:$0xff]
        %v1472 = vld [vmem:[%s423 + $0x298] sm:$0xff]
        %v1473 = vld [vmem:[%s423 + $0x2a0] sm:$0xff]
        %v1474 = vld [vmem:[%s423 + $0x2a8] sm:$0xff]
        %v1475 = vld [vmem:[%s423 + $0x2b0] sm:$0xff]
        %v1476 = vld [vmem:[%s423 + $0x2b8] sm:$0xff]
        %v1477 = vld [vmem:[%s423 + $0x2c0] sm:$0xff]
        %v1478 = vld [vmem:[%s423 + $0x2c8] sm:$0xff]
        %v1479 = vld [vmem:[%s423 + $0x2d0] sm:$0xff]
        %v1480 = vld [vmem:[%s423 + $0x2d8] sm:$0xff]
        %v1481 = vld [vmem:[%s423 + $0x2e0] sm:$0xff]
        %v1482 = vld [vmem:[%s423 + $0x2e8] sm:$0xff]
        %v1483 = vld [vmem:[%s423 + $0x2f0] sm:$0xff]
        %v1484 = vld [vmem:[%s423 + $0x2f8] sm:$0xff]
        %v1485 = vld [vmem:[%s441] sm:$0x3]
        %v1486 = vld [vmem:[%s508] sm:$0xff]
        %v1487 = vld [vmem:[%s508 + $0x8] sm:$0xff]
        %v1488 = vld [vmem:[#allocation3] sm:$0xff]
        %v1489 = vld [vmem:[#allocation3 + $0x8] sm:$0xff]
        %v1490 = vld [vmem:[#allocation3 + $0x10] sm:$0xff]
        %v1491 = vld [vmem:[#allocation3 + $0x18] sm:$0xff]
        %v1492 = vld [vmem:[#allocation3 + $0x20] sm:$0xff]
        %v1493 = vld [vmem:[#allocation3 + $0x28] sm:$0xff]
        %v1494 = vpack.c.bf16 %v1486, %v1486
        %v1495 = vpack.c.bf16 %v1487, %v1487
        %v1592 = vunpack.c.l.b16 %v1389
        %v1593 = vunpack.c.h.b16 %v1389
        %v1594 = vunpack.c.l.b16 %v1390
        %v1595 = vunpack.c.h.b16 %v1390
        %v1596 = vunpack.c.l.b16 %v1391
        %v1597 = vunpack.c.h.b16 %v1391
        %v1598 = vunpack.c.l.b16 %v1392
        %v1599 = vunpack.c.h.b16 %v1392
        %v1600 = vunpack.c.l.b16 %v1393
        %v1601 = vunpack.c.h.b16 %v1393
        %v1602 = vunpack.c.l.b16 %v1394
        %v1603 = vunpack.c.h.b16 %v1394
        %v1604 = vunpack.c.l.b16 %v1395
        %v1605 = vunpack.c.h.b16 %v1395
        %v1606 = vunpack.c.l.b16 %v1396
        %v1607 = vunpack.c.h.b16 %v1396
        %v1608 = vunpack.c.l.b16 %v1397
        %v1609 = vunpack.c.h.b16 %v1397
        %v1610 = vunpack.c.l.b16 %v1398
        %v1611 = vunpack.c.h.b16 %v1398
        %v1612 = vunpack.c.l.b16 %v1399
        %v1613 = vunpack.c.h.b16 %v1399
        %v1614 = vunpack.c.l.b16 %v1400
        %v1615 = vunpack.c.h.b16 %v1400
        %v1616 = vunpack.c.l.b16 %v1401
        %v1617 = vunpack.c.h.b16 %v1401
        %v1618 = vunpack.c.l.b16 %v1402
        %v1619 = vunpack.c.h.b16 %v1402
        %v1620 = vunpack.c.l.b16 %v1403
        %v1621 = vunpack.c.h.b16 %v1403
        %v1622 = vunpack.c.l.b16 %v1404
        %v1623 = vunpack.c.h.b16 %v1404
        %v1624 = vunpack.c.l.b16 %v1405
        %v1625 = vunpack.c.h.b16 %v1405
        %v1626 = vunpack.c.l.b16 %v1406
        %v1627 = vunpack.c.h.b16 %v1406
        %v1628 = vunpack.c.l.b16 %v1407
        %v1629 = vunpack.c.h.b16 %v1407
        %v1630 = vunpack.c.l.b16 %v1408
        %v1631 = vunpack.c.h.b16 %v1408
        %v1632 = vunpack.c.l.b16 %v1409
        %v1633 = vunpack.c.h.b16 %v1409
        %v1634 = vunpack.c.l.b16 %v1410
        %v1635 = vunpack.c.h.b16 %v1410
        %v1636 = vunpack.c.l.b16 %v1411
        %v1637 = vunpack.c.h.b16 %v1411
        %v1638 = vunpack.c.l.b16 %v1412
        %v1639 = vunpack.c.h.b16 %v1412
        %v1640 = vunpack.c.l.b16 %v1413
        %v1641 = vunpack.c.h.b16 %v1413
        %v1642 = vunpack.c.l.b16 %v1414
        %v1643 = vunpack.c.h.b16 %v1414
        %v1644 = vunpack.c.l.b16 %v1415
        %v1645 = vunpack.c.h.b16 %v1415
        %v1646 = vunpack.c.l.b16 %v1416
        %v1647 = vunpack.c.h.b16 %v1416
        %v1648 = vunpack.c.l.b16 %v1417
        %v1649 = vunpack.c.h.b16 %v1417
        %v1650 = vunpack.c.l.b16 %v1418
        %v1651 = vunpack.c.h.b16 %v1418
        %v1652 = vunpack.c.l.b16 %v1419
        %v1653 = vunpack.c.h.b16 %v1419
        %v1654 = vunpack.c.l.b16 %v1420
        %v1655 = vunpack.c.h.b16 %v1420
        %v1656 = vunpack.c.l.b16 %v1421
        %v1657 = vunpack.c.h.b16 %v1421
        %v1658 = vunpack.c.l.b16 %v1422
        %v1659 = vunpack.c.h.b16 %v1422
        %v1660 = vunpack.c.l.b16 %v1423
        %v1661 = vunpack.c.h.b16 %v1423
        %v1662 = vunpack.c.l.b16 %v1424
        %v1663 = vunpack.c.h.b16 %v1424
        %v1664 = vunpack.c.l.b16 %v1425
        %v1665 = vunpack.c.h.b16 %v1425
        %v1666 = vunpack.c.l.b16 %v1426
        %v1667 = vunpack.c.h.b16 %v1426
        %v1668 = vunpack.c.l.b16 %v1427
        %v1669 = vunpack.c.h.b16 %v1427
        %v1670 = vunpack.c.l.b16 %v1428
        %v1671 = vunpack.c.h.b16 %v1428
        %v1672 = vunpack.c.l.b16 %v1429
        %v1673 = vunpack.c.h.b16 %v1429
        %v1674 = vunpack.c.l.b16 %v1430
        %v1675 = vunpack.c.h.b16 %v1430
        %v1676 = vunpack.c.l.b16 %v1431
        %v1677 = vunpack.c.h.b16 %v1431
        %v1678 = vunpack.c.l.b16 %v1432
        %v1679 = vunpack.c.h.b16 %v1432
        %v1680 = vunpack.c.l.b16 %v1433
        %v1681 = vunpack.c.h.b16 %v1433
        %v1682 = vunpack.c.l.b16 %v1434
        %v1683 = vunpack.c.h.b16 %v1434
        %v1684 = vunpack.c.l.b16 %v1435
        %v1685 = vunpack.c.h.b16 %v1435
        %v1686 = vunpack.c.l.b16 %v1436
        %v1687 = vunpack.c.h.b16 %v1436
        %v1688 = vunpack.c.l.b16 %v1437
        %v1689 = vunpack.c.h.b16 %v1437
        %v1690 = vunpack.c.l.b16 %v1438
        %v1691 = vunpack.c.h.b16 %v1438
        %v1692 = vunpack.c.l.b16 %v1439
        %v1693 = vunpack.c.h.b16 %v1439
        %v1694 = vunpack.c.l.b16 %v1440
        %v1695 = vunpack.c.h.b16 %v1440
        %v1696 = vunpack.c.l.b16 %v1441
        %v1697 = vunpack.c.h.b16 %v1441
        %v1698 = vunpack.c.l.b16 %v1442
        %v1699 = vunpack.c.h.b16 %v1442
        %v1700 = vunpack.c.l.b16 %v1443
        %v1701 = vunpack.c.h.b16 %v1443
        %v1702 = vunpack.c.l.b16 %v1444
        %v1703 = vunpack.c.h.b16 %v1444
        %v1704 = vunpack.c.l.b16 %v1445
        %v1705 = vunpack.c.h.b16 %v1445
        %v1706 = vunpack.c.l.b16 %v1446
        %v1707 = vunpack.c.h.b16 %v1446
        %v1708 = vunpack.c.l.b16 %v1447
        %v1709 = vunpack.c.h.b16 %v1447
        %v1710 = vunpack.c.l.b16 %v1448
        %v1711 = vunpack.c.h.b16 %v1448
        %v1712 = vunpack.c.l.b16 %v1449
        %v1713 = vunpack.c.h.b16 %v1449
        %v1714 = vunpack.c.l.b16 %v1450
        %v1715 = vunpack.c.h.b16 %v1450
        %v1716 = vunpack.c.l.b16 %v1451
        %v1717 = vunpack.c.h.b16 %v1451
        %v1718 = vunpack.c.l.b16 %v1452
        %v1719 = vunpack.c.h.b16 %v1452
        %v1720 = vunpack.c.l.b16 %v1453
        %v1721 = vunpack.c.h.b16 %v1453
        %v1722 = vunpack.c.l.b16 %v1454
        %v1723 = vunpack.c.h.b16 %v1454
        %v1724 = vunpack.c.l.b16 %v1455
        %v1725 = vunpack.c.h.b16 %v1455
        %v1726 = vunpack.c.l.b16 %v1456
        %v1727 = vunpack.c.h.b16 %v1456
        %v1728 = vunpack.c.l.b16 %v1457
        %v1729 = vunpack.c.h.b16 %v1457
        %v1730 = vunpack.c.l.b16 %v1458
        %v1731 = vunpack.c.h.b16 %v1458
        %v1732 = vunpack.c.l.b16 %v1459
        %v1733 = vunpack.c.h.b16 %v1459
        %v1734 = vunpack.c.l.b16 %v1460
        %v1735 = vunpack.c.h.b16 %v1460
        %v1736 = vunpack.c.l.b16 %v1461
        %v1737 = vunpack.c.h.b16 %v1461
        %v1738 = vunpack.c.l.b16 %v1462
        %v1739 = vunpack.c.h.b16 %v1462
        %v1740 = vunpack.c.l.b16 %v1463
        %v1741 = vunpack.c.h.b16 %v1463
        %v1742 = vunpack.c.l.b16 %v1464
        %v1743 = vunpack.c.h.b16 %v1464
        %v1744 = vunpack.c.l.b16 %v1465
        %v1745 = vunpack.c.h.b16 %v1465
        %v1746 = vunpack.c.l.b16 %v1466
        %v1747 = vunpack.c.h.b16 %v1466
        %v1748 = vunpack.c.l.b16 %v1467
        %v1749 = vunpack.c.h.b16 %v1467
        %v1750 = vunpack.c.l.b16 %v1468
        %v1751 = vunpack.c.h.b16 %v1468
        %v1752 = vunpack.c.l.b16 %v1469
        %v1753 = vunpack.c.h.b16 %v1469
        %v1754 = vunpack.c.l.b16 %v1470
        %v1755 = vunpack.c.h.b16 %v1470
        %v1756 = vunpack.c.l.b16 %v1471
        %v1757 = vunpack.c.h.b16 %v1471
        %v1758 = vunpack.c.l.b16 %v1472
        %v1759 = vunpack.c.h.b16 %v1472
        %v1760 = vunpack.c.l.b16 %v1473
        %v1761 = vunpack.c.h.b16 %v1473
        %v1762 = vunpack.c.l.b16 %v1474
        %v1763 = vunpack.c.h.b16 %v1474
        %v1764 = vunpack.c.l.b16 %v1475
        %v1765 = vunpack.c.h.b16 %v1475
        %v1766 = vunpack.c.l.b16 %v1476
        %v1767 = vunpack.c.h.b16 %v1476
        %v1768 = vunpack.c.l.b16 %v1477
        %v1769 = vunpack.c.h.b16 %v1477
        %v1770 = vunpack.c.l.b16 %v1478
        %v1771 = vunpack.c.h.b16 %v1478
        %v1772 = vunpack.c.l.b16 %v1479
        %v1773 = vunpack.c.h.b16 %v1479
        %v1774 = vunpack.c.l.b16 %v1480
        %v1775 = vunpack.c.h.b16 %v1480
        %v1776 = vunpack.c.l.b16 %v1481
        %v1777 = vunpack.c.h.b16 %v1481
        %v1778 = vunpack.c.l.b16 %v1482
        %v1779 = vunpack.c.h.b16 %v1482
        %v1780 = vunpack.c.l.b16 %v1483
        %v1781 = vunpack.c.h.b16 %v1483
        %v1782 = vunpack.c.l.b16 %v1484
        %v1783 = vunpack.c.h.b16 %v1484
        %v1784 = vpack.c.b16 %v1598, %v1592
        %v1785 = vpack.c.b16 %v1599, %v1593
        %v1786 = vpack.c.b16 %v1600, %v1594
        %v1787 = vpack.c.b16 %v1601, %v1595
        %v1788 = vpack.c.b16 %v1602, %v1596
        %v1789 = vpack.c.b16 %v1603, %v1597
        %v1790 = vpack.c.b16 %v1610, %v1604
        %v1791 = vpack.c.b16 %v1611, %v1605
        %v1792 = vpack.c.b16 %v1612, %v1606
        %v1793 = vpack.c.b16 %v1613, %v1607
        %v1794 = vpack.c.b16 %v1614, %v1608
        %v1795 = vpack.c.b16 %v1615, %v1609
        %v1796 = vpack.c.b16 %v1622, %v1616
        %v1797 = vpack.c.b16 %v1623, %v1617
        %v1798 = vpack.c.b16 %v1624, %v1618
        %v1799 = vpack.c.b16 %v1625, %v1619
        %v1800 = vpack.c.b16 %v1626, %v1620
        %v1801 = vpack.c.b16 %v1627, %v1621
        %v1802 = vpack.c.b16 %v1634, %v1628
        %v1803 = vpack.c.b16 %v1635, %v1629
        %v1804 = vpack.c.b16 %v1636, %v1630
        %v1805 = vpack.c.b16 %v1637, %v1631
        %v1806 = vpack.c.b16 %v1638, %v1632
        %v1807 = vpack.c.b16 %v1639, %v1633
        %v1808 = vpack.c.b16 %v1646, %v1640
        %v1809 = vpack.c.b16 %v1647, %v1641
        %v1810 = vpack.c.b16 %v1648, %v1642
        %v1811 = vpack.c.b16 %v1649, %v1643
        %v1812 = vpack.c.b16 %v1650, %v1644
        %v1813 = vpack.c.b16 %v1651, %v1645
        %v1814 = vpack.c.b16 %v1658, %v1652
        %v1815 = vpack.c.b16 %v1659, %v1653
        %v1816 = vpack.c.b16 %v1660, %v1654
        %v1817 = vpack.c.b16 %v1661, %v1655
        %v1818 = vpack.c.b16 %v1662, %v1656
        %v1819 = vpack.c.b16 %v1663, %v1657
        %v1820 = vpack.c.b16 %v1670, %v1664
        %v1821 = vpack.c.b16 %v1671, %v1665
        %v1822 = vpack.c.b16 %v1672, %v1666
        %v1823 = vpack.c.b16 %v1673, %v1667
        %v1824 = vpack.c.b16 %v1674, %v1668
        %v1825 = vpack.c.b16 %v1675, %v1669
        %v1826 = vpack.c.b16 %v1682, %v1676
        %v1827 = vpack.c.b16 %v1683, %v1677
        %v1828 = vpack.c.b16 %v1684, %v1678
        %v1829 = vpack.c.b16 %v1685, %v1679
        %v1830 = vpack.c.b16 %v1686, %v1680
        %v1831 = vpack.c.b16 %v1687, %v1681
        %v1832 = vpack.c.b16 %v1694, %v1688
        %v1833 = vpack.c.b16 %v1695, %v1689
        %v1834 = vpack.c.b16 %v1696, %v1690
        %v1835 = vpack.c.b16 %v1697, %v1691
        %v1836 = vpack.c.b16 %v1698, %v1692
        %v1837 = vpack.c.b16 %v1699, %v1693
        %v1838 = vpack.c.b16 %v1706, %v1700
        %v1839 = vpack.c.b16 %v1707, %v1701
        %v1840 = vpack.c.b16 %v1708, %v1702
        %v1841 = vpack.c.b16 %v1709, %v1703
        %v1842 = vpack.c.b16 %v1710, %v1704
        %v1843 = vpack.c.b16 %v1711, %v1705
        %v1844 = vpack.c.b16 %v1718, %v1712
        %v1845 = vpack.c.b16 %v1719, %v1713
        %v1846 = vpack.c.b16 %v1720, %v1714
        %v1847 = vpack.c.b16 %v1721, %v1715
        %v1848 = vpack.c.b16 %v1722, %v1716
        %v1849 = vpack.c.b16 %v1723, %v1717
        %v1850 = vpack.c.b16 %v1730, %v1724
        %v1851 = vpack.c.b16 %v1731, %v1725
        %v1852 = vpack.c.b16 %v1732, %v1726
        %v1853 = vpack.c.b16 %v1733, %v1727
        %v1854 = vpack.c.b16 %v1734, %v1728
        %v1855 = vpack.c.b16 %v1735, %v1729
        %v1856 = vpack.c.b16 %v1742, %v1736
        %v1857 = vpack.c.b16 %v1743, %v1737
        %v1858 = vpack.c.b16 %v1744, %v1738
        %v1859 = vpack.c.b16 %v1745, %v1739
        %v1860 = vpack.c.b16 %v1746, %v1740
        %v1861 = vpack.c.b16 %v1747, %v1741
        %v1862 = vpack.c.b16 %v1754, %v1748
        %v1863 = vpack.c.b16 %v1755, %v1749
        %v1864 = vpack.c.b16 %v1756, %v1750
        %v1865 = vpack.c.b16 %v1757, %v1751
        %v1866 = vpack.c.b16 %v1758, %v1752
        %v1867 = vpack.c.b16 %v1759, %v1753
        %v1868 = vpack.c.b16 %v1766, %v1760
        %v1869 = vpack.c.b16 %v1767, %v1761
        %v1870 = vpack.c.b16 %v1768, %v1762
        %v1871 = vpack.c.b16 %v1769, %v1763
        %v1872 = vpack.c.b16 %v1770, %v1764
        %v1873 = vpack.c.b16 %v1771, %v1765
        %v1874 = vpack.c.b16 %v1778, %v1772
        %v1875 = vpack.c.b16 %v1779, %v1773
        %v1876 = vpack.c.b16 %v1780, %v1774
        %v1877 = vpack.c.b16 %v1781, %v1775
        %v1878 = vpack.c.b16 %v1782, %v1776
        %v1879 = vpack.c.b16 %v1783, %v1777
        %1976 = vmatprep.subr.bf16.mxu0 %v1785
        %1977 = vmatpush1.bf16.msra.mxu0 %v1784
        %1978 = vmatprep.subr.bf16.mxu0 %v1791
        %1979 = vmatpush1.bf16.msra.mxu0 %v1790
        %1980 = vmatprep.subr.bf16.mxu0 %v1797
        %1981 = vmatpush1.bf16.msra.mxu0 %v1796
        %1982 = vmatprep.subr.bf16.mxu0 %v1803
        %1983 = vmatpush1.bf16.msra.mxu0 %v1802
        %1984 = vmatprep.subr.bf16.mxu0 %v1809
        %1985 = vmatpush1.bf16.msra.mxu0 %v1808
        %1986 = vmatprep.subr.bf16.mxu0 %v1815
        %1987 = vmatpush1.bf16.msra.mxu0 %v1814
        %1988 = vmatprep.subr.bf16.mxu0 %v1821
        %1989 = vmatpush1.bf16.msra.mxu0 %v1820
        %1990 = vmatprep.subr.bf16.mxu0 %v1827
        %1991 = vmatpush1.bf16.msra.mxu0 %v1826
        %1992 = vmatprep.subr.bf16.mxu0 %v1833
        %1993 = vmatpush1.bf16.msra.mxu0 %v1832
        %1994 = vmatprep.subr.bf16.mxu0 %v1839
        %1995 = vmatpush1.bf16.msra.mxu0 %v1838
        %1996 = vmatprep.subr.bf16.mxu0 %v1845
        %1997 = vmatpush1.bf16.msra.mxu0 %v1844
        %1998 = vmatprep.subr.bf16.mxu0 %v1851
        %1999 = vmatpush1.bf16.msra.mxu0 %v1850
        %2000 = vmatprep.subr.bf16.mxu0 %v1857
        %2001 = vmatpush1.bf16.msra.mxu0 %v1856
        %2002 = vmatprep.subr.bf16.mxu0 %v1863
        %2003 = vmatpush1.bf16.msra.mxu0 %v1862
        %2004 = vmatprep.subr.bf16.mxu0 %v1869
        %2005 = vmatpush1.bf16.msra.mxu0 %v1868
        %2006 = vmatprep.subr.bf16.mxu0 %v1875
        %2007 = vmatpush1.bf16.msra.mxu0 %v1874
        %2008 = vmatprep.mubr.bf16.mxu0 %v1495
        %2009 = vmatmul.mubr.bf16.gmra.mrb[0].mxu0 %v1494
        %v2010 = vpop.f32.mrb[0].mxu0
        %v2011 = vadd.f32 0.0, %v2010
        %v2012 = vpop.f32.mrb[0].mxu0
        %v2013 = vadd.f32 0.0, %v2012
        %v2014 = vpop.f32.mrb[0].mxu0
        %v2015 = vpop.f32.mrb[0].mxu0
        %2016 = vdwg.mxu0
        %2017 = vmatprep.subr.bf16.mxu0 %v1787
        %2018 = vmatpush1.bf16.msra.mxu0 %v1786
        %2019 = vmatprep.subr.bf16.mxu0 %v1793
        %2020 = vmatpush1.bf16.msra.mxu0 %v1792
        %2021 = vmatprep.subr.bf16.mxu0 %v1799
        %2022 = vmatpush1.bf16.msra.mxu0 %v1798
        %2023 = vmatprep.subr.bf16.mxu0 %v1805
        %2024 = vmatpush1.bf16.msra.mxu0 %v1804
        %2025 = vmatprep.subr.bf16.mxu0 %v1811
        %2026 = vmatpush1.bf16.msra.mxu0 %v1810
        %2027 = vmatprep.subr.bf16.mxu0 %v1817
        %2028 = vmatpush1.bf16.msra.mxu0 %v1816
        %2029 = vmatprep.subr.bf16.mxu0 %v1823
        %2030 = vmatpush1.bf16.msra.mxu0 %v1822
        %2031 = vmatprep.subr.bf16.mxu0 %v1829
        %2032 = vmatpush1.bf16.msra.mxu0 %v1828
        %2033 = vmatprep.subr.bf16.mxu0 %v1835
        %2034 = vmatpush1.bf16.msra.mxu0 %v1834
        %2035 = vmatprep.subr.bf16.mxu0 %v1841
        %2036 = vmatpush1.bf16.msra.mxu0 %v1840
        %2037 = vmatprep.subr.bf16.mxu0 %v1847
        %2038 = vmatpush1.bf16.msra.mxu0 %v1846
        %2039 = vmatprep.subr.bf16.mxu0 %v1853
        %2040 = vmatpush1.bf16.msra.mxu0 %v1852
        %2041 = vmatprep.subr.bf16.mxu0 %v1859
        %2042 = vmatpush1.bf16.msra.mxu0 %v1858
        %2043 = vmatprep.subr.bf16.mxu0 %v1865
        %2044 = vmatpush1.bf16.msra.mxu0 %v1864
        %2045 = vmatprep.subr.bf16.mxu0 %v1871
        %2046 = vmatpush1.bf16.msra.mxu0 %v1870
        %2047 = vmatprep.subr.bf16.mxu0 %v1877
        %2048 = vmatpush1.bf16.msra.mxu0 %v1876
        %2049 = vmatprep.mubr.bf16.mxu0 %v1495
        %2050 = vmatmul.mubr.bf16.gmra.mrb[0].mxu0 %v1494
        %v2051 = vpop.f32.mrb[0].mxu0
        %v2052 = vadd.f32 0.0, %v2051
        %v2053 = vpop.f32.mrb[0].mxu0
        %v2054 = vadd.f32 0.0, %v2053
        %v2055 = vpop.f32.mrb[0].mxu0
        %v2056 = vpop.f32.mrb[0].mxu0
        %2057 = vdwg.mxu0
        %2058 = vmatprep.subr.bf16.mxu0 %v1789
        %2059 = vmatpush1.bf16.msra.mxu0 %v1788
        %2060 = vmatprep.subr.bf16.mxu0 %v1795
        %2061 = vmatpush1.bf16.msra.mxu0 %v1794
        %2062 = vmatprep.subr.bf16.mxu0 %v1801
        %2063 = vmatpush1.bf16.msra.mxu0 %v1800
        %2064 = vmatprep.subr.bf16.mxu0 %v1807
        %2065 = vmatpush1.bf16.msra.mxu0 %v1806
        %2066 = vmatprep.subr.bf16.mxu0 %v1813
        %2067 = vmatpush1.bf16.msra.mxu0 %v1812
        %2068 = vmatprep.subr.bf16.mxu0 %v1819
        %2069 = vmatpush1.bf16.msra.mxu0 %v1818
        %2070 = vmatprep.subr.bf16.mxu0 %v1825
        %2071 = vmatpush1.bf16.msra.mxu0 %v1824
        %2072 = vmatprep.subr.bf16.mxu0 %v1831
        %2073 = vmatpush1.bf16.msra.mxu0 %v1830
        %2074 = vmatprep.subr.bf16.mxu0 %v1837
        %2075 = vmatpush1.bf16.msra.mxu0 %v1836
        %2076 = vmatprep.subr.bf16.mxu0 %v1843
        %2077 = vmatpush1.bf16.msra.mxu0 %v1842
        %2078 = vmatprep.subr.bf16.mxu0 %v1849
        %2079 = vmatpush1.bf16.msra.mxu0 %v1848
        %2080 = vmatprep.subr.bf16.mxu0 %v1855
        %2081 = vmatpush1.bf16.msra.mxu0 %v1854
        %2082 = vmatprep.subr.bf16.mxu0 %v1861
        %2083 = vmatpush1.bf16.msra.mxu0 %v1860
        %2084 = vmatprep.subr.bf16.mxu0 %v1867
        %2085 = vmatpush1.bf16.msra.mxu0 %v1866
        %2086 = vmatprep.subr.bf16.mxu0 %v1873
        %2087 = vmatpush1.bf16.msra.mxu0 %v1872
        %2088 = vmatprep.subr.bf16.mxu0 %v1879
        %2089 = vmatpush1.bf16.msra.mxu0 %v1878
        %2090 = vmatprep.mubr.bf16.mxu0 %v1495
        %2091 = vmatmul.mubr.bf16.gmra.mrb[0].mxu0 %v1494
        %v2092 = vpop.f32.mrb[0].mxu0
        %v2093 = vadd.f32 0.0, %v2092
        %v2094 = vpop.f32.mrb[0].mxu0
        %v2095 = vadd.f32 0.0, %v2094
        %v2096 = vpop.f32.mrb[0].mxu0
        %v2097 = vpop.f32.mrb[0].mxu0
        %2098 = vdwg.mxu0
        %v2099 = vadd.f32 %v1488, %v2011
        %v2100 = vadd.f32 %v1489, %v2013
        %v2101 = vadd.f32 %v1490, %v2052
        %v2102 = vadd.f32 %v1491, %v2054
        %v2103 = vxor.u32 %v2099, 2147483648
        %v2104 = vxor.u32 %v2100, 2147483648
        %v2105 = vxor.u32 %v2101, 2147483648
        %v2106 = vxor.u32 %v2102, 2147483648
        %v2107 = vmul.f32 %v2103, 1.442695
        %v2108 = vpow.pop %v2107
        %v2109 = vmul.f32 %v2104, 1.442695
        %v2110 = vpow.pop %v2109
        %v2111 = vmul.f32 %v2105, 1.442695
        %v2112 = vpow.pop %v2111
        %v2113 = vmul.f32 %v2106, 1.442695
        %v2114 = vpow.pop %v2113
        %v2115 = vadd.f32 %v2108, 1.0
        %v2116 = vadd.f32 %v2110, 1.0
        %v2117 = vadd.f32 %v2112, 1.0
        %v2118 = vadd.f32 %v2114, 1.0
        %v2119 = vrcp.pop %v2115
        %v2120 = vmul.f32 1.0, %v2119
        %v2121 = vrcp.pop %v2116
        %v2122 = vmul.f32 1.0, %v2121
        %v2123 = vrcp.pop %v2117
        %v2124 = vmul.f32 1.0, %v2123
        %v2125 = vrcp.pop %v2118
        %v2126 = vmul.f32 1.0, %v2125
        %v2128 = vlaneseq
        %v2129 = vshrl.u32 %v2128, 7
        %v2130 = vsub.s32 0, %v2129
        %v2131 = vrot.slane %v1485, %v2130
        %v2132 = vlaneseq
        %v2133 = vshrl.u32 %v2132, 7
        %v2134 = vsub.s32 1, %v2133
        %v2135 = vrot.slane %v1485, %v2134
        %v2138 = vadd.f32 %v2093, %v2131
        %v2139 = vadd.f32 %v2095, %v2135
        %v2140 = vmul.f32 %v2120, %v2138
        %v2141 = vmul.f32 %v2122, %v2139
        %v2142 = vadd.f32 %v1492, %v2140
        %v2143 = vadd.f32 %v1493, %v2141
        %v2144 = vtanh.pop %v2142
        %v2145 = vtanh.pop %v2143
        %v2146 = vsub.f32 1.0, %v2124
        %v2147 = vsub.f32 1.0, %v2126
        %v2148 = vmul.f32 %v2146, %v2144
        %v2149 = vmul.f32 %v2147, %v2145
        %v2150 = vmul.f32 %v2124, %v1486
        %v2151 = vmul.f32 %v2126, %v1487
        %v2152 = vadd.f32 %v2148, %v2150
        %v2153 = vadd.f32 %v2149, %v2151
        %2154 = vst [vmem:[#allocation2] sm:$0xff] %v2152
        %2155 = vst [vmem:[#allocation2 + $0x8] sm:$0xff] %v2153
        %s2156 = scalar_lea.vmem [#allocation3], 48
        %v2157 = vld [vmem:[%s2156] sm:$0xff]
        %v2158 = vld [vmem:[%s2156 + $0x8] sm:$0xff]
        %v2159 = vld [vmem:[%s2156 + $0x10] sm:$0xff]
        %v2160 = vld [vmem:[%s2156 + $0x18] sm:$0xff]
        %v2161 = vld [vmem:[%s2156 + $0x20] sm:$0xff]
        %v2162 = vld [vmem:[%s2156 + $0x28] sm:$0xff]
        %v2163 = vpack.c.bf16 %v2152, %v2152
        %v2164 = vpack.c.bf16 %v2153, %v2153
        %2165 = vmatprep.subr.bf16.mxu0 %v1785
        %2166 = vmatpush1.bf16.msra.mxu0 %v1784
        %2167 = vmatprep.subr.bf16.mxu0 %v1791
        %2168 = vmatpush1.bf16.msra.mxu0 %v1790
        %2169 = vmatprep.subr.bf16.mxu0 %v1797
        %2170 = vmatpush1.bf16.msra.mxu0 %v1796
        %2171 = vmatprep.subr.bf16.mxu0 %v1803
        %2172 = vmatpush1.bf16.msra.mxu0 %v1802
        %2173 = vmatprep.subr.bf16.mxu0 %v1809
        %2174 = vmatpush1.bf16.msra.mxu0 %v1808
        %2175 = vmatprep.subr.bf16.mxu0 %v1815
        %2176 = vmatpush1.bf16.msra.mxu0 %v1814
        %2177 = vmatprep.subr.bf16.mxu0 %v1821
        %2178 = vmatpush1.bf16.msra.mxu0 %v1820
        %2179 = vmatprep.subr.bf16.mxu0 %v1827
        %2180 = vmatpush1.bf16.msra.mxu0 %v1826
        %2181 = vmatprep.subr.bf16.mxu0 %v1833
        %2182 = vmatpush1.bf16.msra.mxu0 %v1832
        %2183 = vmatprep.subr.bf16.mxu0 %v1839
        %2184 = vmatpush1.bf16.msra.mxu0 %v1838
        %2185 = vmatprep.subr.bf16.mxu0 %v1845
        %2186 = vmatpush1.bf16.msra.mxu0 %v1844
        %2187 = vmatprep.subr.bf16.mxu0 %v1851
        %2188 = vmatpush1.bf16.msra.mxu0 %v1850
        %2189 = vmatprep.subr.bf16.mxu0 %v1857
        %2190 = vmatpush1.bf16.msra.mxu0 %v1856
        %2191 = vmatprep.subr.bf16.mxu0 %v1863
        %2192 = vmatpush1.bf16.msra.mxu0 %v1862
        %2193 = vmatprep.subr.bf16.mxu0 %v1869
        %2194 = vmatpush1.bf16.msra.mxu0 %v1868
        %2195 = vmatprep.subr.bf16.mxu0 %v1875
        %2196 = vmatpush1.bf16.msra.mxu0 %v1874
        %2197 = vmatprep.mubr.bf16.mxu0 %v2164
        %2198 = vmatmul.mubr.bf16.gmra.mrb[0].mxu0 %v2163
        %v2199 = vpop.f32.mrb[0].mxu0
        %v2200 = vadd.f32 0.0, %v2199
        %v2201 = vpop.f32.mrb[0].mxu0
        %v2202 = vadd.f32 0.0, %v2201
        %v2203 = vpop.f32.mrb[0].mxu0
        %v2204 = vpop.f32.mrb[0].mxu0
        %2205 = vdwg.mxu0
        %2206 = vmatprep.subr.bf16.mxu0 %v1787
        %2207 = vmatpush1.bf16.msra.mxu0 %v1786
        %2208 = vmatprep.subr.bf16.mxu0 %v1793
        %2209 = vmatpush1.bf16.msra.mxu0 %v1792
        %2210 = vmatprep.subr.bf16.mxu0 %v1799
        %2211 = vmatpush1.bf16.msra.mxu0 %v1798
        %2212 = vmatprep.subr.bf16.mxu0 %v1805
        %2213 = vmatpush1.bf16.msra.mxu0 %v1804
        %2214 = vmatprep.subr.bf16.mxu0 %v1811
        %2215 = vmatpush1.bf16.msra.mxu0 %v1810
        %2216 = vmatprep.subr.bf16.mxu0 %v1817
        %2217 = vmatpush1.bf16.msra.mxu0 %v1816
        %2218 = vmatprep.subr.bf16.mxu0 %v1823
        %2219 = vmatpush1.bf16.msra.mxu0 %v1822
        %2220 = vmatprep.subr.bf16.mxu0 %v1829
        %2221 = vmatpush1.bf16.msra.mxu0 %v1828
        %2222 = vmatprep.subr.bf16.mxu0 %v1835
        %2223 = vmatpush1.bf16.msra.mxu0 %v1834
        %2224 = vmatprep.subr.bf16.mxu0 %v1841
        %2225 = vmatpush1.bf16.msra.mxu0 %v1840
        %2226 = vmatprep.subr.bf16.mxu0 %v1847
        %2227 = vmatpush1.bf16.msra.mxu0 %v1846
        %2228 = vmatprep.subr.bf16.mxu0 %v1853
        %2229 = vmatpush1.bf16.msra.mxu0 %v1852
        %2230 = vmatprep.subr.bf16.mxu0 %v1859
        %2231 = vmatpush1.bf16.msra.mxu0 %v1858
        %2232 = vmatprep.subr.bf16.mxu0 %v1865
        %2233 = vmatpush1.bf16.msra.mxu0 %v1864
        %2234 = vmatprep.subr.bf16.mxu0 %v1871
        %2235 = vmatpush1.bf16.msra.mxu0 %v1870
        %2236 = vmatprep.subr.bf16.mxu0 %v1877
        %2237 = vmatpush1.bf16.msra.mxu0 %v1876
        %2238 = vmatprep.mubr.bf16.mxu0 %v2164
        %2239 = vmatmul.mubr.bf16.gmra.mrb[0].mxu0 %v2163
        %v2240 = vpop.f32.mrb[0].mxu0
        %v2241 = vadd.f32 0.0, %v2240
        %v2242 = vpop.f32.mrb[0].mxu0
        %v2243 = vadd.f32 0.0, %v2242
        %v2244 = vpop.f32.mrb[0].mxu0
        %v2245 = vpop.f32.mrb[0].mxu0
        %2246 = vdwg.mxu0
        %2247 = vmatprep.subr.bf16.mxu0 %v1789
        %2248 = vmatpush1.bf16.msra.mxu0 %v1788
        %2249 = vmatprep.subr.bf16.mxu0 %v1795
        %2250 = vmatpush1.bf16.msra.mxu0 %v1794
        %2251 = vmatprep.subr.bf16.mxu0 %v1801
        %2252 = vmatpush1.bf16.msra.mxu0 %v1800
        %2253 = vmatprep.subr.bf16.mxu0 %v1807
        %2254 = vmatpush1.bf16.msra.mxu0 %v1806
        %2255 = vmatprep.subr.bf16.mxu0 %v1813
        %2256 = vmatpush1.bf16.msra.mxu0 %v1812
        %2257 = vmatprep.subr.bf16.mxu0 %v1819
        %2258 = vmatpush1.bf16.msra.mxu0 %v1818
        %2259 = vmatprep.subr.bf16.mxu0 %v1825
        %2260 = vmatpush1.bf16.msra.mxu0 %v1824
        %2261 = vmatprep.subr.bf16.mxu0 %v1831
        %2262 = vmatpush1.bf16.msra.mxu0 %v1830
        %2263 = vmatprep.subr.bf16.mxu0 %v1837
        %2264 = vmatpush1.bf16.msra.mxu0 %v1836
        %2265 = vmatprep.subr.bf16.mxu0 %v1843
        %2266 = vmatpush1.bf16.msra.mxu0 %v1842
        %2267 = vmatprep.subr.bf16.mxu0 %v1849
        %2268 = vmatpush1.bf16.msra.mxu0 %v1848
        %2269 = vmatprep.subr.bf16.mxu0 %v1855
        %2270 = vmatpush1.bf16.msra.mxu0 %v1854
        %2271 = vmatprep.subr.bf16.mxu0 %v1861
        %2272 = vmatpush1.bf16.msra.mxu0 %v1860
        %2273 = vmatprep.subr.bf16.mxu0 %v1867
        %2274 = vmatpush1.bf16.msra.mxu0 %v1866
        %2275 = vmatprep.subr.bf16.mxu0 %v1873
        %2276 = vmatpush1.bf16.msra.mxu0 %v1872
        %2277 = vmatprep.subr.bf16.mxu0 %v1879
        %2278 = vmatpush1.bf16.msra.mxu0 %v1878
        %2279 = vmatprep.mubr.bf16.mxu0 %v2164
        %2280 = vmatmul.mubr.bf16.gmra.mrb[0].mxu0 %v2163
        %v2281 = vpop.f32.mrb[0].mxu0
        %v2282 = vadd.f32 0.0, %v2281
        %v2283 = vpop.f32.mrb[0].mxu0
        %v2284 = vadd.f32 0.0, %v2283
        %v2285 = vpop.f32.mrb[0].mxu0
        %v2286 = vpop.f32.mrb[0].mxu0
        %2287 = vdwg.mxu0
        %v2288 = vadd.f32 %v2157, %v2200
        %v2289 = vadd.f32 %v2158, %v2202
        %v2290 = vadd.f32 %v2159, %v2241
        %v2291 = vadd.f32 %v2160, %v2243
        %v2292 = vxor.u32 %v2288, 2147483648
        %v2293 = vxor.u32 %v2289, 2147483648
        %v2294 = vxor.u32 %v2290, 2147483648
        %v2295 = vxor.u32 %v2291, 2147483648
        %v2296 = vmul.f32 %v2292, 1.442695
        %v2297 = vpow.pop %v2296
        %v2298 = vmul.f32 %v2293, 1.442695
        %v2299 = vpow.pop %v2298
        %v2300 = vmul.f32 %v2294, 1.442695
        %v2301 = vpow.pop %v2300
        %v2302 = vmul.f32 %v2295, 1.442695
        %v2303 = vpow.pop %v2302
        %v2304 = vadd.f32 %v2297, 1.0
        %v2305 = vadd.f32 %v2299, 1.0
        %v2306 = vadd.f32 %v2301, 1.0
        %v2307 = vadd.f32 %v2303, 1.0
        %v2308 = vrcp.pop %v2304
        %v2309 = vmul.f32 1.0, %v2308
        %v2310 = vrcp.pop %v2305
        %v2311 = vmul.f32 1.0, %v2310
        %v2312 = vrcp.pop %v2306
        %v2313 = vmul.f32 1.0, %v2312
        %v2314 = vrcp.pop %v2307
        %v2315 = vmul.f32 1.0, %v2314
        %v2316 = vadd.f32 %v2282, %v2131
        %v2317 = vadd.f32 %v2284, %v2135
        %v2318 = vmul.f32 %v2309, %v2316
        %v2319 = vmul.f32 %v2311, %v2317
        %v2320 = vadd.f32 %v2161, %v2318
        %v2321 = vadd.f32 %v2162, %v2319
        %v2322 = vtanh.pop %v2320
        %v2323 = vtanh.pop %v2321
        %v2324 = vsub.f32 1.0, %v2313
        %v2325 = vsub.f32 1.0, %v2315
        %v2326 = vmul.f32 %v2324, %v2322
        %v2327 = vmul.f32 %v2325, %v2323
        %v2328 = vmul.f32 %v2313, %v2152
        %v2329 = vmul.f32 %v2315, %v2153
        %v2330 = vadd.f32 %v2326, %v2328
        %v2331 = vadd.f32 %v2327, %v2329
        %s2332 = scalar_lea.vmem [#allocation2], 16
        %2333 = vst [vmem:[%s2332] sm:$0xff] %v2330
        %2334 = vst [vmem:[%s2332 + $0x8] sm:$0xff] %v2331
        %s2335 = scalar_lea.vmem [#allocation3], 96
        %v2336 = vld [vmem:[%s2335] sm:$0xff]
        %v2337 = vld [vmem:[%s2335 + $0x8] sm:$0xff]
        %v2338 = vld [vmem:[%s2335 + $0x10] sm:$0xff]
        %v2339 = vld [vmem:[%s2335 + $0x18] sm:$0xff]
        %v2340 = vld [vmem:[%s2335 + $0x20] sm:$0xff]
        %v2341 = vld [vmem:[%s2335 + $0x28] sm:$0xff]
        %v2342 = vpack.c.bf16 %v2330, %v2330
        %v2343 = vpack.c.bf16 %v2331, %v2331
        %2344 = vmatprep.subr.bf16.mxu0 %v1785
        %2345 = vmatpush1.bf16.msra.mxu0 %v1784
        %2346 = vmatprep.subr.bf16.mxu0 %v1791
        %2347 = vmatpush1.bf16.msra.mxu0 %v1790
        %2348 = vmatprep.subr.bf16.mxu0 %v1797
        %2349 = vmatpush1.bf16.msra.mxu0 %v1796
        %2350 = vmatprep.subr.bf16.mxu0 %v1803
        %2351 = vmatpush1.bf16.msra.mxu0 %v1802
        %2352 = vmatprep.subr.bf16.mxu0 %v1809
        %2353 = vmatpush1.bf16.msra.mxu0 %v1808
        %2354 = vmatprep.subr.bf16.mxu0 %v1815
        %2355 = vmatpush1.bf16.msra.mxu0 %v1814
        %2356 = vmatprep.subr.bf16.mxu0 %v1821
        %2357 = vmatpush1.bf16.msra.mxu0 %v1820
        %2358 = vmatprep.subr.bf16.mxu0 %v1827
        %2359 = vmatpush1.bf16.msra.mxu0 %v1826
        %2360 = vmatprep.subr.bf16.mxu0 %v1833
        %2361 = vmatpush1.bf16.msra.mxu0 %v1832
        %2362 = vmatprep.subr.bf16.mxu0 %v1839
        %2363 = vmatpush1.bf16.msra.mxu0 %v1838
        %2364 = vmatprep.subr.bf16.mxu0 %v1845
        %2365 = vmatpush1.bf16.msra.mxu0 %v1844
        %2366 = vmatprep.subr.bf16.mxu0 %v1851
        %2367 = vmatpush1.bf16.msra.mxu0 %v1850
        %2368 = vmatprep.subr.bf16.mxu0 %v1857
        %2369 = vmatpush1.bf16.msra.mxu0 %v1856
        %2370 = vmatprep.subr.bf16.mxu0 %v1863
        %2371 = vmatpush1.bf16.msra.mxu0 %v1862
        %2372 = vmatprep.subr.bf16.mxu0 %v1869
        %2373 = vmatpush1.bf16.msra.mxu0 %v1868
        %2374 = vmatprep.subr.bf16.mxu0 %v1875
        %2375 = vmatpush1.bf16.msra.mxu0 %v1874
        %2376 = vmatprep.mubr.bf16.mxu0 %v2343
        %2377 = vmatmul.mubr.bf16.gmra.mrb[0].mxu0 %v2342
        %v2378 = vpop.f32.mrb[0].mxu0
        %v2379 = vadd.f32 0.0, %v2378
        %v2380 = vpop.f32.mrb[0].mxu0
        %v2381 = vadd.f32 0.0, %v2380
        %v2382 = vpop.f32.mrb[0].mxu0
        %v2383 = vpop.f32.mrb[0].mxu0
        %2384 = vdwg.mxu0
        %2385 = vmatprep.subr.bf16.mxu0 %v1787
        %2386 = vmatpush1.bf16.msra.mxu0 %v1786
        %2387 = vmatprep.subr.bf16.mxu0 %v1793
        %2388 = vmatpush1.bf16.msra.mxu0 %v1792
        %2389 = vmatprep.subr.bf16.mxu0 %v1799
        %2390 = vmatpush1.bf16.msra.mxu0 %v1798
        %2391 = vmatprep.subr.bf16.mxu0 %v1805
        %2392 = vmatpush1.bf16.msra.mxu0 %v1804
        %2393 = vmatprep.subr.bf16.mxu0 %v1811
        %2394 = vmatpush1.bf16.msra.mxu0 %v1810
        %2395 = vmatprep.subr.bf16.mxu0 %v1817
        %2396 = vmatpush1.bf16.msra.mxu0 %v1816
        %2397 = vmatprep.subr.bf16.mxu0 %v1823
        %2398 = vmatpush1.bf16.msra.mxu0 %v1822
        %2399 = vmatprep.subr.bf16.mxu0 %v1829
        %2400 = vmatpush1.bf16.msra.mxu0 %v1828
        %2401 = vmatprep.subr.bf16.mxu0 %v1835
        %2402 = vmatpush1.bf16.msra.mxu0 %v1834
        %2403 = vmatprep.subr.bf16.mxu0 %v1841
        %2404 = vmatpush1.bf16.msra.mxu0 %v1840
        %2405 = vmatprep.subr.bf16.mxu0 %v1847
        %2406 = vmatpush1.bf16.msra.mxu0 %v1846
        %2407 = vmatprep.subr.bf16.mxu0 %v1853
        %2408 = vmatpush1.bf16.msra.mxu0 %v1852
        %2409 = vmatprep.subr.bf16.mxu0 %v1859
        %2410 = vmatpush1.bf16.msra.mxu0 %v1858
        %2411 = vmatprep.subr.bf16.mxu0 %v1865
        %2412 = vmatpush1.bf16.msra.mxu0 %v1864
        %2413 = vmatprep.subr.bf16.mxu0 %v1871
        %2414 = vmatpush1.bf16.msra.mxu0 %v1870
        %2415 = vmatprep.subr.bf16.mxu0 %v1877
        %2416 = vmatpush1.bf16.msra.mxu0 %v1876
        %2417 = vmatprep.mubr.bf16.mxu0 %v2343
        %2418 = vmatmul.mubr.bf16.gmra.mrb[0].mxu0 %v2342
        %v2419 = vpop.f32.mrb[0].mxu0
        %v2420 = vadd.f32 0.0, %v2419
        %v2421 = vpop.f32.mrb[0].mxu0
        %v2422 = vadd.f32 0.0, %v2421
        %v2423 = vpop.f32.mrb[0].mxu0
        %v2424 = vpop.f32.mrb[0].mxu0
        %2425 = vdwg.mxu0
        %2426 = vmatprep.subr.bf16.mxu0 %v1789
        %2427 = vmatpush1.bf16.msra.mxu0 %v1788
        %2428 = vmatprep.subr.bf16.mxu0 %v1795
        %2429 = vmatpush1.bf16.msra.mxu0 %v1794
        %2430 = vmatprep.subr.bf16.mxu0 %v1801
        %2431 = vmatpush1.bf16.msra.mxu0 %v1800
        %2432 = vmatprep.subr.bf16.mxu0 %v1807
        %2433 = vmatpush1.bf16.msra.mxu0 %v1806
        %2434 = vmatprep.subr.bf16.mxu0 %v1813
        %2435 = vmatpush1.bf16.msra.mxu0 %v1812
        %2436 = vmatprep.subr.bf16.mxu0 %v1819
        %2437 = vmatpush1.bf16.msra.mxu0 %v1818
        %2438 = vmatprep.subr.bf16.mxu0 %v1825
        %2439 = vmatpush1.bf16.msra.mxu0 %v1824
        %2440 = vmatprep.subr.bf16.mxu0 %v1831
        %2441 = vmatpush1.bf16.msra.mxu0 %v1830
        %2442 = vmatprep.subr.bf16.mxu0 %v1837
        %2443 = vmatpush1.bf16.msra.mxu0 %v1836
        %2444 = vmatprep.subr.bf16.mxu0 %v1843
        %2445 = vmatpush1.bf16.msra.mxu0 %v1842
        %2446 = vmatprep.subr.bf16.mxu0 %v1849
        %2447 = vmatpush1.bf16.msra.mxu0 %v1848
        %2448 = vmatprep.subr.bf16.mxu0 %v1855
        %2449 = vmatpush1.bf16.msra.mxu0 %v1854
        %2450 = vmatprep.subr.bf16.mxu0 %v1861
        %2451 = vmatpush1.bf16.msra.mxu0 %v1860
        %2452 = vmatprep.subr.bf16.mxu0 %v1867
        %2453 = vmatpush1.bf16.msra.mxu0 %v1866
        %2454 = vmatprep.subr.bf16.mxu0 %v1873
        %2455 = vmatpush1.bf16.msra.mxu0 %v1872
        %2456 = vmatprep.subr.bf16.mxu0 %v1879
        %2457 = vmatpush1.bf16.msra.mxu0 %v1878
        %2458 = vmatprep.mubr.bf16.mxu0 %v2343
        %2459 = vmatmul.mubr.bf16.gmra.mrb[0].mxu0 %v2342
        %v2460 = vpop.f32.mrb[0].mxu0
        %v2461 = vadd.f32 0.0, %v2460
        %v2462 = vpop.f32.mrb[0].mxu0
        %v2463 = vadd.f32 0.0, %v2462
        %v2464 = vpop.f32.mrb[0].mxu0
        %v2465 = vpop.f32.mrb[0].mxu0
        %2466 = vdwg.mxu0
        %v2467 = vadd.f32 %v2336, %v2379
        %v2468 = vadd.f32 %v2337, %v2381
        %v2469 = vadd.f32 %v2338, %v2420
        %v2470 = vadd.f32 %v2339, %v2422
        %v2471 = vxor.u32 %v2467, 2147483648
        %v2472 = vxor.u32 %v2468, 2147483648
        %v2473 = vxor.u32 %v2469, 2147483648
        %v2474 = vxor.u32 %v2470, 2147483648
        %v2475 = vmul.f32 %v2471, 1.442695
        %v2476 = vpow.pop %v2475
        %v2477 = vmul.f32 %v2472, 1.442695
        %v2478 = vpow.pop %v2477
        %v2479 = vmul.f32 %v2473, 1.442695
        %v2480 = vpow.pop %v2479
        %v2481 = vmul.f32 %v2474, 1.442695
        %v2482 = vpow.pop %v2481
        %v2483 = vadd.f32 %v2476, 1.0
        %v2484 = vadd.f32 %v2478, 1.0
        %v2485 = vadd.f32 %v2480, 1.0
        %v2486 = vadd.f32 %v2482, 1.0
        %v2487 = vrcp.pop %v2483
        %v2488 = vmul.f32 1.0, %v2487
        %v2489 = vrcp.pop %v2484
        %v2490 = vmul.f32 1.0, %v2489
        %v2491 = vrcp.pop %v2485
        %v2492 = vmul.f32 1.0, %v2491
        %v2493 = vrcp.pop %v2486
        %v2494 = vmul.f32 1.0, %v2493
        %v2495 = vadd.f32 %v2461, %v2131
        %v2496 = vadd.f32 %v2463, %v2135
        %v2497 = vmul.f32 %v2488, %v2495
        %v2498 = vmul.f32 %v2490, %v2496
        %v2499 = vadd.f32 %v2340, %v2497
        %v2500 = vadd.f32 %v2341, %v2498
        %v2501 = vtanh.pop %v2499
        %v2502 = vtanh.pop %v2500
        %v2503 = vsub.f32 1.0, %v2492
        %v2504 = vsub.f32 1.0, %v2494
        %v2505 = vmul.f32 %v2503, %v2501
        %v2506 = vmul.f32 %v2504, %v2502
        %v2507 = vmul.f32 %v2492, %v2330
        %v2508 = vmul.f32 %v2494, %v2331
        %v2509 = vadd.f32 %v2505, %v2507
        %v2510 = vadd.f32 %v2506, %v2508
        %s2511 = scalar_lea.vmem [#allocation2], 32
        %2512 = vst [vmem:[%s2511] sm:$0xff] %v2509
        %2513 = vst [vmem:[%s2511 + $0x8] sm:$0xff] %v2510
        %s2514 = scalar_lea.vmem [#allocation3], 144
        %v2515 = vld [vmem:[%s2514] sm:$0xff]
        %v2516 = vld [vmem:[%s2514 + $0x8] sm:$0xff]
        %v2517 = vld [vmem:[%s2514 + $0x10] sm:$0xff]
        %v2518 = vld [vmem:[%s2514 + $0x18] sm:$0xff]
        %v2519 = vld [vmem:[%s2514 + $0x20] sm:$0xff]
        %v2520 = vld [vmem:[%s2514 + $0x28] sm:$0xff]
        %v2521 = vpack.c.bf16 %v2509, %v2509
        %v2522 = vpack.c.bf16 %v2510, %v2510
        %2523 = vmatprep.subr.bf16.mxu0 %v1785
        %2524 = vmatpush1.bf16.msra.mxu0 %v1784
        %2525 = vmatprep.subr.bf16.mxu0 %v1791
        %2526 = vmatpush1.bf16.msra.mxu0 %v1790
        %2527 = vmatprep.subr.bf16.mxu0 %v1797
        %2528 = vmatpush1.bf16.msra.mxu0 %v1796
        %2529 = vmatprep.subr.bf16.mxu0 %v1803
        %2530 = vmatpush1.bf16.msra.mxu0 %v1802
        %2531 = vmatprep.subr.bf16.mxu0 %v1809
        %2532 = vmatpush1.bf16.msra.mxu0 %v1808
        %2533 = vmatprep.subr.bf16.mxu0 %v1815
        %2534 = vmatpush1.bf16.msra.mxu0 %v1814
        %2535 = vmatprep.subr.bf16.mxu0 %v1821
        %2536 = vmatpush1.bf16.msra.mxu0 %v1820
        %2537 = vmatprep.subr.bf16.mxu0 %v1827
        %2538 = vmatpush1.bf16.msra.mxu0 %v1826
        %2539 = vmatprep.subr.bf16.mxu0 %v1833
        %2540 = vmatpush1.bf16.msra.mxu0 %v1832
        %2541 = vmatprep.subr.bf16.mxu0 %v1839
        %2542 = vmatpush1.bf16.msra.mxu0 %v1838
        %2543 = vmatprep.subr.bf16.mxu0 %v1845
        %2544 = vmatpush1.bf16.msra.mxu0 %v1844
        %2545 = vmatprep.subr.bf16.mxu0 %v1851
        %2546 = vmatpush1.bf16.msra.mxu0 %v1850
        %2547 = vmatprep.subr.bf16.mxu0 %v1857
        %2548 = vmatpush1.bf16.msra.mxu0 %v1856
        %2549 = vmatprep.subr.bf16.mxu0 %v1863
        %2550 = vmatpush1.bf16.msra.mxu0 %v1862
        %2551 = vmatprep.subr.bf16.mxu0 %v1869
        %2552 = vmatpush1.bf16.msra.mxu0 %v1868
        %2553 = vmatprep.subr.bf16.mxu0 %v1875
        %2554 = vmatpush1.bf16.msra.mxu0 %v1874
        %2555 = vmatprep.mubr.bf16.mxu0 %v2522
        %2556 = vmatmul.mubr.bf16.gmra.mrb[0].mxu0 %v2521
        %v2557 = vpop.f32.mrb[0].mxu0
        %v2558 = vadd.f32 0.0, %v2557
        %v2559 = vpop.f32.mrb[0].mxu0
        %v2560 = vadd.f32 0.0, %v2559
        %v2561 = vpop.f32.mrb[0].mxu0
        %v2562 = vpop.f32.mrb[0].mxu0
        %2563 = vdwg.mxu0
        %2564 = vmatprep.subr.bf16.mxu0 %v1787
        %2565 = vmatpush1.bf16.msra.mxu0 %v1786
        %2566 = vmatprep.subr.bf16.mxu0 %v1793
        %2567 = vmatpush1.bf16.msra.mxu0 %v1792
        %2568 = vmatprep.subr.bf16.mxu0 %v1799
        %2569 = vmatpush1.bf16.msra.mxu0 %v1798
        %2570 = vmatprep.subr.bf16.mxu0 %v1805
        %2571 = vmatpush1.bf16.msra.mxu0 %v1804
        %2572 = vmatprep.subr.bf16.mxu0 %v1811
        %2573 = vmatpush1.bf16.msra.mxu0 %v1810
        %2574 = vmatprep.subr.bf16.mxu0 %v1817
        %2575 = vmatpush1.bf16.msra.mxu0 %v1816
        %2576 = vmatprep.subr.bf16.mxu0 %v1823
        %2577 = vmatpush1.bf16.msra.mxu0 %v1822
        %2578 = vmatprep.subr.bf16.mxu0 %v1829
        %2579 = vmatpush1.bf16.msra.mxu0 %v1828
        %2580 = vmatprep.subr.bf16.mxu0 %v1835
        %2581 = vmatpush1.bf16.msra.mxu0 %v1834
        %2582 = vmatprep.subr.bf16.mxu0 %v1841
        %2583 = vmatpush1.bf16.msra.mxu0 %v1840
        %2584 = vmatprep.subr.bf16.mxu0 %v1847
        %2585 = vmatpush1.bf16.msra.mxu0 %v1846
        %2586 = vmatprep.subr.bf16.mxu0 %v1853
        %2587 = vmatpush1.bf16.msra.mxu0 %v1852
        %2588 = vmatprep.subr.bf16.mxu0 %v1859
        %2589 = vmatpush1.bf16.msra.mxu0 %v1858
        %2590 = vmatprep.subr.bf16.mxu0 %v1865
        %2591 = vmatpush1.bf16.msra.mxu0 %v1864
        %2592 = vmatprep.subr.bf16.mxu0 %v1871
        %2593 = vmatpush1.bf16.msra.mxu0 %v1870
        %2594 = vmatprep.subr.bf16.mxu0 %v1877
        %2595 = vmatpush1.bf16.msra.mxu0 %v1876
        %2596 = vmatprep.mubr.bf16.mxu0 %v2522
        %2597 = vmatmul.mubr.bf16.gmra.mrb[0].mxu0 %v2521
        %v2598 = vpop.f32.mrb[0].mxu0
        %v2599 = vadd.f32 0.0, %v2598
        %v2600 = vpop.f32.mrb[0].mxu0
        %v2601 = vadd.f32 0.0, %v2600
        %v2602 = vpop.f32.mrb[0].mxu0
        %v2603 = vpop.f32.mrb[0].mxu0
        %2604 = vdwg.mxu0
        %2605 = vmatprep.subr.bf16.mxu0 %v1789
        %2606 = vmatpush1.bf16.msra.mxu0 %v1788
        %2607 = vmatprep.subr.bf16.mxu0 %v1795
        %2608 = vmatpush1.bf16.msra.mxu0 %v1794
        %2609 = vmatprep.subr.bf16.mxu0 %v1801
        %2610 = vmatpush1.bf16.msra.mxu0 %v1800
        %2611 = vmatprep.subr.bf16.mxu0 %v1807
        %2612 = vmatpush1.bf16.msra.mxu0 %v1806
        %2613 = vmatprep.subr.bf16.mxu0 %v1813
        %2614 = vmatpush1.bf16.msra.mxu0 %v1812
        %2615 = vmatprep.subr.bf16.mxu0 %v1819
        %2616 = vmatpush1.bf16.msra.mxu0 %v1818
        %2617 = vmatprep.subr.bf16.mxu0 %v1825
        %2618 = vmatpush1.bf16.msra.mxu0 %v1824
        %2619 = vmatprep.subr.bf16.mxu0 %v1831
        %2620 = vmatpush1.bf16.msra.mxu0 %v1830
        %2621 = vmatprep.subr.bf16.mxu0 %v1837
        %2622 = vmatpush1.bf16.msra.mxu0 %v1836
        %2623 = vmatprep.subr.bf16.mxu0 %v1843
        %2624 = vmatpush1.bf16.msra.mxu0 %v1842
        %2625 = vmatprep.subr.bf16.mxu0 %v1849
        %2626 = vmatpush1.bf16.msra.mxu0 %v1848
        %2627 = vmatprep.subr.bf16.mxu0 %v1855
        %2628 = vmatpush1.bf16.msra.mxu0 %v1854
        %2629 = vmatprep.subr.bf16.mxu0 %v1861
        %2630 = vmatpush1.bf16.msra.mxu0 %v1860
        %2631 = vmatprep.subr.bf16.mxu0 %v1867
        %2632 = vmatpush1.bf16.msra.mxu0 %v1866
        %2633 = vmatprep.subr.bf16.mxu0 %v1873
        %2634 = vmatpush1.bf16.msra.mxu0 %v1872
        %2635 = vmatprep.subr.bf16.mxu0 %v1879
        %2636 = vmatpush1.bf16.msra.mxu0 %v1878
        %2637 = vmatprep.mubr.bf16.mxu0 %v2522
        %2638 = vmatmul.mubr.bf16.gmra.mrb[0].mxu0 %v2521
        %v2639 = vpop.f32.mrb[0].mxu0
        %v2640 = vadd.f32 0.0, %v2639
        %v2641 = vpop.f32.mrb[0].mxu0
        %v2642 = vadd.f32 0.0, %v2641
        %v2643 = vpop.f32.mrb[0].mxu0
        %v2644 = vpop.f32.mrb[0].mxu0
        %2645 = vdwg.mxu0
        %v2646 = vadd.f32 %v2515, %v2558
        %v2647 = vadd.f32 %v2516, %v2560
        %v2648 = vadd.f32 %v2517, %v2599
        %v2649 = vadd.f32 %v2518, %v2601
        %v2650 = vxor.u32 %v2646, 2147483648
        %v2651 = vxor.u32 %v2647, 2147483648
        %v2652 = vxor.u32 %v2648, 2147483648
        %v2653 = vxor.u32 %v2649, 2147483648
        %v2654 = vmul.f32 %v2650, 1.442695
        %v2655 = vpow.pop %v2654
        %v2656 = vmul.f32 %v2651, 1.442695
        %v2657 = vpow.pop %v2656
        %v2658 = vmul.f32 %v2652, 1.442695
        %v2659 = vpow.pop %v2658
        %v2660 = vmul.f32 %v2653, 1.442695
        %v2661 = vpow.pop %v2660
        %v2662 = vadd.f32 %v2655, 1.0
        %v2663 = vadd.f32 %v2657, 1.0
        %v2664 = vadd.f32 %v2659, 1.0
        %v2665 = vadd.f32 %v2661, 1.0
        %v2666 = vrcp.pop %v2662
        %v2667 = vmul.f32 1.0, %v2666
        %v2668 = vrcp.pop %v2663
        %v2669 = vmul.f32 1.0, %v2668
        %v2670 = vrcp.pop %v2664
        %v2671 = vmul.f32 1.0, %v2670
        %v2672 = vrcp.pop %v2665
        %v2673 = vmul.f32 1.0, %v2672
        %v2674 = vadd.f32 %v2640, %v2131
        %v2675 = vadd.f32 %v2642, %v2135
        %v2676 = vmul.f32 %v2667, %v2674
        %v2677 = vmul.f32 %v2669, %v2675
        %v2678 = vadd.f32 %v2519, %v2676
        %v2679 = vadd.f32 %v2520, %v2677
        %v2680 = vtanh.pop %v2678
        %v2681 = vtanh.pop %v2679
        %v2682 = vsub.f32 1.0, %v2671
        %v2683 = vsub.f32 1.0, %v2673
        %v2684 = vmul.f32 %v2682, %v2680
        %v2685 = vmul.f32 %v2683, %v2681
        %v2686 = vmul.f32 %v2671, %v2509
        %v2687 = vmul.f32 %v2673, %v2510
        %v2688 = vadd.f32 %v2684, %v2686
        %v2689 = vadd.f32 %v2685, %v2687
        %s2690 = scalar_lea.vmem [#allocation2], 48
        %2691 = vst [vmem:[%s2690] sm:$0xff] %v2688
        %2692 = vst [vmem:[%s2690 + $0x8] sm:$0xff] %v2689
        %s2693 = scalar_lea.vmem [#allocation3], 192
        %v2694 = vld [vmem:[%s2693] sm:$0xff]
        %v2695 = vld [vmem:[%s2693 + $0x8] sm:$0xff]
        %v2696 = vld [vmem:[%s2693 + $0x10] sm:$0xff]
        %v2697 = vld [vmem:[%s2693 + $0x18] sm:$0xff]
        %v2698 = vld [vmem:[%s2693 + $0x20] sm:$0xff]
        %v2699 = vld [vmem:[%s2693 + $0x28] sm:$0xff]
        %v2700 = vpack.c.bf16 %v2688, %v2688
        %v2701 = vpack.c.bf16 %v2689, %v2689
        %2702 = vmatprep.subr.bf16.mxu0 %v1785
        %2703 = vmatpush1.bf16.msra.mxu0 %v1784
        %2704 = vmatprep.subr.bf16.mxu0 %v1791
        %2705 = vmatpush1.bf16.msra.mxu0 %v1790
        %2706 = vmatprep.subr.bf16.mxu0 %v1797
        %2707 = vmatpush1.bf16.msra.mxu0 %v1796
        %2708 = vmatprep.subr.bf16.mxu0 %v1803
        %2709 = vmatpush1.bf16.msra.mxu0 %v1802
        %2710 = vmatprep.subr.bf16.mxu0 %v1809
        %2711 = vmatpush1.bf16.msra.mxu0 %v1808
        %2712 = vmatprep.subr.bf16.mxu0 %v1815
        %2713 = vmatpush1.bf16.msra.mxu0 %v1814
        %2714 = vmatprep.subr.bf16.mxu0 %v1821
        %2715 = vmatpush1.bf16.msra.mxu0 %v1820
        %2716 = vmatprep.subr.bf16.mxu0 %v1827
        %2717 = vmatpush1.bf16.msra.mxu0 %v1826
        %2718 = vmatprep.subr.bf16.mxu0 %v1833
        %2719 = vmatpush1.bf16.msra.mxu0 %v1832
        %2720 = vmatprep.subr.bf16.mxu0 %v1839
        %2721 = vmatpush1.bf16.msra.mxu0 %v1838
        %2722 = vmatprep.subr.bf16.mxu0 %v1845
        %2723 = vmatpush1.bf16.msra.mxu0 %v1844
        %2724 = vmatprep.subr.bf16.mxu0 %v1851
        %2725 = vmatpush1.bf16.msra.mxu0 %v1850
        %2726 = vmatprep.subr.bf16.mxu0 %v1857
        %2727 = vmatpush1.bf16.msra.mxu0 %v1856
        %2728 = vmatprep.subr.bf16.mxu0 %v1863
        %2729 = vmatpush1.bf16.msra.mxu0 %v1862
        %2730 = vmatprep.subr.bf16.mxu0 %v1869
        %2731 = vmatpush1.bf16.msra.mxu0 %v1868
        %2732 = vmatprep.subr.bf16.mxu0 %v1875
        %2733 = vmatpush1.bf16.msra.mxu0 %v1874
        %2734 = vmatprep.mubr.bf16.mxu0 %v2701
        %2735 = vmatmul.mubr.bf16.gmra.mrb[0].mxu0 %v2700
        %v2736 = vpop.f32.mrb[0].mxu0
        %v2737 = vadd.f32 0.0, %v2736
        %v2738 = vpop.f32.mrb[0].mxu0
        %v2739 = vadd.f32 0.0, %v2738
        %v2740 = vpop.f32.mrb[0].mxu0
        %v2741 = vpop.f32.mrb[0].mxu0
        %2742 = vdwg.mxu0
        %2743 = vmatprep.subr.bf16.mxu0 %v1787
        %2744 = vmatpush1.bf16.msra.mxu0 %v1786
        %2745 = vmatprep.subr.bf16.mxu0 %v1793
        %2746 = vmatpush1.bf16.msra.mxu0 %v1792
        %2747 = vmatprep.subr.bf16.mxu0 %v1799
        %2748 = vmatpush1.bf16.msra.mxu0 %v1798
        %2749 = vmatprep.subr.bf16.mxu0 %v1805
        %2750 = vmatpush1.bf16.msra.mxu0 %v1804
        %2751 = vmatprep.subr.bf16.mxu0 %v1811
        %2752 = vmatpush1.bf16.msra.mxu0 %v1810
        %2753 = vmatprep.subr.bf16.mxu0 %v1817
        %2754 = vmatpush1.bf16.msra.mxu0 %v1816
        %2755 = vmatprep.subr.bf16.mxu0 %v1823
        %2756 = vmatpush1.bf16.msra.mxu0 %v1822
        %2757 = vmatprep.subr.bf16.mxu0 %v1829
        %2758 = vmatpush1.bf16.msra.mxu0 %v1828
        %2759 = vmatprep.subr.bf16.mxu0 %v1835
        %2760 = vmatpush1.bf16.msra.mxu0 %v1834
        %2761 = vmatprep.subr.bf16.mxu0 %v1841
        %2762 = vmatpush1.bf16.msra.mxu0 %v1840
        %2763 = vmatprep.subr.bf16.mxu0 %v1847
        %2764 = vmatpush1.bf16.msra.mxu0 %v1846
        %2765 = vmatprep.subr.bf16.mxu0 %v1853
        %2766 = vmatpush1.bf16.msra.mxu0 %v1852
        %2767 = vmatprep.subr.bf16.mxu0 %v1859
        %2768 = vmatpush1.bf16.msra.mxu0 %v1858
        %2769 = vmatprep.subr.bf16.mxu0 %v1865
        %2770 = vmatpush1.bf16.msra.mxu0 %v1864
        %2771 = vmatprep.subr.bf16.mxu0 %v1871
        %2772 = vmatpush1.bf16.msra.mxu0 %v1870
        %2773 = vmatprep.subr.bf16.mxu0 %v1877
        %2774 = vmatpush1.bf16.msra.mxu0 %v1876
        %2775 = vmatprep.mubr.bf16.mxu0 %v2701
        %2776 = vmatmul.mubr.bf16.gmra.mrb[0].mxu0 %v2700
        %v2777 = vpop.f32.mrb[0].mxu0
        %v2778 = vadd.f32 0.0, %v2777
        %v2779 = vpop.f32.mrb[0].mxu0
        %v2780 = vadd.f32 0.0, %v2779
        %v2781 = vpop.f32.mrb[0].mxu0
        %v2782 = vpop.f32.mrb[0].mxu0
        %2783 = vdwg.mxu0
        %2784 = vmatprep.subr.bf16.mxu0 %v1789
        %2785 = vmatpush1.bf16.msra.mxu0 %v1788
        %2786 = vmatprep.subr.bf16.mxu0 %v1795
        %2787 = vmatpush1.bf16.msra.mxu0 %v1794
        %2788 = vmatprep.subr.bf16.mxu0 %v1801
        %2789 = vmatpush1.bf16.msra.mxu0 %v1800
        %2790 = vmatprep.subr.bf16.mxu0 %v1807
        %2791 = vmatpush1.bf16.msra.mxu0 %v1806
        %2792 = vmatprep.subr.bf16.mxu0 %v1813
        %2793 = vmatpush1.bf16.msra.mxu0 %v1812
        %2794 = vmatprep.subr.bf16.mxu0 %v1819
        %2795 = vmatpush1.bf16.msra.mxu0 %v1818
        %2796 = vmatprep.subr.bf16.mxu0 %v1825
        %2797 = vmatpush1.bf16.msra.mxu0 %v1824
        %2798 = vmatprep.subr.bf16.mxu0 %v1831
        %2799 = vmatpush1.bf16.msra.mxu0 %v1830
        %2800 = vmatprep.subr.bf16.mxu0 %v1837
        %2801 = vmatpush1.bf16.msra.mxu0 %v1836
        %2802 = vmatprep.subr.bf16.mxu0 %v1843
        %2803 = vmatpush1.bf16.msra.mxu0 %v1842
        %2804 = vmatprep.subr.bf16.mxu0 %v1849
        %2805 = vmatpush1.bf16.msra.mxu0 %v1848
        %2806 = vmatprep.subr.bf16.mxu0 %v1855
        %2807 = vmatpush1.bf16.msra.mxu0 %v1854
        %2808 = vmatprep.subr.bf16.mxu0 %v1861
        %2809 = vmatpush1.bf16.msra.mxu0 %v1860
        %2810 = vmatprep.subr.bf16.mxu0 %v1867
        %2811 = vmatpush1.bf16.msra.mxu0 %v1866
        %2812 = vmatprep.subr.bf16.mxu0 %v1873
        %2813 = vmatpush1.bf16.msra.mxu0 %v1872
        %2814 = vmatprep.subr.bf16.mxu0 %v1879
        %2815 = vmatpush1.bf16.msra.mxu0 %v1878
        %2816 = vmatprep.mubr.bf16.mxu0 %v2701
        %2817 = vmatmul.mubr.bf16.gmra.mrb[0].mxu0 %v2700
        %v2818 = vpop.f32.mrb[0].mxu0
        %v2819 = vadd.f32 0.0, %v2818
        %v2820 = vpop.f32.mrb[0].mxu0
        %v2821 = vadd.f32 0.0, %v2820
        %v2822 = vpop.f32.mrb[0].mxu0
        %v2823 = vpop.f32.mrb[0].mxu0
        %2824 = vdwg.mxu0
        %v2825 = vadd.f32 %v2694, %v2737
        %v2826 = vadd.f32 %v2695, %v2739
        %v2827 = vadd.f32 %v2696, %v2778
        %v2828 = vadd.f32 %v2697, %v2780
        %v2829 = vxor.u32 %v2825, 2147483648
        %v2830 = vxor.u32 %v2826, 2147483648
        %v2831 = vxor.u32 %v2827, 2147483648
        %v2832 = vxor.u32 %v2828, 2147483648
        %v2833 = vmul.f32 %v2829, 1.442695
        %v2834 = vpow.pop %v2833
        %v2835 = vmul.f32 %v2830, 1.442695
        %v2836 = vpow.pop %v2835
        %v2837 = vmul.f32 %v2831, 1.442695
        %v2838 = vpow.pop %v2837
        %v2839 = vmul.f32 %v2832, 1.442695
        %v2840 = vpow.pop %v2839
        %v2841 = vadd.f32 %v2834, 1.0
        %v2842 = vadd.f32 %v2836, 1.0
        %v2843 = vadd.f32 %v2838, 1.0
        %v2844 = vadd.f32 %v2840, 1.0
        %v2845 = vrcp.pop %v2841
        %v2846 = vmul.f32 1.0, %v2845
        %v2847 = vrcp.pop %v2842
        %v2848 = vmul.f32 1.0, %v2847
        %v2849 = vrcp.pop %v2843
        %v2850 = vmul.f32 1.0, %v2849
        %v2851 = vrcp.pop %v2844
        %v2852 = vmul.f32 1.0, %v2851
        %v2853 = vadd.f32 %v2819, %v2131
        %v2854 = vadd.f32 %v2821, %v2135
        %v2855 = vmul.f32 %v2846, %v2853
        %v2856 = vmul.f32 %v2848, %v2854
        %v2857 = vadd.f32 %v2698, %v2855
        %v2858 = vadd.f32 %v2699, %v2856
        %v2859 = vtanh.pop %v2857
        %v2860 = vtanh.pop %v2858
        %v2861 = vsub.f32 1.0, %v2850
        %v2862 = vsub.f32 1.0, %v2852
        %v2863 = vmul.f32 %v2861, %v2859
        %v2864 = vmul.f32 %v2862, %v2860
        %v2865 = vmul.f32 %v2850, %v2688
        %v2866 = vmul.f32 %v2852, %v2689
        %v2867 = vadd.f32 %v2863, %v2865
        %v2868 = vadd.f32 %v2864, %v2866
        %s2869 = scalar_lea.vmem [#allocation2], 64
        %2870 = vst [vmem:[%s2869] sm:$0xff] %v2867
        %2871 = vst [vmem:[%s2869 + $0x8] sm:$0xff] %v2868
        %s2872 = scalar_lea.vmem [#allocation3], 240
        %v2873 = vld [vmem:[%s2872] sm:$0xff]
        %v2874 = vld [vmem:[%s2872 + $0x8] sm:$0xff]
        %v2875 = vld [vmem:[%s2872 + $0x10] sm:$0xff]
        %v2876 = vld [vmem:[%s2872 + $0x18] sm:$0xff]
        %v2877 = vld [vmem:[%s2872 + $0x20] sm:$0xff]
        %v2878 = vld [vmem:[%s2872 + $0x28] sm:$0xff]
        %v2879 = vpack.c.bf16 %v2867, %v2867
        %v2880 = vpack.c.bf16 %v2868, %v2868
        %2881 = vmatprep.subr.bf16.mxu0 %v1785
        %2882 = vmatpush1.bf16.msra.mxu0 %v1784
        %2883 = vmatprep.subr.bf16.mxu0 %v1791
        %2884 = vmatpush1.bf16.msra.mxu0 %v1790
        %2885 = vmatprep.subr.bf16.mxu0 %v1797
        %2886 = vmatpush1.bf16.msra.mxu0 %v1796
        %2887 = vmatprep.subr.bf16.mxu0 %v1803
        %2888 = vmatpush1.bf16.msra.mxu0 %v1802
        %2889 = vmatprep.subr.bf16.mxu0 %v1809
        %2890 = vmatpush1.bf16.msra.mxu0 %v1808
        %2891 = vmatprep.subr.bf16.mxu0 %v1815
        %2892 = vmatpush1.bf16.msra.mxu0 %v1814
        %2893 = vmatprep.subr.bf16.mxu0 %v1821
        %2894 = vmatpush1.bf16.msra.mxu0 %v1820
        %2895 = vmatprep.subr.bf16.mxu0 %v1827
        %2896 = vmatpush1.bf16.msra.mxu0 %v1826
        %2897 = vmatprep.subr.bf16.mxu0 %v1833
        %2898 = vmatpush1.bf16.msra.mxu0 %v1832
        %2899 = vmatprep.subr.bf16.mxu0 %v1839
        %2900 = vmatpush1.bf16.msra.mxu0 %v1838
        %2901 = vmatprep.subr.bf16.mxu0 %v1845
        %2902 = vmatpush1.bf16.msra.mxu0 %v1844
        %2903 = vmatprep.subr.bf16.mxu0 %v1851
        %2904 = vmatpush1.bf16.msra.mxu0 %v1850
        %2905 = vmatprep.subr.bf16.mxu0 %v1857
        %2906 = vmatpush1.bf16.msra.mxu0 %v1856
        %2907 = vmatprep.subr.bf16.mxu0 %v1863
        %2908 = vmatpush1.bf16.msra.mxu0 %v1862
        %2909 = vmatprep.subr.bf16.mxu0 %v1869
        %2910 = vmatpush1.bf16.msra.mxu0 %v1868
        %2911 = vmatprep.subr.bf16.mxu0 %v1875
        %2912 = vmatpush1.bf16.msra.mxu0 %v1874
        %2913 = vmatprep.mubr.bf16.mxu0 %v2880
        %2914 = vmatmul.mubr.bf16.gmra.mrb[0].mxu0 %v2879
        %v2915 = vpop.f32.mrb[0].mxu0
        %v2916 = vadd.f32 0.0, %v2915
        %v2917 = vpop.f32.mrb[0].mxu0
        %v2918 = vadd.f32 0.0, %v2917
        %v2919 = vpop.f32.mrb[0].mxu0
        %v2920 = vpop.f32.mrb[0].mxu0
        %2921 = vdwg.mxu0
        %2922 = vmatprep.subr.bf16.mxu0 %v1787
        %2923 = vmatpush1.bf16.msra.mxu0 %v1786
        %2924 = vmatprep.subr.bf16.mxu0 %v1793
        %2925 = vmatpush1.bf16.msra.mxu0 %v1792
        %2926 = vmatprep.subr.bf16.mxu0 %v1799
        %2927 = vmatpush1.bf16.msra.mxu0 %v1798
        %2928 = vmatprep.subr.bf16.mxu0 %v1805
        %2929 = vmatpush1.bf16.msra.mxu0 %v1804
        %2930 = vmatprep.subr.bf16.mxu0 %v1811
        %2931 = vmatpush1.bf16.msra.mxu0 %v1810
        %2932 = vmatprep.subr.bf16.mxu0 %v1817
        %2933 = vmatpush1.bf16.msra.mxu0 %v1816
        %2934 = vmatprep.subr.bf16.mxu0 %v1823
        %2935 = vmatpush1.bf16.msra.mxu0 %v1822
        %2936 = vmatprep.subr.bf16.mxu0 %v1829
        %2937 = vmatpush1.bf16.msra.mxu0 %v1828
        %2938 = vmatprep.subr.bf16.mxu0 %v1835
        %2939 = vmatpush1.bf16.msra.mxu0 %v1834
        %2940 = vmatprep.subr.bf16.mxu0 %v1841
        %2941 = vmatpush1.bf16.msra.mxu0 %v1840
        %2942 = vmatprep.subr.bf16.mxu0 %v1847
        %2943 = vmatpush1.bf16.msra.mxu0 %v1846
        %2944 = vmatprep.subr.bf16.mxu0 %v1853
        %2945 = vmatpush1.bf16.msra.mxu0 %v1852
        %2946 = vmatprep.subr.bf16.mxu0 %v1859
        %2947 = vmatpush1.bf16.msra.mxu0 %v1858
        %2948 = vmatprep.subr.bf16.mxu0 %v1865
        %2949 = vmatpush1.bf16.msra.mxu0 %v1864
        %2950 = vmatprep.subr.bf16.mxu0 %v1871
        %2951 = vmatpush1.bf16.msra.mxu0 %v1870
        %2952 = vmatprep.subr.bf16.mxu0 %v1877
        %2953 = vmatpush1.bf16.msra.mxu0 %v1876
        %2954 = vmatprep.mubr.bf16.mxu0 %v2880
        %2955 = vmatmul.mubr.bf16.gmra.mrb[0].mxu0 %v2879
        %v2956 = vpop.f32.mrb[0].mxu0
        %v2957 = vadd.f32 0.0, %v2956
        %v2958 = vpop.f32.mrb[0].mxu0
        %v2959 = vadd.f32 0.0, %v2958
        %v2960 = vpop.f32.mrb[0].mxu0
        %v2961 = vpop.f32.mrb[0].mxu0
        %2962 = vdwg.mxu0
        %2963 = vmatprep.subr.bf16.mxu0 %v1789
        %2964 = vmatpush1.bf16.msra.mxu0 %v1788
        %2965 = vmatprep.subr.bf16.mxu0 %v1795
        %2966 = vmatpush1.bf16.msra.mxu0 %v1794
        %2967 = vmatprep.subr.bf16.mxu0 %v1801
        %2968 = vmatpush1.bf16.msra.mxu0 %v1800
        %2969 = vmatprep.subr.bf16.mxu0 %v1807
        %2970 = vmatpush1.bf16.msra.mxu0 %v1806
        %2971 = vmatprep.subr.bf16.mxu0 %v1813
        %2972 = vmatpush1.bf16.msra.mxu0 %v1812
        %2973 = vmatprep.subr.bf16.mxu0 %v1819
        %2974 = vmatpush1.bf16.msra.mxu0 %v1818
        %2975 = vmatprep.subr.bf16.mxu0 %v1825
        %2976 = vmatpush1.bf16.msra.mxu0 %v1824
        %2977 = vmatprep.subr.bf16.mxu0 %v1831
        %2978 = vmatpush1.bf16.msra.mxu0 %v1830
        %2979 = vmatprep.subr.bf16.mxu0 %v1837
        %2980 = vmatpush1.bf16.msra.mxu0 %v1836
        %2981 = vmatprep.subr.bf16.mxu0 %v1843
        %2982 = vmatpush1.bf16.msra.mxu0 %v1842
        %2983 = vmatprep.subr.bf16.mxu0 %v1849
        %2984 = vmatpush1.bf16.msra.mxu0 %v1848
        %2985 = vmatprep.subr.bf16.mxu0 %v1855
        %2986 = vmatpush1.bf16.msra.mxu0 %v1854
        %2987 = vmatprep.subr.bf16.mxu0 %v1861
        %2988 = vmatpush1.bf16.msra.mxu0 %v1860
        %2989 = vmatprep.subr.bf16.mxu0 %v1867
        %2990 = vmatpush1.bf16.msra.mxu0 %v1866
        %2991 = vmatprep.subr.bf16.mxu0 %v1873
        %2992 = vmatpush1.bf16.msra.mxu0 %v1872
        %2993 = vmatprep.subr.bf16.mxu0 %v1879
        %2994 = vmatpush1.bf16.msra.mxu0 %v1878
        %2995 = vmatprep.mubr.bf16.mxu0 %v2880
        %2996 = vmatmul.mubr.bf16.gmra.mrb[0].mxu0 %v2879
        %v2997 = vpop.f32.mrb[0].mxu0
        %v2998 = vadd.f32 0.0, %v2997
        %v2999 = vpop.f32.mrb[0].mxu0
        %v3000 = vadd.f32 0.0, %v2999
        %v3001 = vpop.f32.mrb[0].mxu0
        %v3002 = vpop.f32.mrb[0].mxu0
        %3003 = vdwg.mxu0
        %v3004 = vadd.f32 %v2873, %v2916
        %v3005 = vadd.f32 %v2874, %v2918
        %v3006 = vadd.f32 %v2875, %v2957
        %v3007 = vadd.f32 %v2876, %v2959
        %v3008 = vxor.u32 %v3004, 2147483648
        %v3009 = vxor.u32 %v3005, 2147483648
        %v3010 = vxor.u32 %v3006, 2147483648
        %v3011 = vxor.u32 %v3007, 2147483648
        %v3012 = vmul.f32 %v3008, 1.442695
        %v3013 = vpow.pop %v3012
        %v3014 = vmul.f32 %v3009, 1.442695
        %v3015 = vpow.pop %v3014
        %v3016 = vmul.f32 %v3010, 1.442695
        %v3017 = vpow.pop %v3016
        %v3018 = vmul.f32 %v3011, 1.442695
        %v3019 = vpow.pop %v3018
        %v3020 = vadd.f32 %v3013, 1.0
        %v3021 = vadd.f32 %v3015, 1.0
        %v3022 = vadd.f32 %v3017, 1.0
        %v3023 = vadd.f32 %v3019, 1.0
        %v3024 = vrcp.pop %v3020
        %v3025 = vmul.f32 1.0, %v3024
        %v3026 = vrcp.pop %v3021
        %v3027 = vmul.f32 1.0, %v3026
        %v3028 = vrcp.pop %v3022
        %v3029 = vmul.f32 1.0, %v3028
        %v3030 = vrcp.pop %v3023
        %v3031 = vmul.f32 1.0, %v3030
        %v3032 = vadd.f32 %v2998, %v2131
        %v3033 = vadd.f32 %v3000, %v2135
        %v3034 = vmul.f32 %v3025, %v3032
        %v3035 = vmul.f32 %v3027, %v3033
        %v3036 = vadd.f32 %v2877, %v3034
        %v3037 = vadd.f32 %v2878, %v3035
        %v3038 = vtanh.pop %v3036
        %v3039 = vtanh.pop %v3037
        %v3040 = vsub.f32 1.0, %v3029
        %v3041 = vsub.f32 1.0, %v3031
        %v3042 = vmul.f32 %v3040, %v3038
        %v3043 = vmul.f32 %v3041, %v3039
        %v3044 = vmul.f32 %v3029, %v2867
        %v3045 = vmul.f32 %v3031, %v2868
        %v3046 = vadd.f32 %v3042, %v3044
        %v3047 = vadd.f32 %v3043, %v3045
        %s3048 = scalar_lea.vmem [#allocation2], 80
        %3049 = vst [vmem:[%s3048] sm:$0xff] %v3046
        %3050 = vst [vmem:[%s3048 + $0x8] sm:$0xff] %v3047
        %v3053 = vcombine.low %v3046, %v3047
        %v3055 = vunpack.c.l.s4 1983009808
        %v3056 = vunpack.c.0.s8 %v3055
        %v3057 = vlaneseq
        %v3058 = vshrl.u32 %v3057, 7
        %v3059 = vsub.s32 %v3056, %v3058
        %v3060 = vrot.slane %v3053, %v3059
        %3062 = vst [vmem:[%s503] sm:$0xf] %v3060
        %p3063 = scmp.eq.s32.totalorder %s34, 3
        // Predicated region
        $region81: #{model_forward.1} parent=51 // pred_check
          %p3064 = pneg %p3063
        $region82: #{model_forward.1} parent=51 // pred_check_branch
          %3066 = sbr.rel (%p3064) target = $region84
        $region83: #{model_forward.1} parent=51 // pred_region
          %v3067 = vld [vmem:[#allocation2] sm:$0xff]
          %v3068 = vld [vmem:[#allocation2 + $0x8] sm:$0xff]
          %v3069 = vld [vmem:[#allocation2 + $0x10] sm:$0xff]
          %v3070 = vld [vmem:[#allocation2 + $0x18] sm:$0xff]
          %v3071 = vld [vmem:[#allocation2 + $0x20] sm:$0xff]
          %v3072 = vld [vmem:[#allocation2 + $0x28] sm:$0xff]
          %v3073 = vld [vmem:[#allocation2 + $0x30] sm:$0xff]
          %v3074 = vld [vmem:[#allocation2 + $0x38] sm:$0xff]
          %v3075 = vld [vmem:[#allocation2 + $0x40] sm:$0xff]
          %v3076 = vld [vmem:[#allocation2 + $0x48] sm:$0xff]
          %v3077 = vld [vmem:[#allocation2 + $0x50] sm:$0xff]
          %v3078 = vld [vmem:[#allocation2 + $0x58] sm:$0xff]
          %v3079 = vpack.c.bf16 %v3069, %v3067
          %v3080 = vpack.c.bf16 %v3070, %v3068
          %v3081 = vpack.c.bf16 %v3073, %v3071
          %v3082 = vpack.c.bf16 %v3074, %v3072
          %v3083 = vpack.c.bf16 %v3077, %v3075
          %v3084 = vpack.c.bf16 %v3078, %v3076
          %v3085 = vld [vmem:[#allocation12] sm:$0xf]
          %v3086 = vld [vmem:[#allocation12 + $0x4] sm:$0xf]
          %v3087 = vld [vmem:[#allocation12 + $0x8] sm:$0xf]
          %v3088 = vld [vmem:[#allocation12 + $0xc] sm:$0xf]
          %v3089 = vld [vmem:[#allocation12 + $0x10] sm:$0xf]
          %v3090 = vld [vmem:[#allocation12 + $0x14] sm:$0xf]
          %v3091 = vld [vmem:[#allocation12 + $0x18] sm:$0xf]
          %v3092 = vld [vmem:[#allocation12 + $0x1c] sm:$0xf]
          %v3093 = vld [vmem:[#allocation12 + $0x20] sm:$0xf]
          %v3094 = vld [vmem:[#allocation12 + $0x24] sm:$0xf]
          %v3095 = vld [vmem:[#allocation12 + $0x28] sm:$0xf]
          %v3096 = vld [vmem:[#allocation12 + $0x2c] sm:$0xf]
          %v3097 = vld [vmem:[#allocation12 + $0x30] sm:$0xf]
          %v3098 = vld [vmem:[#allocation12 + $0x34] sm:$0xf]
          %v3099 = vld [vmem:[#allocation12 + $0x38] sm:$0xf]
          %v3100 = vld [vmem:[#allocation12 + $0x3c] sm:$0xf]
          %v3101 = vld [vmem:[#allocation12 + $0x40] sm:$0xf]
          %v3102 = vld [vmem:[#allocation12 + $0x44] sm:$0xf]
          %v3103 = vld [vmem:[#allocation12 + $0x48] sm:$0xf]
          %v3104 = vld [vmem:[#allocation12 + $0x4c] sm:$0xf]
          %v3105 = vld [vmem:[#allocation12 + $0x50] sm:$0xf]
          %v3106 = vld [vmem:[#allocation12 + $0x54] sm:$0xf]
          %v3107 = vld [vmem:[#allocation12 + $0x58] sm:$0xf]
          %v3108 = vld [vmem:[#allocation12 + $0x5c] sm:$0xf]
          %v3109 = vld [vmem:[#allocation12 + $0x60] sm:$0xf]
          %v3110 = vld [vmem:[#allocation12 + $0x64] sm:$0xf]
          %v3111 = vld [vmem:[#allocation12 + $0x68] sm:$0xf]
          %v3112 = vld [vmem:[#allocation12 + $0x6c] sm:$0xf]
          %v3113 = vld [vmem:[#allocation12 + $0x70] sm:$0xf]
          %v3114 = vld [vmem:[#allocation12 + $0x74] sm:$0xf]
          %v3115 = vld [vmem:[#allocation12 + $0x78] sm:$0xf]
          %v3116 = vld [vmem:[#allocation12 + $0x7c] sm:$0xf]
          %v3117 = vld [vmem:[#allocation13] sm:$0x1]
          %v3119 = vlaneseq
          %v3120 = vshrl.u32 %v3119, 7
          %v3121 = vsub.s32 0, %v3120
          %v3122 = vrot.slane %v3117, %v3121
          %v3156 = vunpack.c.l.b16 %v3085
          %v3157 = vunpack.c.l.b16 %v3086
          %v3158 = vunpack.c.l.b16 %v3087
          %v3159 = vunpack.c.l.b16 %v3088
          %v3160 = vunpack.c.l.b16 %v3089
          %v3161 = vunpack.c.l.b16 %v3090
          %v3162 = vunpack.c.l.b16 %v3091
          %v3163 = vunpack.c.l.b16 %v3092
          %v3164 = vunpack.c.l.b16 %v3093
          %v3165 = vunpack.c.l.b16 %v3094
          %v3166 = vunpack.c.l.b16 %v3095
          %v3167 = vunpack.c.l.b16 %v3096
          %v3168 = vunpack.c.l.b16 %v3097
          %v3169 = vunpack.c.l.b16 %v3098
          %v3170 = vunpack.c.l.b16 %v3099
          %v3171 = vunpack.c.l.b16 %v3100
          %v3172 = vunpack.c.l.b16 %v3101
          %v3173 = vunpack.c.l.b16 %v3102
          %v3174 = vunpack.c.l.b16 %v3103
          %v3175 = vunpack.c.l.b16 %v3104
          %v3176 = vunpack.c.l.b16 %v3105
          %v3177 = vunpack.c.l.b16 %v3106
          %v3178 = vunpack.c.l.b16 %v3107
          %v3179 = vunpack.c.l.b16 %v3108
          %v3180 = vunpack.c.l.b16 %v3109
          %v3181 = vunpack.c.l.b16 %v3110
          %v3182 = vunpack.c.l.b16 %v3111
          %v3183 = vunpack.c.l.b16 %v3112
          %v3184 = vunpack.c.l.b16 %v3113
          %v3185 = vunpack.c.l.b16 %v3114
          %v3186 = vunpack.c.l.b16 %v3115
          %v3187 = vunpack.c.l.b16 %v3116
          %v3188 = vpack.c.b16 %v3157, %v3156
          %v3189 = vpack.c.b16 %v3159, %v3158
          %v3190 = vpack.c.b16 %v3161, %v3160
          %v3191 = vpack.c.b16 %v3163, %v3162
          %v3192 = vpack.c.b16 %v3165, %v3164
          %v3193 = vpack.c.b16 %v3167, %v3166
          %v3194 = vpack.c.b16 %v3169, %v3168
          %v3195 = vpack.c.b16 %v3171, %v3170
          %v3196 = vpack.c.b16 %v3173, %v3172
          %v3197 = vpack.c.b16 %v3175, %v3174
          %v3198 = vpack.c.b16 %v3177, %v3176
          %v3199 = vpack.c.b16 %v3179, %v3178
          %v3200 = vpack.c.b16 %v3181, %v3180
          %v3201 = vpack.c.b16 %v3183, %v3182
          %v3202 = vpack.c.b16 %v3185, %v3184
          %v3203 = vpack.c.b16 %v3187, %v3186
          %3220 = vmatprep.subr.bf16.mxu0 0
          %3221 = vmatpush1.bf16.msra.mxu0 %v3188
          %3222 = vmatprep.subr.bf16.mxu0 0
          %3223 = vmatpush1.bf16.msra.mxu0 %v3189
          %3224 = vmatprep.subr.bf16.mxu0 0
          %3225 = vmatpush1.bf16.msra.mxu0 %v3190
          %3226 = vmatprep.subr.bf16.mxu0 0
          %3227 = vmatpush1.bf16.msra.mxu0 %v3191
          %3228 = vmatprep.subr.bf16.mxu0 0
          %3229 = vmatpush1.bf16.msra.mxu0 %v3192
          %3230 = vmatprep.subr.bf16.mxu0 0
          %3231 = vmatpush1.bf16.msra.mxu0 %v3193
          %3232 = vmatprep.subr.bf16.mxu0 0
          %3233 = vmatpush1.bf16.msra.mxu0 %v3194
          %3234 = vmatprep.subr.bf16.mxu0 0
          %3235 = vmatpush1.bf16.msra.mxu0 %v3195
          %3236 = vmatprep.subr.bf16.mxu0 0
          %3237 = vmatpush1.bf16.msra.mxu0 %v3196
          %3238 = vmatprep.subr.bf16.mxu0 0
          %3239 = vmatpush1.bf16.msra.mxu0 %v3197
          %3240 = vmatprep.subr.bf16.mxu0 0
          %3241 = vmatpush1.bf16.msra.mxu0 %v3198
          %3242 = vmatprep.subr.bf16.mxu0 0
          %3243 = vmatpush1.bf16.msra.mxu0 %v3199
          %3244 = vmatprep.subr.bf16.mxu0 0
          %3245 = vmatpush1.bf16.msra.mxu0 %v3200
          %3246 = vmatprep.subr.bf16.mxu0 0
          %3247 = vmatpush1.bf16.msra.mxu0 %v3201
          %3248 = vmatprep.subr.bf16.mxu0 0
          %3249 = vmatpush1.bf16.msra.mxu0 %v3202
          %3250 = vmatprep.subr.bf16.mxu0 0
          %3251 = vmatpush1.bf16.msra.mxu0 %v3203
          %3252 = vmatprep.mubr.bf16.mxu0 %v3080
          %3253 = vmatmul.mubr.bf16.gmra.mrb[0].mxu0 %v3079
          %v3254 = vpop.f32.mrb[0].mxu0
          %v3255 = vadd.f32 %v3122, %v3254
          %v3256 = vpop.f32.mrb[0].mxu0
          %v3257 = vpop.f32.mrb[0].mxu0
          %v3258 = vadd.f32 %v3122, %v3257
          %v3259 = vpop.f32.mrb[0].mxu0
          %3260 = vmatprep.mubr.bf16.mxu0 %v3082
          %3261 = vmatmul.mubr.bf16.gmra.mrb[0].mxu0 %v3081
          %v3262 = vpop.f32.mrb[0].mxu0
          %v3263 = vadd.f32 %v3122, %v3262
          %v3264 = vpop.f32.mrb[0].mxu0
          %v3265 = vpop.f32.mrb[0].mxu0
          %v3266 = vadd.f32 %v3122, %v3265
          %v3267 = vpop.f32.mrb[0].mxu0
          %3268 = vmatprep.mubr.bf16.mxu0 %v3084
          %3269 = vmatmul.mubr.bf16.gmra.mrb[0].mxu0 %v3083
          %v3270 = vpop.f32.mrb[0].mxu0
          %v3271 = vadd.f32 %v3122, %v3270
          %v3272 = vpop.f32.mrb[0].mxu0
          %v3273 = vpop.f32.mrb[0].mxu0
          %v3274 = vadd.f32 %v3122, %v3273
          %v3275 = vpop.f32.mrb[0].mxu0
          %3276 = vdwg.mxu0
          %3277 = vst [vmem:[%s8] sm:$0xff] %v3255
          %3278 = vst [vmem:[%s8 + $0x8] sm:$0xff] %v3258
          %3279 = vst [vmem:[%s8 + $0x10] sm:$0xff] %v3263
          %3280 = vst [vmem:[%s8 + $0x18] sm:$0xff] %v3266
          %3281 = vst [vmem:[%s8 + $0x20] sm:$0xff] %v3271
          %3282 = vst [vmem:[%s8 + $0x28] sm:$0xff] %v3274
        $region84: #{model_forward.1} parent=51 // pred_fallthru
          _
        %s3283 = sand.u32 %s256, 1
        %s3284 = scalar_lea.sflag [#allocation6], %s3283
        %s3285 = sand.u32 %s256, 1
        %s3286 = smul.addr %s3285, 4
        %s3287 = scalar_lea.vmem [#allocation15], %s3286
        // Predicated region
        $region85: #{model_forward.1} parent=51 // pred_check
          %p3288 = pneg %p240
        $region86: #{model_forward.1} parent=51 // pred_check_branch
          %3290 = sbr.rel (%p3288) target = $region88
        $region87: #{model_forward.1} parent=51 // pred_region
          _
        $region88: #{model_forward.1} parent=51 // pred_fallthru
          _
        // Predicated region
        $region89: #{model_forward.1} parent=51 // pred_check
          %p3291 = pneg %p266
        $region90: #{model_forward.1} parent=51 // pred_check_branch
          %3293 = sbr.rel (%p3291) target = $region92
        $region91: #{model_forward.1} parent=51 // pred_region
          %s3295 = ssub.s32 64, 64
          %3296 = vsyncadd %s3284, %s3295
          %s3297 = smul.addr %s34, 2
          %s3298 = smul.addr %s3297, 32
          %s3299 = scalar_lea.hbm %s9, %s3298
          %s3301 = sshll.u32 %s3287, 4
          %s3302 = int_to_ptr.vmem [resolvable:$true] %s3301
          %3304 = dma.vmem_to_hbm [thread:$0]  %s3302, 64, %s3299, %s3284
        $region92: #{model_forward.1} parent=51 // pred_fallthru
          _
        // Predicated region
        $region93: #{model_forward.1} parent=51 // pred_check
          %p3305 = pneg %p240
        $region94: #{model_forward.1} parent=51 // pred_check_branch
          %3307 = sbr.rel (%p3305) target = $region96
        $region95: #{model_forward.1} parent=51 // pred_region
          _
        $region96: #{model_forward.1} parent=51 // pred_fallthru
          _
      $region52: #{model_forward.1} parent=5 // pred_fallthru
        _
      %p3308 = scmp.le.s32.totalorder 2, %s29
      // Predicated region
      $region97: #{model_forward.1} parent=5 // pred_check
        %p3309 = pneg %p3308
      $region98: #{model_forward.1} parent=5 // pred_check_branch
        %3311 = sbr.rel (%p3309) target = $region100
      $region99: #{model_forward.1} parent=5 // pred_region
        %s3312 = ssub.s32 %s29, 2
        // Predicated region
        $region101: #{model_forward.1} parent=99 // pred_check
          %p3313 = pneg %p272
        $region102: #{model_forward.1} parent=99 // pred_check_branch
          %3315 = sbr.rel (%p3313) target = $region104
        $region103: #{model_forward.1} parent=99 // pred_region
          %s3316 = sand.u32 %s257, 1
          %s3317 = scalar_lea.sflag [#allocation6], %s3316
          %s3318 = sand.u32 %s257, 1
          %s3319 = smul.addr %s3318, 4
          %s3320 = scalar_lea.vmem [#allocation15], %s3319
          %3321 = dma.done %s3317, 64
        $region104: #{model_forward.1} parent=99 // pred_fallthru
          _
      $region100: #{model_forward.1} parent=5 // pred_fallthru
        _
    $region6: #{model_forward.1} parent=1 // loop_footer
      %s33 = sadd.s32 1, %s29
    $region7: #{model_forward.1} parent=1 // loop_footer_branch
      %28 = sbr.rel target = $region3
    $region8: #{model_forward.1} parent=1 // loop_exit
      _
    %3322 = vsyncpa [#allocation5], 1
    %s3323 = scalar_lea.sflag [#allocation5], 1
    %3324 = vsyncpa %s3323, 1
    %3325 = vsyncpa [#allocation8], 1
    %s3326 = scalar_lea.sflag [#allocation8], 1
    %3327 = vsyncpa %s3326, 1
    %3328 = vsyncpa [#allocation11], 1
    %s3329 = scalar_lea.sflag [#allocation11], 1
    %3330 = vsyncpa %s3329, 1
    %3331 = vsyncpa [#allocation14], 1
    %3332 = vsyncpa [#allocation6], 1
    %s3333 = scalar_lea.sflag [#allocation6], 1
    %3334 = vsyncpa %s3333, 1

</llo_original>
